<compile_context>
chip_gen: v6e
topology: v6e:2x2x1
jax: 0.10.0
libtpu: 0.0.40
codegen_flags: <defaults>
</compile_context>

<pallas_src>
import functools
import numpy as np
import jax
import jax.numpy as jnp
from jax.experimental import pallas as pl
from jax.experimental.pallas import tpu as pltpu


# ----------------------------------------------------------------------------
# Fused kernel: conv1(1x1)+BN+ReLU -> conv2(3x3x3)+BN+ReLU -> conv3(1x1)+BN
#               -> +residual -> ReLU, all in (channels, voxels) layout with the
#               whole batch folded onto the lane axis.
# ----------------------------------------------------------------------------
def _fused_block_kernel(x_ref, w1_ref, b1_ref, w2_ref, b2_ref, w3_ref, b3_ref,
                        mask_ref, o_ref, h1p_ref, col_ref, acc_ref,
                        *, W, HW, PAD):
    BG, C, N = x_ref.shape                 # batch-per-step, channels, voxels/batch
    M = w1_ref.shape[0]                    # mid channels

    w1 = w1_ref[...]                       # (M, C)  bf16 (BN-folded)
    b1 = b1_ref[...]                       # (M, 1)  f32
    b2 = b2_ref[...]                       # (M, 1)  f32
    w3 = w3_ref[...]                       # (C, M)  bf16 (BN-folded)
    b3 = b3_ref[...]                       # (C, 1)  f32

    # Zero the padded h1 staging buffer once: the PAD gaps between (and around) the
    # per-batch segments are the D-boundary halos AND the batch isolation barriers.
    h1p_ref[...] = jnp.zeros_like(h1p_ref)

    # ---- conv1 (1x1x1) + folded BN + ReLU, per batch segment -----------------
    for b in range(BG):
        xb = x_ref[b].astype(jnp.bfloat16)                       # (C, N)
        h1b = jnp.maximum(
            jnp.dot(w1, xb, preferred_element_type=jnp.float32) + b1, 0.0)
        off = PAD + b * (N + PAD)
        h1p_ref[:, off:off + N] = h1b.astype(jnp.bfloat16)

    # ---- 3x3x3 conv = 3 accumulating dz-partial K=9*M matmuls ----------------
    # Slab row block j (= 3*dy+dx) of the dz-partial holds the (dz,dy,dx) tap: a
    # flat lane shift of h1 (zero halos handle D), masked in f32 for H/W wraps
    # (masks are pre-broadcast to (M, N) on the host -> no in-kernel broadcasts).
    for dz in range(3):
        for j in range(9):
            dy, dx = j // 3, j % 3
            s = (dz - 1) * HW + (dy - 1) * W + (dx - 1)          # flat voxel shift
            m = None if j == 4 else mask_ref[j]                  # (M, N) f32
            for b in range(BG):
                off = PAD + b * (N + PAD) + s
                tap = h1p_ref[:, off:off + N]                    # (M, N) bf16
                if j == 4:
                    # interior tap in H/W: no mask multiply needed
                    col_ref[j * M:(j + 1) * M, b * N:(b + 1) * N] = tap
                else:
                    col_ref[j * M:(j + 1) * M, b * N:(b + 1) * N] = (
                        tap.astype(jnp.float32) * m).astype(jnp.bfloat16)
        part = jnp.dot(w2_ref[dz], col_ref[...],
                       preferred_element_type=jnp.float32)       # (M, BG*N)
        if dz == 0:
            acc_ref[...] = part
        else:
            acc_ref[...] += part

    # ---- BN2 bias + ReLU; conv3 (1x1x1) + folded BN + residual + ReLU --------
    h2 = jnp.maximum(acc_ref[...] + b2, 0.0).astype(jnp.bfloat16)  # (M, BG*N)
    for b in range(BG):
        yb = (jnp.dot(w3, h2[:, b * N:(b + 1) * N],
                      preferred_element_type=jnp.float32)
              + b3 + x_ref[b])
        o_ref[b] = jnp.maximum(yb, 0.0).astype(o_ref.dtype)


def _hw_boundary_masks(D, H, W):
    """(9, D*H*W) 0/1 masks, row (dy+1)*3+(dx+1): neighbour (h+dy, w+dx) in range."""
    n = np.arange(D * H * W)
    h = (n // W) % H
    w = n % W
    rows = []
    for dy in (-1, 0, 1):
        for dx in (-1, 0, 1):
            valid = (h + dy >= 0) & (h + dy < H) & (w + dx >= 0) & (w + dx < W)
            rows.append(valid.astype(np.float32))
    return jnp.asarray(np.stack(rows))


@jax.jit
def resnet_block_forward(x, fp):
    """x: (B, C, D, H, W) float32; fp: BN-folded, transposed (bf16 weight) params."""
    B, C, D, H, W = x.shape
    M = fp["w1"].shape[0]
    N = D * H * W
    HW = H * W
    PAD = ((HW + W + 1 + 127) // 128) * 128   # lane-aligned halo/gap, >= max |shift|

    BG = B                                    # fold the whole batch into one grid step
    NL = BG * N                               # voxel lanes per grid step

    # Pre-broadcast the H/W boundary masks to (9, M, N) on the host (compile-time
    # constants) so the kernel does no broadcast work at all.
    masks9 = _hw_boundary_masks(D, H, W)                      # (9, N)
    masks = jnp.broadcast_to(masks9[:, None, :], (9, M, N))   # (9, M, N) f32

    x_flat = x.reshape(B, C, N)               # contiguous collapse, free

    kernel = functools.partial(_fused_block_kernel, W=W, HW=HW, PAD=PAD)

    out = pl.pallas_call(
        kernel,
        out_shape=jax.ShapeDtypeStruct((B, C, N), x.dtype),
        grid=(B // BG,),
        in_specs=[
            pl.BlockSpec((BG, C, N),     lambda g: (g, 0, 0)),   # x (lane-dense)
            pl.BlockSpec((M, C),         lambda g: (0, 0)),      # w1 (folded, bf16)
            pl.BlockSpec((M, 1),         lambda g: (0, 0)),      # b1
            pl.BlockSpec((3, M, 9 * M),  lambda g: (0, 0, 0)),   # w2 dz-partials (bf16)
            pl.BlockSpec((M, 1),         lambda g: (0, 0)),      # b2
            pl.BlockSpec((C, M),         lambda g: (0, 0)),      # w3 (folded, bf16)
            pl.BlockSpec((C, 1),         lambda g: (0, 0)),      # b3
            pl.BlockSpec((9, M, N),      lambda g: (0, 0, 0)),   # pre-broadcast masks
        ],
        out_specs=pl.BlockSpec((BG, C, N), lambda g: (g, 0, 0)),
        scratch_shapes=[
            pltpu.VMEM((M, PAD + BG * (N + PAD)), jnp.bfloat16),  # gapped/padded h1
            pltpu.VMEM((9 * M, NL), jnp.bfloat16),                # dz-partial im2col slab
            pltpu.VMEM((M, NL), jnp.float32),                     # conv2 accumulator
        ],
        compiler_params=pltpu.CompilerParams(
            dimension_semantics=("parallel",)),
    )(x_flat, fp["w1"], fp["b1"], fp["w2"], fp["b2"], fp["w3"], fp["b3"], masks)

    return out.reshape(B, C, D, H, W)


# ----------------------------------------------------------------------------
# Parameters: raw (math-orientation) params + eval-mode BN, then fold for kernel
# ----------------------------------------------------------------------------
def make_params(key, inc, outc):
    midc = inc // 4
    eps = 1e-5
    ks = jax.random.split(key, 12)

    def bn_fold(kg, kb, km, kv, c):
        gamma = 1.0 + 0.1 * jax.random.normal(kg, (c,), jnp.float32)
        beta = 0.05 * jax.random.normal(kb, (c,), jnp.float32)
        mean = 0.02 * jax.random.normal(km, (c,), jnp.float32)
        var = 1.0 + 0.1 * jnp.abs(jax.random.normal(kv, (c,), jnp.float32))
        scale = gamma / jnp.sqrt(var + eps)
        bias = beta - mean * scale
        return scale, bias

    w1 = 0.2 * jax.random.normal(ks[0], (inc, midc), jnp.float32)        # (C, M)
    w2 = 0.1 * jax.random.normal(ks[1], (27, midc, midc), jnp.float32)   # (tap, Cin, Cout)
    w3 = 0.2 * jax.random.normal(ks[2], (midc, outc), jnp.float32)       # (M, C)
    s1, b1 = bn_fold(ks[3], ks[4], ks[5], ks[6], midc)
    s2, b2 = bn_fold(ks[7], ks[8], ks[9], ks[10], midc)
    s3, b3 = bn_fold(ks[11], ks[3], ks[7], ks[0], outc)
    return dict(w1=w1, s1=s1, b1=b1, w2=w2, s2=s2, b2=b2, w3=w3, s3=s3, b3=b3)


def fold_params(p):
    """Fold BN scales into conv weights, transpose to (Cout, K), cast weights to bf16.

    w2 is laid out as (3, Mout, 9*Min): one K=9*M block per dz plane, column order
    j = 3*dy + dx (matching the kernel's dz-partial slab row order)."""
    C, M = p["w1"].shape
    w1k = (p["w1"] * p["s1"][None, :]).T                                   # (M, C)
    w2s = p["w2"] * p["s2"][None, None, :]                                 # (27, M, M)
    w2k = jnp.transpose(w2s, (2, 0, 1)).reshape(M, 27 * M)                 # (Mout, 27*Min)
    w2k = jnp.transpose(w2k.reshape(M, 3, 9 * M), (1, 0, 2))               # (3, Mout, 9*Min)
    w3k = (p["w3"] * p["s3"][None, :]).T                                   # (C, M)
    return dict(
        w1=w1k.astype(jnp.bfloat16), b1=p["b1"].reshape(M, 1),
        w2=w2k.astype(jnp.bfloat16), b2=p["b2"].reshape(M, 1),
        w3=w3k.astype(jnp.bfloat16), b3=p["b3"].reshape(C, 1))


# ----------------------------------------------------------------------------
# Pure-JAX reference (channels-first dense grid, f32 HIGHEST precision)
# ----------------------------------------------------------------------------
def reference(x, p):
    B, C, D, H, W = x.shape
    hp_prec = jax.lax.Precision.HIGHEST
    h = jnp.einsum("bcdhw,cm->bmdhw", x, p["w1"], precision=hp_prec)
    h = jnp.maximum(h * p["s1"].reshape(1, -1, 1, 1, 1)
                    + p["b1"].reshape(1, -1, 1, 1, 1), 0.0)
    hp = jnp.pad(h, ((0, 0), (0, 0), (1, 1), (1, 1), (1, 1)))
    acc = jnp.zeros_like(h)
    for k in range(27):
        dz, dy, dx = k // 9, (k // 3) % 3, k % 3
        acc = acc + jnp.einsum("bmdhw,mn->bndhw",
                               hp[:, :, dz:dz + D, dy:dy + H, dx:dx + W],
                               p["w2"][k], precision=hp_prec)
    h2 = jnp.maximum(acc * p["s2"].reshape(1, -1, 1, 1, 1)
                     + p["b2"].reshape(1, -1, 1, 1, 1), 0.0)
    out = (jnp.einsum("bmdhw,mc->bcdhw", h2, p["w3"], precision=hp_prec)
           * p["s3"].reshape(1, -1, 1, 1, 1)
           + p["b3"].reshape(1, -1, 1, 1, 1) + x)
    return jnp.maximum(out, 0.0)


if __name__ == "__main__":
    key = jax.random.PRNGKey(0)
    kx, kp = jax.random.split(key)

    B, D, H, W = 2, 8, 8, 8
    inc = outc = 32           # residual add requires inc == outc; midc = inc // 4 = 8
    assert inc == outc, "ResNetBlock residual requires inc == outc"

    x = jax.random.normal(kx, (B, inc, D, H, W), jnp.float32)
    params = make_params(kp, inc, outc)
    folded = fold_params(params)

    out = jax.block_until_ready(resnet_block_forward(x, folded))

    ref = reference(x, params)
    # bf16 MXU operands (f32 accumulation) vs an f32 HIGHEST-precision reference:
    # tolerance loosened accordingly (structural bugs would be O(1) errors).
    np.testing.assert_allclose(np.asarray(out), np.asarray(ref), rtol=5e-2, atol=5e-2)

    print("KERNEL_OK")
</pallas_src>

<mosaic_0001>
module attributes {stable_mosaic.version = 11 : i64} {
  func.func @_fused_block_kernel(%arg0: i32, %arg1: memref<2x32x512xf32, #tpu.memory_space<vmem>>, %arg2: memref<8x32xbf16, #tpu.memory_space<vmem>>, %arg3: memref<8x1xf32, #tpu.memory_space<vmem>>, %arg4: memref<3x8x72xbf16, #tpu.memory_space<vmem>>, %arg5: memref<8x1xf32, #tpu.memory_space<vmem>>, %arg6: memref<32x8xbf16, #tpu.memory_space<vmem>>, %arg7: memref<32x1xf32, #tpu.memory_space<vmem>>, %arg8: memref<9x8x512xf32, #tpu.memory_space<vmem>>, %arg9: memref<2x32x512xf32, #tpu.memory_space<vmem>>, %arg10: memref<8x1408xbf16, #tpu.memory_space<vmem>>, %arg11: memref<72x1024xbf16, #tpu.memory_space<vmem>>, %arg12: memref<8x1024xf32, #tpu.memory_space<vmem>>) attributes {dimension_semantics = [#tpu.dimension_semantics<parallel>], iteration_bounds = array<i64: 1>, scalar_prefetch = 0 : i64, scratch_operands = 3 : i64, tpu.core_type = #tpu.core_type<tc>, window_params = [{transform_indices = @transform_0, window_bounds = array<i64: 2, 32, 512>}, {pipeline_mode = #tpu.pipeline_mode<synchronous>, transform_indices = @transform_1, window_bounds = array<i64: 8, 32>}, {pipeline_mode = #tpu.pipeline_mode<synchronous>, transform_indices = @transform_2, window_bounds = array<i64: 8, 1>}, {pipeline_mode = #tpu.pipeline_mode<synchronous>, transform_indices = @transform_3, window_bounds = array<i64: 3, 8, 72>}, {pipeline_mode = #tpu.pipeline_mode<synchronous>, transform_indices = @transform_4, window_bounds = array<i64: 8, 1>}, {pipeline_mode = #tpu.pipeline_mode<synchronous>, transform_indices = @transform_5, window_bounds = array<i64: 32, 8>}, {pipeline_mode = #tpu.pipeline_mode<synchronous>, transform_indices = @transform_6, window_bounds = array<i64: 32, 1>}, {pipeline_mode = #tpu.pipeline_mode<synchronous>, transform_indices = @transform_7, window_bounds = array<i64: 9, 8, 512>}, {transform_indices = @transform_8, window_bounds = array<i64: 2, 32, 512>}]} {
    %c0 = arith.constant 0 : index
    %c0_0 = arith.constant 0 : index
    %0 = vector.load %arg2[%c0, %c0_0] : memref<8x32xbf16, #tpu.memory_space<vmem>>, vector<8x32xbf16>
    %c0_1 = arith.constant 0 : index
    %c0_2 = arith.constant 0 : index
    %1 = vector.load %arg3[%c0_1, %c0_2] : memref<8x1xf32, #tpu.memory_space<vmem>>, vector<8x1xf32>
    %c0_3 = arith.constant 0 : index
    %c0_4 = arith.constant 0 : index
    %2 = vector.load %arg5[%c0_3, %c0_4] : memref<8x1xf32, #tpu.memory_space<vmem>>, vector<8x1xf32>
    %c0_5 = arith.constant 0 : index
    %c0_6 = arith.constant 0 : index
    %3 = vector.load %arg6[%c0_5, %c0_6] : memref<32x8xbf16, #tpu.memory_space<vmem>>, vector<32x8xbf16>
    %c0_7 = arith.constant 0 : index
    %c0_8 = arith.constant 0 : index
    %4 = vector.load %arg7[%c0_7, %c0_8] : memref<32x1xf32, #tpu.memory_space<vmem>>, vector<32x1xf32>
    %cst = arith.constant 0.000000e+00 : bf16
    %5 = vector.broadcast %cst : bf16 to vector<8x1408xbf16>
    %c0_9 = arith.constant 0 : index
    %c0_10 = arith.constant 0 : index
    %6 = vector.load %arg10[%c0_9, %c0_10] : memref<8x1408xbf16, #tpu.memory_space<vmem>>, vector<8x1408xbf16>
    tpu.vector_store %arg10[%c0_9, %c0_10], %5 {strides = array<i32>} : memref<8x1408xbf16, #tpu.memory_space<vmem>>, vector<8x1408xbf16>,
    %c0_11 = arith.constant 0 : index
    %c0_12 = arith.constant 0 : index
    %c0_13 = arith.constant 0 : index
    %7 = vector.load %arg1[%c0_11, %c0_12, %c0_13] : memref<2x32x512xf32, #tpu.memory_space<vmem>>, vector<1x32x512xf32>
    %8 = vector.shape_cast %7 : vector<1x32x512xf32> to vector<32x512xf32>
    %9 = arith.truncf %8 : vector<32x512xf32> to vector<32x512xbf16>
    %cst_14 = arith.constant dense<0.000000e+00> : vector<8x512xf32>
    %10 = tpu.matmul %0, %9, %cst_14 {dimension_numbers = #tpu.dot_dimension_numbers<[1], [0], [0], [1], [0, 0, 1, 1], [], []>} : vector<8x32xbf16>, vector<32x512xbf16>, vector<8x512xf32> -> vector<8x512xf32>
    %11 = vector.broadcast %1 : vector<8x1xf32> to vector<8x512xf32>
    %12 = arith.addf %10, %11 : vector<8x512xf32>
    %cst_15 = arith.constant 0.000000e+00 : f32
    %13 = vector.broadcast %cst_15 : f32 to vector<8x512xf32>
    %14 = arith.maximumf %12, %13 : vector<8x512xf32>
    %15 = arith.truncf %14 : vector<8x512xf32> to vector<8x512xbf16>
    %c0_16 = arith.constant 0 : index
    %c128 = arith.constant 128 : index
    %16 = vector.load %arg10[%c0_16, %c128] : memref<8x1408xbf16, #tpu.memory_space<vmem>>, vector<8x512xbf16>
    tpu.vector_store %arg10[%c0_16, %c128], %15 {strides = array<i32>} : memref<8x1408xbf16, #tpu.memory_space<vmem>>, vector<8x512xbf16>,
    %c1 = arith.constant 1 : index
    %c0_17 = arith.constant 0 : index
    %c0_18 = arith.constant 0 : index
    %17 = vector.load %arg1[%c1, %c0_17, %c0_18] : memref<2x32x512xf32, #tpu.memory_space<vmem>>, vector<1x32x512xf32>
    %18 = vector.shape_cast %17 : vector<1x32x512xf32> to vector<32x512xf32>
    %19 = arith.truncf %18 : vector<32x512xf32> to vector<32x512xbf16>
    %cst_19 = arith.constant dense<0.000000e+00> : vector<8x512xf32>
    %20 = tpu.matmul %0, %19, %cst_19 {dimension_numbers = #tpu.dot_dimension_numbers<[1], [0], [0], [1], [0, 0, 1, 1], [], []>} : vector<8x32xbf16>, vector<32x512xbf16>, vector<8x512xf32> -> vector<8x512xf32>
    %21 = vector.broadcast %1 : vector<8x1xf32> to vector<8x512xf32>
    %22 = arith.addf %20, %21 : vector<8x512xf32>
    %cst_20 = arith.constant 0.000000e+00 : f32
    %23 = vector.broadcast %cst_20 : f32 to vector<8x512xf32>
    %24 = arith.maximumf %22, %23 : vector<8x512xf32>
    %25 = arith.truncf %24 : vector<8x512xf32> to vector<8x512xbf16>
    %c0_21 = arith.constant 0 : index
    %c768 = arith.constant 768 : index
    %26 = vector.load %arg10[%c0_21, %c768] : memref<8x1408xbf16, #tpu.memory_space<vmem>>, vector<8x512xbf16>
    tpu.vector_store %arg10[%c0_21, %c768], %25 {strides = array<i32>} : memref<8x1408xbf16, #tpu.memory_space<vmem>>, vector<8x512xbf16>,
    %c0_22 = arith.constant 0 : index
    %c0_23 = arith.constant 0 : index
    %c0_24 = arith.constant 0 : index
    %27 = vector.load %arg8[%c0_22, %c0_23, %c0_24] : memref<9x8x512xf32, #tpu.memory_space<vmem>>, vector<1x8x512xf32>
    %28 = vector.shape_cast %27 : vector<1x8x512xf32> to vector<8x512xf32>
    %c0_25 = arith.constant 0 : index
    %c55 = arith.constant 55 : index
    %29 = vector.load %arg10[%c0_25, %c55] : memref<8x1408xbf16, #tpu.memory_space<vmem>>, vector<8x512xbf16>
    %30 = arith.extf %29 : vector<8x512xbf16> to vector<8x512xf32>
    %31 = arith.mulf %30, %28 : vector<8x512xf32>
    %32 = arith.truncf %31 : vector<8x512xf32> to vector<8x512xbf16>
    %c0_26 = arith.constant 0 : index
    %c0_27 = arith.constant 0 : index
    %33 = vector.load %arg11[%c0_26, %c0_27] : memref<72x1024xbf16, #tpu.memory_space<vmem>>, vector<8x512xbf16>
    tpu.vector_store %arg11[%c0_26, %c0_27], %32 {strides = array<i32>} : memref<72x1024xbf16, #tpu.memory_space<vmem>>, vector<8x512xbf16>,
    %c0_28 = arith.constant 0 : index
    %c695 = arith.constant 695 : index
    %34 = vector.load %arg10[%c0_28, %c695] : memref<8x1408xbf16, #tpu.memory_space<vmem>>, vector<8x512xbf16>
    %35 = arith.extf %34 : vector<8x512xbf16> to vector<8x512xf32>
    %36 = arith.mulf %35, %28 : vector<8x512xf32>
    %37 = arith.truncf %36 : vector<8x512xf32> to vector<8x512xbf16>
    %c0_29 = arith.constant 0 : index
    %c512 = arith.constant 512 : index
    %38 = vector.load %arg11[%c0_29, %c512] : memref<72x1024xbf16, #tpu.memory_space<vmem>>, vector<8x512xbf16>
    tpu.vector_store %arg11[%c0_29, %c512], %37 {strides = array<i32>} : memref<72x1024xbf16, #tpu.memory_space<vmem>>, vector<8x512xbf16>,
    %c1_30 = arith.constant 1 : index
    %c0_31 = arith.constant 0 : index
    %c0_32 = arith.constant 0 : index
    %39 = vector.load %arg8[%c1_30, %c0_31, %c0_32] : memref<9x8x512xf32, #tpu.memory_space<vmem>>, vector<1x8x512xf32>
    %40 = vector.shape_cast %39 : vector<1x8x512xf32> to vector<8x512xf32>
    %c0_33 = arith.constant 0 : index
    %c56 = arith.constant 56 : index
    %41 = vector.load %arg10[%c0_33, %c56] : memref<8x1408xbf16, #tpu.memory_space<vmem>>, vector<8x512xbf16>
    %42 = arith.extf %41 : vector<8x512xbf16> to vector<8x512xf32>
    %43 = arith.mulf %42, %40 : vector<8x512xf32>
    %44 = arith.truncf %43 : vector<8x512xf32> to vector<8x512xbf16>
    %c8 = arith.constant 8 : index
    %c0_34 = arith.constant 0 : index
    %45 = vector.load %arg11[%c8, %c0_34] : memref<72x1024xbf16, #tpu.memory_space<vmem>>, vector<8x512xbf16>
    tpu.vector_store %arg11[%c8, %c0_34], %44 {strides = array<i32>} : memref<72x1024xbf16, #tpu.memory_space<vmem>>, vector<8x512xbf16>,
    %c0_35 = arith.constant 0 : index
    %c696 = arith.constant 696 : index
    %46 = vector.load %arg10[%c0_35, %c696] : memref<8x1408xbf16, #tpu.memory_space<vmem>>, vector<8x512xbf16>
    %47 = arith.extf %46 : vector<8x512xbf16> to vector<8x512xf32>
    %48 = arith.mulf %47, %40 : vector<8x512xf32>
    %49 = arith.truncf %48 : vector<8x512xf32> to vector<8x512xbf16>
    %c8_36 = arith.constant 8 : index
    %c512_37 = arith.constant 512 : index
    %50 = vector.load %arg11[%c8_36, %c512_37] : memref<72x1024xbf16, #tpu.memory_space<vmem>>, vector<8x512xbf16>
    tpu.vector_store %arg11[%c8_36, %c512_37], %49 {strides = array<i32>} : memref<72x1024xbf16, #tpu.memory_space<vmem>>, vector<8x512xbf16>,
    %c2 = arith.constant 2 : index
    %c0_38 = arith.constant 0 : index
    %c0_39 = arith.constant 0 : index
    %51 = vector.load %arg8[%c2, %c0_38, %c0_39] : memref<9x8x512xf32, #tpu.memory_space<vmem>>, vector<1x8x512xf32>
    %52 = vector.shape_cast %51 : vector<1x8x512xf32> to vector<8x512xf32>
    %c0_40 = arith.constant 0 : index
    %c57 = arith.constant 57 : index
    %53 = vector.load %arg10[%c0_40, %c57] : memref<8x1408xbf16, #tpu.memory_space<vmem>>, vector<8x512xbf16>
    %54 = arith.extf %53 : vector<8x512xbf16> to vector<8x512xf32>
    %55 = arith.mulf %54, %52 : vector<8x512xf32>
    %56 = arith.truncf %55 : vector<8x512xf32> to vector<8x512xbf16>
    %c16 = arith.constant 16 : index
    %c0_41 = arith.constant 0 : index
    %57 = vector.load %arg11[%c16, %c0_41] : memref<72x1024xbf16, #tpu.memory_space<vmem>>, vector<8x512xbf16>
    tpu.vector_store %arg11[%c16, %c0_41], %56 {strides = array<i32>} : memref<72x1024xbf16, #tpu.memory_space<vmem>>, vector<8x512xbf16>,
    %c0_42 = arith.constant 0 : index
    %c697 = arith.constant 697 : index
    %58 = vector.load %arg10[%c0_42, %c697] : memref<8x1408xbf16, #tpu.memory_space<vmem>>, vector<8x512xbf16>
    %59 = arith.extf %58 : vector<8x512xbf16> to vector<8x512xf32>
    %60 = arith.mulf %59, %52 : vector<8x512xf32>
    %61 = arith.truncf %60 : vector<8x512xf32> to vector<8x512xbf16>
    %c16_43 = arith.constant 16 : index
    %c512_44 = arith.constant 512 : index
    %62 = vector.load %arg11[%c16_43, %c512_44] : memref<72x1024xbf16, #tpu.memory_space<vmem>>, vector<8x512xbf16>
    tpu.vector_store %arg11[%c16_43, %c512_44], %61 {strides = array<i32>} : memref<72x1024xbf16, #tpu.memory_space<vmem>>, vector<8x512xbf16>,
    %c3 = arith.constant 3 : index
    %c0_45 = arith.constant 0 : index
    %c0_46 = arith.constant 0 : index
    %63 = vector.load %arg8[%c3, %c0_45, %c0_46] : memref<9x8x512xf32, #tpu.memory_space<vmem>>, vector<1x8x512xf32>
    %64 = vector.shape_cast %63 : vector<1x8x512xf32> to vector<8x512xf32>
    %c0_47 = arith.constant 0 : index
    %c63 = arith.constant 63 : index
    %65 = vector.load %arg10[%c0_47, %c63] : memref<8x1408xbf16, #tpu.memory_space<vmem>>, vector<8x512xbf16>
    %66 = arith.extf %65 : vector<8x512xbf16> to vector<8x512xf32>
    %67 = arith.mulf %66, %64 : vector<8x512xf32>
    %68 = arith.truncf %67 : vector<8x512xf32> to vector<8x512xbf16>
    %c24 = arith.constant 24 : index
    %c0_48 = arith.constant 0 : index
    %69 = vector.load %arg11[%c24, %c0_48] : memref<72x1024xbf16, #tpu.memory_space<vmem>>, vector<8x512xbf16>
    tpu.vector_store %arg11[%c24, %c0_48], %68 {strides = array<i32>} : memref<72x1024xbf16, #tpu.memory_space<vmem>>, vector<8x512xbf16>,
    %c0_49 = arith.constant 0 : index
    %c703 = arith.constant 703 : index
    %70 = vector.load %arg10[%c0_49, %c703] : memref<8x1408xbf16, #tpu.memory_space<vmem>>, vector<8x512xbf16>
    %71 = arith.extf %70 : vector<8x512xbf16> to vector<8x512xf32>
    %72 = arith.mulf %71, %64 : vector<8x512xf32>
    %73 = arith.truncf %72 : vector<8x512xf32> to vector<8x512xbf16>
    %c24_50 = arith.constant 24 : index
    %c512_51 = arith.constant 512 : index
    %74 = vector.load %arg11[%c24_50, %c512_51] : memref<72x1024xbf16, #tpu.memory_space<vmem>>, vector<8x512xbf16>
    tpu.vector_store %arg11[%c24_50, %c512_51], %73 {strides = array<i32>} : memref<72x1024xbf16, #tpu.memory_space<vmem>>, vector<8x512xbf16>,
    %c0_52 = arith.constant 0 : index
    %c64 = arith.constant 64 : index
    %75 = vector.load %arg10[%c0_52, %c64] : memref<8x1408xbf16, #tpu.memory_space<vmem>>, vector<8x512xbf16>
    %c32 = arith.constant 32 : index
    %c0_53 = arith.constant 0 : index
    %76 = vector.load %arg11[%c32, %c0_53] : memref<72x1024xbf16, #tpu.memory_space<vmem>>, vector<8x512xbf16>
    tpu.vector_store %arg11[%c32, %c0_53], %75 {strides = array<i32>} : memref<72x1024xbf16, #tpu.memory_space<vmem>>, vector<8x512xbf16>,
    %c0_54 = arith.constant 0 : index
    %c704 = arith.constant 704 : index
    %77 = vector.load %arg10[%c0_54, %c704] : memref<8x1408xbf16, #tpu.memory_space<vmem>>, vector<8x512xbf16>
    %c32_55 = arith.constant 32 : index
    %c512_56 = arith.constant 512 : index
    %78 = vector.load %arg11[%c32_55, %c512_56] : memref<72x1024xbf16, #tpu.memory_space<vmem>>, vector<8x512xbf16>
    tpu.vector_store %arg11[%c32_55, %c512_56], %77 {strides = array<i32>} : memref<72x1024xbf16, #tpu.memory_space<vmem>>, vector<8x512xbf16>,
    %c5 = arith.constant 5 : index
    %c0_57 = arith.constant 0 : index
    %c0_58 = arith.constant 0 : index
    %79 = vector.load %arg8[%c5, %c0_57, %c0_58] : memref<9x8x512xf32, #tpu.memory_space<vmem>>, vector<1x8x512xf32>
    %80 = vector.shape_cast %79 : vector<1x8x512xf32> to vector<8x512xf32>
    %c0_59 = arith.constant 0 : index
    %c65 = arith.constant 65 : index
    %81 = vector.load %arg10[%c0_59, %c65] : memref<8x1408xbf16, #tpu.memory_space<vmem>>, vector<8x512xbf16>
    %82 = arith.extf %81 : vector<8x512xbf16> to vector<8x512xf32>
    %83 = arith.mulf %82, %80 : vector<8x512xf32>
    %84 = arith.truncf %83 : vector<8x512xf32> to vector<8x512xbf16>
    %c40 = arith.constant 40 : index
    %c0_60 = arith.constant 0 : index
    %85 = vector.load %arg11[%c40, %c0_60] : memref<72x1024xbf16, #tpu.memory_space<vmem>>, vector<8x512xbf16>
    tpu.vector_store %arg11[%c40, %c0_60], %84 {strides = array<i32>} : memref<72x1024xbf16, #tpu.memory_space<vmem>>, vector<8x512xbf16>,
    %c0_61 = arith.constant 0 : index
    %c705 = arith.constant 705 : index
    %86 = vector.load %arg10[%c0_61, %c705] : memref<8x1408xbf16, #tpu.memory_space<vmem>>, vector<8x512xbf16>
    %87 = arith.extf %86 : vector<8x512xbf16> to vector<8x512xf32>
    %88 = arith.mulf %87, %80 : vector<8x512xf32>
    %89 = arith.truncf %88 : vector<8x512xf32> to vector<8x512xbf16>
    %c40_62 = arith.constant 40 : index
    %c512_63 = arith.constant 512 : index
    %90 = vector.load %arg11[%c40_62, %c512_63] : memref<72x1024xbf16, #tpu.memory_space<vmem>>, vector<8x512xbf16>
    tpu.vector_store %arg11[%c40_62, %c512_63], %89 {strides = array<i32>} : memref<72x1024xbf16, #tpu.memory_space<vmem>>, vector<8x512xbf16>,
    %c6 = arith.constant 6 : index
    %c0_64 = arith.constant 0 : index
    %c0_65 = arith.constant 0 : index
    %91 = vector.load %arg8[%c6, %c0_64, %c0_65] : memref<9x8x512xf32, #tpu.memory_space<vmem>>, vector<1x8x512xf32>
    %92 = vector.shape_cast %91 : vector<1x8x512xf32> to vector<8x512xf32>
    %c0_66 = arith.constant 0 : index
    %c71 = arith.constant 71 : index
    %93 = vector.load %arg10[%c0_66, %c71] : memref<8x1408xbf16, #tpu.memory_space<vmem>>, vector<8x512xbf16>
    %94 = arith.extf %93 : vector<8x512xbf16> to vector<8x512xf32>
    %95 = arith.mulf %94, %92 : vector<8x512xf32>
    %96 = arith.truncf %95 : vector<8x512xf32> to vector<8x512xbf16>
    %c48 = arith.constant 48 : index
    %c0_67 = arith.constant 0 : index
    %97 = vector.load %arg11[%c48, %c0_67] : memref<72x1024xbf16, #tpu.memory_space<vmem>>, vector<8x512xbf16>
    tpu.vector_store %arg11[%c48, %c0_67], %96 {strides = array<i32>} : memref<72x1024xbf16, #tpu.memory_space<vmem>>, vector<8x512xbf16>,
    %c0_68 = arith.constant 0 : index
    %c711 = arith.constant 711 : index
    %98 = vector.load %arg10[%c0_68, %c711] : memref<8x1408xbf16, #tpu.memory_space<vmem>>, vector<8x512xbf16>
    %99 = arith.extf %98 : vector<8x512xbf16> to vector<8x512xf32>
    %100 = arith.mulf %99, %92 : vector<8x512xf32>
    %101 = arith.truncf %100 : vector<8x512xf32> to vector<8x512xbf16>
    %c48_69 = arith.constant 48 : index
    %c512_70 = arith.constant 512 : index
    %102 = vector.load %arg11[%c48_69, %c512_70] : memref<72x1024xbf16, #tpu.memory_space<vmem>>, vector<8x512xbf16>
    tpu.vector_store %arg11[%c48_69, %c512_70], %101 {strides = array<i32>} : memref<72x1024xbf16, #tpu.memory_space<vmem>>, vector<8x512xbf16>,
    %c7 = arith.constant 7 : index
    %c0_71 = arith.constant 0 : index
    %c0_72 = arith.constant 0 : index
    %103 = vector.load %arg8[%c7, %c0_71, %c0_72] : memref<9x8x512xf32, #tpu.memory_space<vmem>>, vector<1x8x512xf32>
    %104 = vector.shape_cast %103 : vector<1x8x512xf32> to vector<8x512xf32>
    %c0_73 = arith.constant 0 : index
    %c72 = arith.constant 72 : index
    %105 = vector.load %arg10[%c0_73, %c72] : memref<8x1408xbf16, #tpu.memory_space<vmem>>, vector<8x512xbf16>
    %106 = arith.extf %105 : vector<8x512xbf16> to vector<8x512xf32>
    %107 = arith.mulf %106, %104 : vector<8x512xf32>
    %108 = arith.truncf %107 : vector<8x512xf32> to vector<8x512xbf16>
    %c56_74 = arith.constant 56 : index
    %c0_75 = arith.constant 0 : index
    %109 = vector.load %arg11[%c56_74, %c0_75] : memref<72x1024xbf16, #tpu.memory_space<vmem>>, vector<8x512xbf16>
    tpu.vector_store %arg11[%c56_74, %c0_75], %108 {strides = array<i32>} : memref<72x1024xbf16, #tpu.memory_space<vmem>>, vector<8x512xbf16>,
    %c0_76 = arith.constant 0 : index
    %c712 = arith.constant 712 : index
    %110 = vector.load %arg10[%c0_76, %c712] : memref<8x1408xbf16, #tpu.memory_space<vmem>>, vector<8x512xbf16>
    %111 = arith.extf %110 : vector<8x512xbf16> to vector<8x512xf32>
    %112 = arith.mulf %111, %104 : vector<8x512xf32>
    %113 = arith.truncf %112 : vector<8x512xf32> to vector<8x512xbf16>
    %c56_77 = arith.constant 56 : index
    %c512_78 = arith.constant 512 : index
    %114 = vector.load %arg11[%c56_77, %c512_78] : memref<72x1024xbf16, #tpu.memory_space<vmem>>, vector<8x512xbf16>
    tpu.vector_store %arg11[%c56_77, %c512_78], %113 {strides = array<i32>} : memref<72x1024xbf16, #tpu.memory_space<vmem>>, vector<8x512xbf16>,
    %c8_79 = arith.constant 8 : index
    %c0_80 = arith.constant 0 : index
    %c0_81 = arith.constant 0 : index
    %115 = vector.load %arg8[%c8_79, %c0_80, %c0_81] : memref<9x8x512xf32, #tpu.memory_space<vmem>>, vector<1x8x512xf32>
    %116 = vector.shape_cast %115 : vector<1x8x512xf32> to vector<8x512xf32>
    %c0_82 = arith.constant 0 : index
    %c73 = arith.constant 73 : index
    %117 = vector.load %arg10[%c0_82, %c73] : memref<8x1408xbf16, #tpu.memory_space<vmem>>, vector<8x512xbf16>
    %118 = arith.extf %117 : vector<8x512xbf16> to vector<8x512xf32>
    %119 = arith.mulf %118, %116 : vector<8x512xf32>
    %120 = arith.truncf %119 : vector<8x512xf32> to vector<8x512xbf16>
    %c64_83 = arith.constant 64 : index
    %c0_84 = arith.constant 0 : index
    %121 = vector.load %arg11[%c64_83, %c0_84] : memref<72x1024xbf16, #tpu.memory_space<vmem>>, vector<8x512xbf16>
    tpu.vector_store %arg11[%c64_83, %c0_84], %120 {strides = array<i32>} : memref<72x1024xbf16, #tpu.memory_space<vmem>>, vector<8x512xbf16>,
    %c0_85 = arith.constant 0 : index
    %c713 = arith.constant 713 : index
    %122 = vector.load %arg10[%c0_85, %c713] : memref<8x1408xbf16, #tpu.memory_space<vmem>>, vector<8x512xbf16>
    %123 = arith.extf %122 : vector<8x512xbf16> to vector<8x512xf32>
    %124 = arith.mulf %123, %116 : vector<8x512xf32>
    %125 = arith.truncf %124 : vector<8x512xf32> to vector<8x512xbf16>
    %c64_86 = arith.constant 64 : index
    %c512_87 = arith.constant 512 : index
    %126 = vector.load %arg11[%c64_86, %c512_87] : memref<72x1024xbf16, #tpu.memory_space<vmem>>, vector<8x512xbf16>
    tpu.vector_store %arg11[%c64_86, %c512_87], %125 {strides = array<i32>} : memref<72x1024xbf16, #tpu.memory_space<vmem>>, vector<8x512xbf16>,
    %c0_88 = arith.constant 0 : index
    %c0_89 = arith.constant 0 : index
    %c0_90 = arith.constant 0 : index
    %127 = vector.load %arg4[%c0_88, %c0_89, %c0_90] : memref<3x8x72xbf16, #tpu.memory_space<vmem>>, vector<1x8x72xbf16>
    %128 = vector.shape_cast %127 : vector<1x8x72xbf16> to vector<8x72xbf16>
    %c0_91 = arith.constant 0 : index
    %c0_92 = arith.constant 0 : index
    %129 = vector.load %arg11[%c0_91, %c0_92] : memref<72x1024xbf16, #tpu.memory_space<vmem>>, vector<72x1024xbf16>
    %cst_93 = arith.constant dense<0.000000e+00> : vector<8x1024xf32>
    %130 = tpu.matmul %128, %129, %cst_93 {dimension_numbers = #tpu.dot_dimension_numbers<[1], [0], [0], [1], [0, 0, 1, 1], [], []>} : vector<8x72xbf16>, vector<72x1024xbf16>, vector<8x1024xf32> -> vector<8x1024xf32>
    %c0_94 = arith.constant 0 : index
    %c0_95 = arith.constant 0 : index
    %131 = vector.load %arg12[%c0_94, %c0_95] : memref<8x1024xf32, #tpu.memory_space<vmem>>, vector<8x1024xf32>
    tpu.vector_store %arg12[%c0_94, %c0_95], %130 {strides = array<i32>} : memref<8x1024xf32, #tpu.memory_space<vmem>>, vector<8x1024xf32>,
    %c0_96 = arith.constant 0 : index
    %c0_97 = arith.constant 0 : index
    %c0_98 = arith.constant 0 : index
    %132 = vector.load %arg8[%c0_96, %c0_97, %c0_98] : memref<9x8x512xf32, #tpu.memory_space<vmem>>, vector<1x8x512xf32>
    %133 = vector.shape_cast %132 : vector<1x8x512xf32> to vector<8x512xf32>
    %c0_99 = arith.constant 0 : index
    %c119 = arith.constant 119 : index
    %134 = vector.load %arg10[%c0_99, %c119] : memref<8x1408xbf16, #tpu.memory_space<vmem>>, vector<8x512xbf16>
    %135 = arith.extf %134 : vector<8x512xbf16> to vector<8x512xf32>
    %136 = arith.mulf %135, %133 : vector<8x512xf32>
    %137 = arith.truncf %136 : vector<8x512xf32> to vector<8x512xbf16>
    %c0_100 = arith.constant 0 : index
    %c0_101 = arith.constant 0 : index
    %138 = vector.load %arg11[%c0_100, %c0_101] : memref<72x1024xbf16, #tpu.memory_space<vmem>>, vector<8x512xbf16>
    tpu.vector_store %arg11[%c0_100, %c0_101], %137 {strides = array<i32>} : memref<72x1024xbf16, #tpu.memory_space<vmem>>, vector<8x512xbf16>,
    %c0_102 = arith.constant 0 : index
    %c759 = arith.constant 759 : index
    %139 = vector.load %arg10[%c0_102, %c759] : memref<8x1408xbf16, #tpu.memory_space<vmem>>, vector<8x512xbf16>
    %140 = arith.extf %139 : vector<8x512xbf16> to vector<8x512xf32>
    %141 = arith.mulf %140, %133 : vector<8x512xf32>
    %142 = arith.truncf %141 : vector<8x512xf32> to vector<8x512xbf16>
    %c0_103 = arith.constant 0 : index
    %c512_104 = arith.constant 512 : index
    %143 = vector.load %arg11[%c0_103, %c512_104] : memref<72x1024xbf16, #tpu.memory_space<vmem>>, vector<8x512xbf16>
    tpu.vector_store %arg11[%c0_103, %c512_104], %142 {strides = array<i32>} : memref<72x1024xbf16, #tpu.memory_space<vmem>>, vector<8x512xbf16>,
    %c1_105 = arith.constant 1 : index
    %c0_106 = arith.constant 0 : index
    %c0_107 = arith.constant 0 : index
    %144 = vector.load %arg8[%c1_105, %c0_106, %c0_107] : memref<9x8x512xf32, #tpu.memory_space<vmem>>, vector<1x8x512xf32>
    %145 = vector.shape_cast %144 : vector<1x8x512xf32> to vector<8x512xf32>
    %c0_108 = arith.constant 0 : index
    %c120 = arith.constant 120 : index
    %146 = vector.load %arg10[%c0_108, %c120] : memref<8x1408xbf16, #tpu.memory_space<vmem>>, vector<8x512xbf16>
    %147 = arith.extf %146 : vector<8x512xbf16> to vector<8x512xf32>
    %148 = arith.mulf %147, %145 : vector<8x512xf32>
    %149 = arith.truncf %148 : vector<8x512xf32> to vector<8x512xbf16>
    %c8_109 = arith.constant 8 : index
    %c0_110 = arith.constant 0 : index
    %150 = vector.load %arg11[%c8_109, %c0_110] : memref<72x1024xbf16, #tpu.memory_space<vmem>>, vector<8x512xbf16>
    tpu.vector_store %arg11[%c8_109, %c0_110], %149 {strides = array<i32>} : memref<72x1024xbf16, #tpu.memory_space<vmem>>, vector<8x512xbf16>,
    %c0_111 = arith.constant 0 : index
    %c760 = arith.constant 760 : index
    %151 = vector.load %arg10[%c0_111, %c760] : memref<8x1408xbf16, #tpu.memory_space<vmem>>, vector<8x512xbf16>
    %152 = arith.extf %151 : vector<8x512xbf16> to vector<8x512xf32>
    %153 = arith.mulf %152, %145 : vector<8x512xf32>
    %154 = arith.truncf %153 : vector<8x512xf32> to vector<8x512xbf16>
    %c8_112 = arith.constant 8 : index
    %c512_113 = arith.constant 512 : index
    %155 = vector.load %arg11[%c8_112, %c512_113] : memref<72x1024xbf16, #tpu.memory_space<vmem>>, vector<8x512xbf16>
    tpu.vector_store %arg11[%c8_112, %c512_113], %154 {strides = array<i32>} : memref<72x1024xbf16, #tpu.memory_space<vmem>>, vector<8x512xbf16>,
    %c2_114 = arith.constant 2 : index
    %c0_115 = arith.constant 0 : index
    %c0_116 = arith.constant 0 : index
    %156 = vector.load %arg8[%c2_114, %c0_115, %c0_116] : memref<9x8x512xf32, #tpu.memory_space<vmem>>, vector<1x8x512xf32>
    %157 = vector.shape_cast %156 : vector<1x8x512xf32> to vector<8x512xf32>
    %c0_117 = arith.constant 0 : index
    %c121 = arith.constant 121 : index
    %158 = vector.load %arg10[%c0_117, %c121] : memref<8x1408xbf16, #tpu.memory_space<vmem>>, vector<8x512xbf16>
    %159 = arith.extf %158 : vector<8x512xbf16> to vector<8x512xf32>
    %160 = arith.mulf %159, %157 : vector<8x512xf32>
    %161 = arith.truncf %160 : vector<8x512xf32> to vector<8x512xbf16>
    %c16_118 = arith.constant 16 : index
    %c0_119 = arith.constant 0 : index
    %162 = vector.load %arg11[%c16_118, %c0_119] : memref<72x1024xbf16, #tpu.memory_space<vmem>>, vector<8x512xbf16>
    tpu.vector_store %arg11[%c16_118, %c0_119], %161 {strides = array<i32>} : memref<72x1024xbf16, #tpu.memory_space<vmem>>, vector<8x512xbf16>,
    %c0_120 = arith.constant 0 : index
    %c761 = arith.constant 761 : index
    %163 = vector.load %arg10[%c0_120, %c761] : memref<8x1408xbf16, #tpu.memory_space<vmem>>, vector<8x512xbf16>
    %164 = arith.extf %163 : vector<8x512xbf16> to vector<8x512xf32>
    %165 = arith.mulf %164, %157 : vector<8x512xf32>
    %166 = arith.truncf %165 : vector<8x512xf32> to vector<8x512xbf16>
    %c16_121 = arith.constant 16 : index
    %c512_122 = arith.constant 512 : index
    %167 = vector.load %arg11[%c16_121, %c512_122] : memref<72x1024xbf16, #tpu.memory_space<vmem>>, vector<8x512xbf16>
    tpu.vector_store %arg11[%c16_121, %c512_122], %166 {strides = array<i32>} : memref<72x1024xbf16, #tpu.memory_space<vmem>>, vector<8x512xbf16>,
    %c3_123 = arith.constant 3 : index
    %c0_124 = arith.constant 0 : index
    %c0_125 = arith.constant 0 : index
    %168 = vector.load %arg8[%c3_123, %c0_124, %c0_125] : memref<9x8x512xf32, #tpu.memory_space<vmem>>, vector<1x8x512xf32>
    %169 = vector.shape_cast %168 : vector<1x8x512xf32> to vector<8x512xf32>
    %c0_126 = arith.constant 0 : index
    %c127 = arith.constant 127 : index
    %170 = vector.load %arg10[%c0_126, %c127] : memref<8x1408xbf16, #tpu.memory_space<vmem>>, vector<8x512xbf16>
    %171 = arith.extf %170 : vector<8x512xbf16> to vector<8x512xf32>
    %172 = arith.mulf %171, %169 : vector<8x512xf32>
    %173 = arith.truncf %172 : vector<8x512xf32> to vector<8x512xbf16>
    %c24_127 = arith.constant 24 : index
    %c0_128 = arith.constant 0 : index
    %174 = vector.load %arg11[%c24_127, %c0_128] : memref<72x1024xbf16, #tpu.memory_space<vmem>>, vector<8x512xbf16>
    tpu.vector_store %arg11[%c24_127, %c0_128], %173 {strides = array<i32>} : memref<72x1024xbf16, #tpu.memory_space<vmem>>, vector<8x512xbf16>,
    %c0_129 = arith.constant 0 : index
    %c767 = arith.constant 767 : index
    %175 = vector.load %arg10[%c0_129, %c767] : memref<8x1408xbf16, #tpu.memory_space<vmem>>, vector<8x512xbf16>
    %176 = arith.extf %175 : vector<8x512xbf16> to vector<8x512xf32>
    %177 = arith.mulf %176, %169 : vector<8x512xf32>
    %178 = arith.truncf %177 : vector<8x512xf32> to vector<8x512xbf16>
    %c24_130 = arith.constant 24 : index
    %c512_131 = arith.constant 512 : index
    %179 = vector.load %arg11[%c24_130, %c512_131] : memref<72x1024xbf16, #tpu.memory_space<vmem>>, vector<8x512xbf16>
    tpu.vector_store %arg11[%c24_130, %c512_131], %178 {strides = array<i32>} : memref<72x1024xbf16, #tpu.memory_space<vmem>>, vector<8x512xbf16>,
    %c0_132 = arith.constant 0 : index
    %c128_133 = arith.constant 128 : index
    %180 = vector.load %arg10[%c0_132, %c128_133] : memref<8x1408xbf16, #tpu.memory_space<vmem>>, vector<8x512xbf16>
    %c32_134 = arith.constant 32 : index
    %c0_135 = arith.constant 0 : index
    %181 = vector.load %arg11[%c32_134, %c0_135] : memref<72x1024xbf16, #tpu.memory_space<vmem>>, vector<8x512xbf16>
    tpu.vector_store %arg11[%c32_134, %c0_135], %180 {strides = array<i32>} : memref<72x1024xbf16, #tpu.memory_space<vmem>>, vector<8x512xbf16>,
    %c0_136 = arith.constant 0 : index
    %c768_137 = arith.constant 768 : index
    %182 = vector.load %arg10[%c0_136, %c768_137] : memref<8x1408xbf16, #tpu.memory_space<vmem>>, vector<8x512xbf16>
    %c32_138 = arith.constant 32 : index
    %c512_139 = arith.constant 512 : index
    %183 = vector.load %arg11[%c32_138, %c512_139] : memref<72x1024xbf16, #tpu.memory_space<vmem>>, vector<8x512xbf16>
    tpu.vector_store %arg11[%c32_138, %c512_139], %182 {strides = array<i32>} : memref<72x1024xbf16, #tpu.memory_space<vmem>>, vector<8x512xbf16>,
    %c5_140 = arith.constant 5 : index
    %c0_141 = arith.constant 0 : index
    %c0_142 = arith.constant 0 : index
    %184 = vector.load %arg8[%c5_140, %c0_141, %c0_142] : memref<9x8x512xf32, #tpu.memory_space<vmem>>, vector<1x8x512xf32>
    %185 = vector.shape_cast %184 : vector<1x8x512xf32> to vector<8x512xf32>
    %c0_143 = arith.constant 0 : index
    %c129 = arith.constant 129 : index
    %186 = vector.load %arg10[%c0_143, %c129] : memref<8x1408xbf16, #tpu.memory_space<vmem>>, vector<8x512xbf16>
    %187 = arith.extf %186 : vector<8x512xbf16> to vector<8x512xf32>
    %188 = arith.mulf %187, %185 : vector<8x512xf32>
    %189 = arith.truncf %188 : vector<8x512xf32> to vector<8x512xbf16>
    %c40_144 = arith.constant 40 : index
    %c0_145 = arith.constant 0 : index
    %190 = vector.load %arg11[%c40_144, %c0_145] : memref<72x1024xbf16, #tpu.memory_space<vmem>>, vector<8x512xbf16>
    tpu.vector_store %arg11[%c40_144, %c0_145], %189 {strides = array<i32>} : memref<72x1024xbf16, #tpu.memory_space<vmem>>, vector<8x512xbf16>,
    %c0_146 = arith.constant 0 : index
    %c769 = arith.constant 769 : index
    %191 = vector.load %arg10[%c0_146, %c769] : memref<8x1408xbf16, #tpu.memory_space<vmem>>, vector<8x512xbf16>
    %192 = arith.extf %191 : vector<8x512xbf16> to vector<8x512xf32>
    %193 = arith.mulf %192, %185 : vector<8x512xf32>
    %194 = arith.truncf %193 : vector<8x512xf32> to vector<8x512xbf16>
    %c40_147 = arith.constant 40 : index
    %c512_148 = arith.constant 512 : index
    %195 = vector.load %arg11[%c40_147, %c512_148] : memref<72x1024xbf16, #tpu.memory_space<vmem>>, vector<8x512xbf16>
    tpu.vector_store %arg11[%c40_147, %c512_148], %194 {strides = array<i32>} : memref<72x1024xbf16, #tpu.memory_space<vmem>>, vector<8x512xbf16>,
    %c6_149 = arith.constant 6 : index
    %c0_150 = arith.constant 0 : index
    %c0_151 = arith.constant 0 : index
    %196 = vector.load %arg8[%c6_149, %c0_150, %c0_151] : memref<9x8x512xf32, #tpu.memory_space<vmem>>, vector<1x8x512xf32>
    %197 = vector.shape_cast %196 : vector<1x8x512xf32> to vector<8x512xf32>
    %c0_152 = arith.constant 0 : index
    %c135 = arith.constant 135 : index
    %198 = vector.load %arg10[%c0_152, %c135] : memref<8x1408xbf16, #tpu.memory_space<vmem>>, vector<8x512xbf16>
    %199 = arith.extf %198 : vector<8x512xbf16> to vector<8x512xf32>
    %200 = arith.mulf %199, %197 : vector<8x512xf32>
    %201 = arith.truncf %200 : vector<8x512xf32> to vector<8x512xbf16>
    %c48_153 = arith.constant 48 : index
    %c0_154 = arith.constant 0 : index
    %202 = vector.load %arg11[%c48_153, %c0_154] : memref<72x1024xbf16, #tpu.memory_space<vmem>>, vector<8x512xbf16>
    tpu.vector_store %arg11[%c48_153, %c0_154], %201 {strides = array<i32>} : memref<72x1024xbf16, #tpu.memory_space<vmem>>, vector<8x512xbf16>,
    %c0_155 = arith.constant 0 : index
    %c775 = arith.constant 775 : index
    %203 = vector.load %arg10[%c0_155, %c775] : memref<8x1408xbf16, #tpu.memory_space<vmem>>, vector<8x512xbf16>
    %204 = arith.extf %203 : vector<8x512xbf16> to vector<8x512xf32>
    %205 = arith.mulf %204, %197 : vector<8x512xf32>
    %206 = arith.truncf %205 : vector<8x512xf32> to vector<8x512xbf16>
    %c48_156 = arith.constant 48 : index
    %c512_157 = arith.constant 512 : index
    %207 = vector.load %arg11[%c48_156, %c512_157] : memref<72x1024xbf16, #tpu.memory_space<vmem>>, vector<8x512xbf16>
    tpu.vector_store %arg11[%c48_156, %c512_157], %206 {strides = array<i32>} : memref<72x1024xbf16, #tpu.memory_space<vmem>>, vector<8x512xbf16>,
    %c7_158 = arith.constant 7 : index
    %c0_159 = arith.constant 0 : index
    %c0_160 = arith.constant 0 : index
    %208 = vector.load %arg8[%c7_158, %c0_159, %c0_160] : memref<9x8x512xf32, #tpu.memory_space<vmem>>, vector<1x8x512xf32>
    %209 = vector.shape_cast %208 : vector<1x8x512xf32> to vector<8x512xf32>
    %c0_161 = arith.constant 0 : index
    %c136 = arith.constant 136 : index
    %210 = vector.load %arg10[%c0_161, %c136] : memref<8x1408xbf16, #tpu.memory_space<vmem>>, vector<8x512xbf16>
    %211 = arith.extf %210 : vector<8x512xbf16> to vector<8x512xf32>
    %212 = arith.mulf %211, %209 : vector<8x512xf32>
    %213 = arith.truncf %212 : vector<8x512xf32> to vector<8x512xbf16>
    %c56_162 = arith.constant 56 : index
    %c0_163 = arith.constant 0 : index
    %214 = vector.load %arg11[%c56_162, %c0_163] : memref<72x1024xbf16, #tpu.memory_space<vmem>>, vector<8x512xbf16>
    tpu.vector_store %arg11[%c56_162, %c0_163], %213 {strides = array<i32>} : memref<72x1024xbf16, #tpu.memory_space<vmem>>, vector<8x512xbf16>,
    %c0_164 = arith.constant 0 : index
    %c776 = arith.constant 776 : index
    %215 = vector.load %arg10[%c0_164, %c776] : memref<8x1408xbf16, #tpu.memory_space<vmem>>, vector<8x512xbf16>
    %216 = arith.extf %215 : vector<8x512xbf16> to vector<8x512xf32>
    %217 = arith.mulf %216, %209 : vector<8x512xf32>
    %218 = arith.truncf %217 : vector<8x512xf32> to vector<8x512xbf16>
    %c56_165 = arith.constant 56 : index
    %c512_166 = arith.constant 512 : index
    %219 = vector.load %arg11[%c56_165, %c512_166] : memref<72x1024xbf16, #tpu.memory_space<vmem>>, vector<8x512xbf16>
    tpu.vector_store %arg11[%c56_165, %c512_166], %218 {strides = array<i32>} : memref<72x1024xbf16, #tpu.memory_space<vmem>>, vector<8x512xbf16>,
    %c8_167 = arith.constant 8 : index
    %c0_168 = arith.constant 0 : index
    %c0_169 = arith.constant 0 : index
    %220 = vector.load %arg8[%c8_167, %c0_168, %c0_169] : memref<9x8x512xf32, #tpu.memory_space<vmem>>, vector<1x8x512xf32>
    %221 = vector.shape_cast %220 : vector<1x8x512xf32> to vector<8x512xf32>
    %c0_170 = arith.constant 0 : index
    %c137 = arith.constant 137 : index
    %222 = vector.load %arg10[%c0_170, %c137] : memref<8x1408xbf16, #tpu.memory_space<vmem>>, vector<8x512xbf16>
    %223 = arith.extf %222 : vector<8x512xbf16> to vector<8x512xf32>
    %224 = arith.mulf %223, %221 : vector<8x512xf32>
    %225 = arith.truncf %224 : vector<8x512xf32> to vector<8x512xbf16>
    %c64_171 = arith.constant 64 : index
    %c0_172 = arith.constant 0 : index
    %226 = vector.load %arg11[%c64_171, %c0_172] : memref<72x1024xbf16, #tpu.memory_space<vmem>>, vector<8x512xbf16>
    tpu.vector_store %arg11[%c64_171, %c0_172], %225 {strides = array<i32>} : memref<72x1024xbf16, #tpu.memory_space<vmem>>, vector<8x512xbf16>,
    %c0_173 = arith.constant 0 : index
    %c777 = arith.constant 777 : index
    %227 = vector.load %arg10[%c0_173, %c777] : memref<8x1408xbf16, #tpu.memory_space<vmem>>, vector<8x512xbf16>
    %228 = arith.extf %227 : vector<8x512xbf16> to vector<8x512xf32>
    %229 = arith.mulf %228, %221 : vector<8x512xf32>
    %230 = arith.truncf %229 : vector<8x512xf32> to vector<8x512xbf16>
    %c64_174 = arith.constant 64 : index
    %c512_175 = arith.constant 512 : index
    %231 = vector.load %arg11[%c64_174, %c512_175] : memref<72x1024xbf16, #tpu.memory_space<vmem>>, vector<8x512xbf16>
    tpu.vector_store %arg11[%c64_174, %c512_175], %230 {strides = array<i32>} : memref<72x1024xbf16, #tpu.memory_space<vmem>>, vector<8x512xbf16>,
    %c1_176 = arith.constant 1 : index
    %c0_177 = arith.constant 0 : index
    %c0_178 = arith.constant 0 : index
    %232 = vector.load %arg4[%c1_176, %c0_177, %c0_178] : memref<3x8x72xbf16, #tpu.memory_space<vmem>>, vector<1x8x72xbf16>
    %233 = vector.shape_cast %232 : vector<1x8x72xbf16> to vector<8x72xbf16>
    %c0_179 = arith.constant 0 : index
    %c0_180 = arith.constant 0 : index
    %234 = vector.load %arg11[%c0_179, %c0_180] : memref<72x1024xbf16, #tpu.memory_space<vmem>>, vector<72x1024xbf16>
    %cst_181 = arith.constant dense<0.000000e+00> : vector<8x1024xf32>
    %235 = tpu.matmul %233, %234, %cst_181 {dimension_numbers = #tpu.dot_dimension_numbers<[1], [0], [0], [1], [0, 0, 1, 1], [], []>} : vector<8x72xbf16>, vector<72x1024xbf16>, vector<8x1024xf32> -> vector<8x1024xf32>
    %c0_182 = arith.constant 0 : index
    %c0_183 = arith.constant 0 : index
    %236 = vector.load %arg12[%c0_182, %c0_183] : memref<8x1024xf32, #tpu.memory_space<vmem>>, vector<8x1024xf32>
    %237 = arith.addf %236, %235 : vector<8x1024xf32>
    %c0_184 = arith.constant 0 : index
    %c0_185 = arith.constant 0 : index
    %238 = vector.load %arg12[%c0_184, %c0_185] : memref<8x1024xf32, #tpu.memory_space<vmem>>, vector<8x1024xf32>
    tpu.vector_store %arg12[%c0_184, %c0_185], %237 {strides = array<i32>} : memref<8x1024xf32, #tpu.memory_space<vmem>>, vector<8x1024xf32>,
    %c0_186 = arith.constant 0 : index
    %c0_187 = arith.constant 0 : index
    %c0_188 = arith.constant 0 : index
    %239 = vector.load %arg8[%c0_186, %c0_187, %c0_188] : memref<9x8x512xf32, #tpu.memory_space<vmem>>, vector<1x8x512xf32>
    %240 = vector.shape_cast %239 : vector<1x8x512xf32> to vector<8x512xf32>
    %c0_189 = arith.constant 0 : index
    %c183 = arith.constant 183 : index
    %241 = vector.load %arg10[%c0_189, %c183] : memref<8x1408xbf16, #tpu.memory_space<vmem>>, vector<8x512xbf16>
    %242 = arith.extf %241 : vector<8x512xbf16> to vector<8x512xf32>
    %243 = arith.mulf %242, %240 : vector<8x512xf32>
    %244 = arith.truncf %243 : vector<8x512xf32> to vector<8x512xbf16>
    %c0_190 = arith.constant 0 : index
    %c0_191 = arith.constant 0 : index
    %245 = vector.load %arg11[%c0_190, %c0_191] : memref<72x1024xbf16, #tpu.memory_space<vmem>>, vector<8x512xbf16>
    tpu.vector_store %arg11[%c0_190, %c0_191], %244 {strides = array<i32>} : memref<72x1024xbf16, #tpu.memory_space<vmem>>, vector<8x512xbf16>,
    %c0_192 = arith.constant 0 : index
    %c823 = arith.constant 823 : index
    %246 = vector.load %arg10[%c0_192, %c823] : memref<8x1408xbf16, #tpu.memory_space<vmem>>, vector<8x512xbf16>
    %247 = arith.extf %246 : vector<8x512xbf16> to vector<8x512xf32>
    %248 = arith.mulf %247, %240 : vector<8x512xf32>
    %249 = arith.truncf %248 : vector<8x512xf32> to vector<8x512xbf16>
    %c0_193 = arith.constant 0 : index
    %c512_194 = arith.constant 512 : index
    %250 = vector.load %arg11[%c0_193, %c512_194] : memref<72x1024xbf16, #tpu.memory_space<vmem>>, vector<8x512xbf16>
    tpu.vector_store %arg11[%c0_193, %c512_194], %249 {strides = array<i32>} : memref<72x1024xbf16, #tpu.memory_space<vmem>>, vector<8x512xbf16>,
    %c1_195 = arith.constant 1 : index
    %c0_196 = arith.constant 0 : index
    %c0_197 = arith.constant 0 : index
    %251 = vector.load %arg8[%c1_195, %c0_196, %c0_197] : memref<9x8x512xf32, #tpu.memory_space<vmem>>, vector<1x8x512xf32>
    %252 = vector.shape_cast %251 : vector<1x8x512xf32> to vector<8x512xf32>
    %c0_198 = arith.constant 0 : index
    %c184 = arith.constant 184 : index
    %253 = vector.load %arg10[%c0_198, %c184] : memref<8x1408xbf16, #tpu.memory_space<vmem>>, vector<8x512xbf16>
    %254 = arith.extf %253 : vector<8x512xbf16> to vector<8x512xf32>
    %255 = arith.mulf %254, %252 : vector<8x512xf32>
    %256 = arith.truncf %255 : vector<8x512xf32> to vector<8x512xbf16>
    %c8_199 = arith.constant 8 : index
    %c0_200 = arith.constant 0 : index
    %257 = vector.load %arg11[%c8_199, %c0_200] : memref<72x1024xbf16, #tpu.memory_space<vmem>>, vector<8x512xbf16>
    tpu.vector_store %arg11[%c8_199, %c0_200], %256 {strides = array<i32>} : memref<72x1024xbf16, #tpu.memory_space<vmem>>, vector<8x512xbf16>,
    %c0_201 = arith.constant 0 : index
    %c824 = arith.constant 824 : index
    %258 = vector.load %arg10[%c0_201, %c824] : memref<8x1408xbf16, #tpu.memory_space<vmem>>, vector<8x512xbf16>
    %259 = arith.extf %258 : vector<8x512xbf16> to vector<8x512xf32>
    %260 = arith.mulf %259, %252 : vector<8x512xf32>
    %261 = arith.truncf %260 : vector<8x512xf32> to vector<8x512xbf16>
    %c8_202 = arith.constant 8 : index
    %c512_203 = arith.constant 512 : index
    %262 = vector.load %arg11[%c8_202, %c512_203] : memref<72x1024xbf16, #tpu.memory_space<vmem>>, vector<8x512xbf16>
    tpu.vector_store %arg11[%c8_202, %c512_203], %261 {strides = array<i32>} : memref<72x1024xbf16, #tpu.memory_space<vmem>>, vector<8x512xbf16>,
    %c2_204 = arith.constant 2 : index
    %c0_205 = arith.constant 0 : index
    %c0_206 = arith.constant 0 : index
    %263 = vector.load %arg8[%c2_204, %c0_205, %c0_206] : memref<9x8x512xf32, #tpu.memory_space<vmem>>, vector<1x8x512xf32>
    %264 = vector.shape_cast %263 : vector<1x8x512xf32> to vector<8x512xf32>
    %c0_207 = arith.constant 0 : index
    %c185 = arith.constant 185 : index
    %265 = vector.load %arg10[%c0_207, %c185] : memref<8x1408xbf16, #tpu.memory_space<vmem>>, vector<8x512xbf16>
    %266 = arith.extf %265 : vector<8x512xbf16> to vector<8x512xf32>
    %267 = arith.mulf %266, %264 : vector<8x512xf32>
    %268 = arith.truncf %267 : vector<8x512xf32> to vector<8x512xbf16>
    %c16_208 = arith.constant 16 : index
    %c0_209 = arith.constant 0 : index
    %269 = vector.load %arg11[%c16_208, %c0_209] : memref<72x1024xbf16, #tpu.memory_space<vmem>>, vector<8x512xbf16>
    tpu.vector_store %arg11[%c16_208, %c0_209], %268 {strides = array<i32>} : memref<72x1024xbf16, #tpu.memory_space<vmem>>, vector<8x512xbf16>,
    %c0_210 = arith.constant 0 : index
    %c825 = arith.constant 825 : index
    %270 = vector.load %arg10[%c0_210, %c825] : memref<8x1408xbf16, #tpu.memory_space<vmem>>, vector<8x512xbf16>
    %271 = arith.extf %270 : vector<8x512xbf16> to vector<8x512xf32>
    %272 = arith.mulf %271, %264 : vector<8x512xf32>
    %273 = arith.truncf %272 : vector<8x512xf32> to vector<8x512xbf16>
    %c16_211 = arith.constant 16 : index
    %c512_212 = arith.constant 512 : index
    %274 = vector.load %arg11[%c16_211, %c512_212] : memref<72x1024xbf16, #tpu.memory_space<vmem>>, vector<8x512xbf16>
    tpu.vector_store %arg11[%c16_211, %c512_212], %273 {strides = array<i32>} : memref<72x1024xbf16, #tpu.memory_space<vmem>>, vector<8x512xbf16>,
    %c3_213 = arith.constant 3 : index
    %c0_214 = arith.constant 0 : index
    %c0_215 = arith.constant 0 : index
    %275 = vector.load %arg8[%c3_213, %c0_214, %c0_215] : memref<9x8x512xf32, #tpu.memory_space<vmem>>, vector<1x8x512xf32>
    %276 = vector.shape_cast %275 : vector<1x8x512xf32> to vector<8x512xf32>
    %c0_216 = arith.constant 0 : index
    %c191 = arith.constant 191 : index
    %277 = vector.load %arg10[%c0_216, %c191] : memref<8x1408xbf16, #tpu.memory_space<vmem>>, vector<8x512xbf16>
    %278 = arith.extf %277 : vector<8x512xbf16> to vector<8x512xf32>
    %279 = arith.mulf %278, %276 : vector<8x512xf32>
    %280 = arith.truncf %279 : vector<8x512xf32> to vector<8x512xbf16>
    %c24_217 = arith.constant 24 : index
    %c0_218 = arith.constant 0 : index
    %281 = vector.load %arg11[%c24_217, %c0_218] : memref<72x1024xbf16, #tpu.memory_space<vmem>>, vector<8x512xbf16>
    tpu.vector_store %arg11[%c24_217, %c0_218], %280 {strides = array<i32>} : memref<72x1024xbf16, #tpu.memory_space<vmem>>, vector<8x512xbf16>,
    %c0_219 = arith.constant 0 : index
    %c831 = arith.constant 831 : index
    %282 = vector.load %arg10[%c0_219, %c831] : memref<8x1408xbf16, #tpu.memory_space<vmem>>, vector<8x512xbf16>
    %283 = arith.extf %282 : vector<8x512xbf16> to vector<8x512xf32>
    %284 = arith.mulf %283, %276 : vector<8x512xf32>
    %285 = arith.truncf %284 : vector<8x512xf32> to vector<8x512xbf16>
    %c24_220 = arith.constant 24 : index
    %c512_221 = arith.constant 512 : index
    %286 = vector.load %arg11[%c24_220, %c512_221] : memref<72x1024xbf16, #tpu.memory_space<vmem>>, vector<8x512xbf16>
    tpu.vector_store %arg11[%c24_220, %c512_221], %285 {strides = array<i32>} : memref<72x1024xbf16, #tpu.memory_space<vmem>>, vector<8x512xbf16>,
    %c0_222 = arith.constant 0 : index
    %c192 = arith.constant 192 : index
    %287 = vector.load %arg10[%c0_222, %c192] : memref<8x1408xbf16, #tpu.memory_space<vmem>>, vector<8x512xbf16>
    %c32_223 = arith.constant 32 : index
    %c0_224 = arith.constant 0 : index
    %288 = vector.load %arg11[%c32_223, %c0_224] : memref<72x1024xbf16, #tpu.memory_space<vmem>>, vector<8x512xbf16>
    tpu.vector_store %arg11[%c32_223, %c0_224], %287 {strides = array<i32>} : memref<72x1024xbf16, #tpu.memory_space<vmem>>, vector<8x512xbf16>,
    %c0_225 = arith.constant 0 : index
    %c832 = arith.constant 832 : index
    %289 = vector.load %arg10[%c0_225, %c832] : memref<8x1408xbf16, #tpu.memory_space<vmem>>, vector<8x512xbf16>
    %c32_226 = arith.constant 32 : index
    %c512_227 = arith.constant 512 : index
    %290 = vector.load %arg11[%c32_226, %c512_227] : memref<72x1024xbf16, #tpu.memory_space<vmem>>, vector<8x512xbf16>
    tpu.vector_store %arg11[%c32_226, %c512_227], %289 {strides = array<i32>} : memref<72x1024xbf16, #tpu.memory_space<vmem>>, vector<8x512xbf16>,
    %c5_228 = arith.constant 5 : index
    %c0_229 = arith.constant 0 : index
    %c0_230 = arith.constant 0 : index
    %291 = vector.load %arg8[%c5_228, %c0_229, %c0_230] : memref<9x8x512xf32, #tpu.memory_space<vmem>>, vector<1x8x512xf32>
    %292 = vector.shape_cast %291 : vector<1x8x512xf32> to vector<8x512xf32>
    %c0_231 = arith.constant 0 : index
    %c193 = arith.constant 193 : index
    %293 = vector.load %arg10[%c0_231, %c193] : memref<8x1408xbf16, #tpu.memory_space<vmem>>, vector<8x512xbf16>
    %294 = arith.extf %293 : vector<8x512xbf16> to vector<8x512xf32>
    %295 = arith.mulf %294, %292 : vector<8x512xf32>
    %296 = arith.truncf %295 : vector<8x512xf32> to vector<8x512xbf16>
    %c40_232 = arith.constant 40 : index
    %c0_233 = arith.constant 0 : index
    %297 = vector.load %arg11[%c40_232, %c0_233] : memref<72x1024xbf16, #tpu.memory_space<vmem>>, vector<8x512xbf16>
    tpu.vector_store %arg11[%c40_232, %c0_233], %296 {strides = array<i32>} : memref<72x1024xbf16, #tpu.memory_space<vmem>>, vector<8x512xbf16>,
    %c0_234 = arith.constant 0 : index
    %c833 = arith.constant 833 : index
    %298 = vector.load %arg10[%c0_234, %c833] : memref<8x1408xbf16, #tpu.memory_space<vmem>>, vector<8x512xbf16>
    %299 = arith.extf %298 : vector<8x512xbf16> to vector<8x512xf32>
    %300 = arith.mulf %299, %292 : vector<8x512xf32>
    %301 = arith.truncf %300 : vector<8x512xf32> to vector<8x512xbf16>
    %c40_235 = arith.constant 40 : index
    %c512_236 = arith.constant 512 : index
    %302 = vector.load %arg11[%c40_235, %c512_236] : memref<72x1024xbf16, #tpu.memory_space<vmem>>, vector<8x512xbf16>
    tpu.vector_store %arg11[%c40_235, %c512_236], %301 {strides = array<i32>} : memref<72x1024xbf16, #tpu.memory_space<vmem>>, vector<8x512xbf16>,
    %c6_237 = arith.constant 6 : index
    %c0_238 = arith.constant 0 : index
    %c0_239 = arith.constant 0 : index
    %303 = vector.load %arg8[%c6_237, %c0_238, %c0_239] : memref<9x8x512xf32, #tpu.memory_space<vmem>>, vector<1x8x512xf32>
    %304 = vector.shape_cast %303 : vector<1x8x512xf32> to vector<8x512xf32>
    %c0_240 = arith.constant 0 : index
    %c199 = arith.constant 199 : index
    %305 = vector.load %arg10[%c0_240, %c199] : memref<8x1408xbf16, #tpu.memory_space<vmem>>, vector<8x512xbf16>
    %306 = arith.extf %305 : vector<8x512xbf16> to vector<8x512xf32>
    %307 = arith.mulf %306, %304 : vector<8x512xf32>
    %308 = arith.truncf %307 : vector<8x512xf32> to vector<8x512xbf16>
    %c48_241 = arith.constant 48 : index
    %c0_242 = arith.constant 0 : index
    %309 = vector.load %arg11[%c48_241, %c0_242] : memref<72x1024xbf16, #tpu.memory_space<vmem>>, vector<8x512xbf16>
    tpu.vector_store %arg11[%c48_241, %c0_242], %308 {strides = array<i32>} : memref<72x1024xbf16, #tpu.memory_space<vmem>>, vector<8x512xbf16>,
    %c0_243 = arith.constant 0 : index
    %c839 = arith.constant 839 : index
    %310 = vector.load %arg10[%c0_243, %c839] : memref<8x1408xbf16, #tpu.memory_space<vmem>>, vector<8x512xbf16>
    %311 = arith.extf %310 : vector<8x512xbf16> to vector<8x512xf32>
    %312 = arith.mulf %311, %304 : vector<8x512xf32>
    %313 = arith.truncf %312 : vector<8x512xf32> to vector<8x512xbf16>
    %c48_244 = arith.constant 48 : index
    %c512_245 = arith.constant 512 : index
    %314 = vector.load %arg11[%c48_244, %c512_245] : memref<72x1024xbf16, #tpu.memory_space<vmem>>, vector<8x512xbf16>
    tpu.vector_store %arg11[%c48_244, %c512_245], %313 {strides = array<i32>} : memref<72x1024xbf16, #tpu.memory_space<vmem>>, vector<8x512xbf16>,
    %c7_246 = arith.constant 7 : index
    %c0_247 = arith.constant 0 : index
    %c0_248 = arith.constant 0 : index
    %315 = vector.load %arg8[%c7_246, %c0_247, %c0_248] : memref<9x8x512xf32, #tpu.memory_space<vmem>>, vector<1x8x512xf32>
    %316 = vector.shape_cast %315 : vector<1x8x512xf32> to vector<8x512xf32>
    %c0_249 = arith.constant 0 : index
    %c200 = arith.constant 200 : index
    %317 = vector.load %arg10[%c0_249, %c200] : memref<8x1408xbf16, #tpu.memory_space<vmem>>, vector<8x512xbf16>
    %318 = arith.extf %317 : vector<8x512xbf16> to vector<8x512xf32>
    %319 = arith.mulf %318, %316 : vector<8x512xf32>
    %320 = arith.truncf %319 : vector<8x512xf32> to vector<8x512xbf16>
    %c56_250 = arith.constant 56 : index
    %c0_251 = arith.constant 0 : index
    %321 = vector.load %arg11[%c56_250, %c0_251] : memref<72x1024xbf16, #tpu.memory_space<vmem>>, vector<8x512xbf16>
    tpu.vector_store %arg11[%c56_250, %c0_251], %320 {strides = array<i32>} : memref<72x1024xbf16, #tpu.memory_space<vmem>>, vector<8x512xbf16>,
    %c0_252 = arith.constant 0 : index
    %c840 = arith.constant 840 : index
    %322 = vector.load %arg10[%c0_252, %c840] : memref<8x1408xbf16, #tpu.memory_space<vmem>>, vector<8x512xbf16>
    %323 = arith.extf %322 : vector<8x512xbf16> to vector<8x512xf32>
    %324 = arith.mulf %323, %316 : vector<8x512xf32>
    %325 = arith.truncf %324 : vector<8x512xf32> to vector<8x512xbf16>
    %c56_253 = arith.constant 56 : index
    %c512_254 = arith.constant 512 : index
    %326 = vector.load %arg11[%c56_253, %c512_254] : memref<72x1024xbf16, #tpu.memory_space<vmem>>, vector<8x512xbf16>
    tpu.vector_store %arg11[%c56_253, %c512_254], %325 {strides = array<i32>} : memref<72x1024xbf16, #tpu.memory_space<vmem>>, vector<8x512xbf16>,
    %c8_255 = arith.constant 8 : index
    %c0_256 = arith.constant 0 : index
    %c0_257 = arith.constant 0 : index
    %327 = vector.load %arg8[%c8_255, %c0_256, %c0_257] : memref<9x8x512xf32, #tpu.memory_space<vmem>>, vector<1x8x512xf32>
    %328 = vector.shape_cast %327 : vector<1x8x512xf32> to vector<8x512xf32>
    %c0_258 = arith.constant 0 : index
    %c201 = arith.constant 201 : index
    %329 = vector.load %arg10[%c0_258, %c201] : memref<8x1408xbf16, #tpu.memory_space<vmem>>, vector<8x512xbf16>
    %330 = arith.extf %329 : vector<8x512xbf16> to vector<8x512xf32>
    %331 = arith.mulf %330, %328 : vector<8x512xf32>
    %332 = arith.truncf %331 : vector<8x512xf32> to vector<8x512xbf16>
    %c64_259 = arith.constant 64 : index
    %c0_260 = arith.constant 0 : index
    %333 = vector.load %arg11[%c64_259, %c0_260] : memref<72x1024xbf16, #tpu.memory_space<vmem>>, vector<8x512xbf16>
    tpu.vector_store %arg11[%c64_259, %c0_260], %332 {strides = array<i32>} : memref<72x1024xbf16, #tpu.memory_space<vmem>>, vector<8x512xbf16>,
    %c0_261 = arith.constant 0 : index
    %c841 = arith.constant 841 : index
    %334 = vector.load %arg10[%c0_261, %c841] : memref<8x1408xbf16, #tpu.memory_space<vmem>>, vector<8x512xbf16>
    %335 = arith.extf %334 : vector<8x512xbf16> to vector<8x512xf32>
    %336 = arith.mulf %335, %328 : vector<8x512xf32>
    %337 = arith.truncf %336 : vector<8x512xf32> to vector<8x512xbf16>
    %c64_262 = arith.constant 64 : index
    %c512_263 = arith.constant 512 : index
    %338 = vector.load %arg11[%c64_262, %c512_263] : memref<72x1024xbf16, #tpu.memory_space<vmem>>, vector<8x512xbf16>
    tpu.vector_store %arg11[%c64_262, %c512_263], %337 {strides = array<i32>} : memref<72x1024xbf16, #tpu.memory_space<vmem>>, vector<8x512xbf16>,
    %c2_264 = arith.constant 2 : index
    %c0_265 = arith.constant 0 : index
    %c0_266 = arith.constant 0 : index
    %339 = vector.load %arg4[%c2_264, %c0_265, %c0_266] : memref<3x8x72xbf16, #tpu.memory_space<vmem>>, vector<1x8x72xbf16>
    %340 = vector.shape_cast %339 : vector<1x8x72xbf16> to vector<8x72xbf16>
    %c0_267 = arith.constant 0 : index
    %c0_268 = arith.constant 0 : index
    %341 = vector.load %arg11[%c0_267, %c0_268] : memref<72x1024xbf16, #tpu.memory_space<vmem>>, vector<72x1024xbf16>
    %cst_269 = arith.constant dense<0.000000e+00> : vector<8x1024xf32>
    %342 = tpu.matmul %340, %341, %cst_269 {dimension_numbers = #tpu.dot_dimension_numbers<[1], [0], [0], [1], [0, 0, 1, 1], [], []>} : vector<8x72xbf16>, vector<72x1024xbf16>, vector<8x1024xf32> -> vector<8x1024xf32>
    %c0_270 = arith.constant 0 : index
    %c0_271 = arith.constant 0 : index
    %343 = vector.load %arg12[%c0_270, %c0_271] : memref<8x1024xf32, #tpu.memory_space<vmem>>, vector<8x1024xf32>
    %344 = arith.addf %343, %342 : vector<8x1024xf32>
    %c0_272 = arith.constant 0 : index
    %c0_273 = arith.constant 0 : index
    %345 = vector.load %arg12[%c0_272, %c0_273] : memref<8x1024xf32, #tpu.memory_space<vmem>>, vector<8x1024xf32>
    tpu.vector_store %arg12[%c0_272, %c0_273], %344 {strides = array<i32>} : memref<8x1024xf32, #tpu.memory_space<vmem>>, vector<8x1024xf32>,
    %c0_274 = arith.constant 0 : index
    %c0_275 = arith.constant 0 : index
    %346 = vector.load %arg12[%c0_274, %c0_275] : memref<8x1024xf32, #tpu.memory_space<vmem>>, vector<8x1024xf32>
    %347 = vector.broadcast %2 : vector<8x1xf32> to vector<8x1024xf32>
    %348 = arith.addf %346, %347 : vector<8x1024xf32>
    %cst_276 = arith.constant 0.000000e+00 : f32
    %349 = vector.broadcast %cst_276 : f32 to vector<8x1024xf32>
    %350 = arith.maximumf %348, %349 : vector<8x1024xf32>
    %351 = arith.truncf %350 : vector<8x1024xf32> to vector<8x1024xbf16>
    %352 = vector.extract_strided_slice %351 {offsets = [0, 0], sizes = [8, 512], strides = [1, 1]} : vector<8x1024xbf16> to vector<8x512xbf16>
    %cst_277 = arith.constant dense<0.000000e+00> : vector<32x512xf32>
    %353 = tpu.matmul %3, %352, %cst_277 {dimension_numbers = #tpu.dot_dimension_numbers<[1], [0], [0], [1], [0, 0, 1, 1], [], []>} : vector<32x8xbf16>, vector<8x512xbf16>, vector<32x512xf32> -> vector<32x512xf32>
    %354 = vector.broadcast %4 : vector<32x1xf32> to vector<32x512xf32>
    %355 = arith.addf %353, %354 : vector<32x512xf32>
    %c0_278 = arith.constant 0 : index
    %c0_279 = arith.constant 0 : index
    %c0_280 = arith.constant 0 : index
    %356 = vector.load %arg1[%c0_278, %c0_279, %c0_280] : memref<2x32x512xf32, #tpu.memory_space<vmem>>, vector<1x32x512xf32>
    %357 = vector.shape_cast %356 : vector<1x32x512xf32> to vector<32x512xf32>
    %358 = arith.addf %355, %357 : vector<32x512xf32>
    %cst_281 = arith.constant 0.000000e+00 : f32
    %359 = vector.broadcast %cst_281 : f32 to vector<32x512xf32>
    %360 = arith.maximumf %358, %359 : vector<32x512xf32>
    %c0_282 = arith.constant 0 : index
    %c0_283 = arith.constant 0 : index
    %c0_284 = arith.constant 0 : index
    %361 = vector.load %arg9[%c0_282, %c0_283, %c0_284] : memref<2x32x512xf32, #tpu.memory_space<vmem>>, vector<1x32x512xf32>
    %362 = vector.shape_cast %361 : vector<1x32x512xf32> to vector<32x512xf32>
    %363 = vector.shape_cast %360 : vector<32x512xf32> to vector<1x32x512xf32>
    tpu.vector_store %arg9[%c0_282, %c0_283, %c0_284], %363 {strides = array<i32>} : memref<2x32x512xf32, #tpu.memory_space<vmem>>, vector<1x32x512xf32>,
    %364 = vector.extract_strided_slice %351 {offsets = [0, 512], sizes = [8, 512], strides = [1, 1]} : vector<8x1024xbf16> to vector<8x512xbf16>
    %cst_285 = arith.constant dense<0.000000e+00> : vector<32x512xf32>
    %365 = tpu.matmul %3, %364, %cst_285 {dimension_numbers = #tpu.dot_dimension_numbers<[1], [0], [0], [1], [0, 0, 1, 1], [], []>} : vector<32x8xbf16>, vector<8x512xbf16>, vector<32x512xf32> -> vector<32x512xf32>
    %366 = vector.broadcast %4 : vector<32x1xf32> to vector<32x512xf32>
    %367 = arith.addf %365, %366 : vector<32x512xf32>
    %c1_286 = arith.constant 1 : index
    %c0_287 = arith.constant 0 : index
    %c0_288 = arith.constant 0 : index
    %368 = vector.load %arg1[%c1_286, %c0_287, %c0_288] : memref<2x32x512xf32, #tpu.memory_space<vmem>>, vector<1x32x512xf32>
    %369 = vector.shape_cast %368 : vector<1x32x512xf32> to vector<32x512xf32>
    %370 = arith.addf %367, %369 : vector<32x512xf32>
    %cst_289 = arith.constant 0.000000e+00 : f32
    %371 = vector.broadcast %cst_289 : f32 to vector<32x512xf32>
    %372 = arith.maximumf %370, %371 : vector<32x512xf32>
    %c1_290 = arith.constant 1 : index
    %c0_291 = arith.constant 0 : index
    %c0_292 = arith.constant 0 : index
    %373 = vector.load %arg9[%c1_290, %c0_291, %c0_292] : memref<2x32x512xf32, #tpu.memory_space<vmem>>, vector<1x32x512xf32>
    %374 = vector.shape_cast %373 : vector<1x32x512xf32> to vector<32x512xf32>
    %375 = vector.shape_cast %372 : vector<32x512xf32> to vector<1x32x512xf32>
    tpu.vector_store %arg9[%c1_290, %c0_291, %c0_292], %375 {strides = array<i32>} : memref<2x32x512xf32, #tpu.memory_space<vmem>>, vector<1x32x512xf32>,
    return
  }
  func.func @transform_0(%arg0: i32) -> (i32, i32, i32) {
    %c0_i32 = arith.constant 0 : i32
    %c0_i32_0 = arith.constant 0 : i32
    %c0_i32_1 = arith.constant 0 : i32
    return %arg0, %c0_i32, %c0_i32_0 : i32, i32, i32
  }
  func.func @transform_1(%arg0: i32) -> (i32, i32) {
    %c0_i32 = arith.constant 0 : i32
    %c0_i32_0 = arith.constant 0 : i32
    %c0_i32_1 = arith.constant 0 : i32
    return %c0_i32, %c0_i32_0 : i32, i32
  }
  func.func @transform_2(%arg0: i32) -> (i32, i32) {
    %c0_i32 = arith.constant 0 : i32
    %c0_i32_0 = arith.constant 0 : i32
    %c0_i32_1 = arith.constant 0 : i32
    return %c0_i32, %c0_i32_0 : i32, i32
  }
  func.func @transform_3(%arg0: i32) -> (i32, i32, i32) {
    %c0_i32 = arith.constant 0 : i32
    %c0_i32_0 = arith.constant 0 : i32
    %c0_i32_1 = arith.constant 0 : i32
    %c0_i32_2 = arith.constant 0 : i32
    return %c0_i32, %c0_i32_0, %c0_i32_1 : i32, i32, i32
  }
  func.func @transform_4(%arg0: i32) -> (i32, i32) {
    %c0_i32 = arith.constant 0 : i32
    %c0_i32_0 = arith.constant 0 : i32
    %c0_i32_1 = arith.constant 0 : i32
    return %c0_i32, %c0_i32_0 : i32, i32
  }
  func.func @transform_5(%arg0: i32) -> (i32, i32) {
    %c0_i32 = arith.constant 0 : i32
    %c0_i32_0 = arith.constant 0 : i32
    %c0_i32_1 = arith.constant 0 : i32
    return %c0_i32, %c0_i32_0 : i32, i32
  }
  func.func @transform_6(%arg0: i32) -> (i32, i32) {
    %c0_i32 = arith.constant 0 : i32
    %c0_i32_0 = arith.constant 0 : i32
    %c0_i32_1 = arith.constant 0 : i32
    return %c0_i32, %c0_i32_0 : i32, i32
  }
  func.func @transform_7(%arg0: i32) -> (i32, i32, i32) {
    %c0_i32 = arith.constant 0 : i32
    %c0_i32_0 = arith.constant 0 : i32
    %c0_i32_1 = arith.constant 0 : i32
    %c0_i32_2 = arith.constant 0 : i32
    return %c0_i32, %c0_i32_0, %c0_i32_1 : i32, i32, i32
  }
  func.func @transform_8(%arg0: i32) -> (i32, i32, i32) {
    %c0_i32 = arith.constant 0 : i32
    %c0_i32_0 = arith.constant 0 : i32
    %c0_i32_1 = arith.constant 0 : i32
    return %arg0, %c0_i32, %c0_i32_0 : i32, i32, i32
  }
}

</mosaic_0001>

<llo_original>
// kernel: resnet_block_forward.1
$region0: #{resnet_block_forward.1}
  #allocation0 [shape = 'u32[]', space=smem, size = 0x4, offset = 0x4, fixed_abs, tag = 'smem constant byte address 0x4 - core index']
  #allocation1 [shape = 'u32[144,128]{1,0:T(1,128)}', space=vmem, size = 0x12000, scoped, tag = 'internal scratch']
  #allocation2 [shape = 'bf16[8,1408]{1,0:T(8,128)(2,1)}', space=vmem, size = 0x5800, scoped, tag = 'scratch operand']
  #allocation3 [shape = 'bf16[72,1024]{1,0:T(8,128)(2,1)}', space=vmem, size = 0x24000, scoped, tag = 'scratch operand']
  #allocation4 [shape = 'f32[8,1024]{1,0:T(8,128)}', space=vmem, size = 0x8000, scoped, tag = 'scratch operand']
  %s0 = inlined_call_operand.vmem [shape: f32[2,32,512], index: 0, kind: input, shape index: {}]
  %s1 = inlined_call_operand.vmem [shape: bf16[8,32], index: 1, kind: input, shape index: {}]
  %s2 = inlined_call_operand.vmem [shape: f32[8,1], index: 2, kind: input, shape index: {}]
  %s3 = inlined_call_operand.vmem [shape: bf16[3,8,72], index: 3, kind: input, shape index: {}]
  %s4 = inlined_call_operand.vmem [shape: f32[8,1], index: 4, kind: input, shape index: {}]
  %s5 = inlined_call_operand.vmem [shape: bf16[32,8], index: 5, kind: input, shape index: {}]
  %s6 = inlined_call_operand.vmem [shape: f32[32,1], index: 6, kind: input, shape index: {}]
  %s7 = inlined_call_operand.vmem [shape: f32[9,8,512], index: 7, kind: input, shape index: {}]
  %s8 = inlined_call_operand.vmem [shape: f32[2,32,512], index: 8, kind: output, shape index: {}]
  %s9 = sld [smem:[#allocation0]]
  $region42: #{resnet_block_forward.1} parent=0
    _
  %s11 = ssub.s32 1, %s9
  %s12 = scalar_select 0, %s11, %s9
  // Predicated region
  $region2: #{resnet_block_forward.1} parent=0 // pred_check
    _
  $region3: #{resnet_block_forward.1} parent=0 // pred_check_branch
    %14 = sbr.rel (0) target = $region5
  $region4: #{resnet_block_forward.1} parent=0 // pred_region
    _
  $region5: #{resnet_block_forward.1} parent=0 // pred_fallthru
    _
  // Predicated region
  $region6: #{resnet_block_forward.1} parent=0 // pred_check
    _
  $region7: #{resnet_block_forward.1} parent=0 // pred_check_branch
    %16 = sbr.rel (0) target = $region9
  $region8: #{resnet_block_forward.1} parent=0 // pred_region
    _
  $region9: #{resnet_block_forward.1} parent=0 // pred_fallthru
    _
  // Predicated region
  $region10: #{resnet_block_forward.1} parent=0 // pred_check
    _
  $region11: #{resnet_block_forward.1} parent=0 // pred_check_branch
    %18 = sbr.rel (0) target = $region13
  $region12: #{resnet_block_forward.1} parent=0 // pred_region
    _
  $region13: #{resnet_block_forward.1} parent=0 // pred_fallthru
    _
  // Predicated region
  $region14: #{resnet_block_forward.1} parent=0 // pred_check
    _
  $region15: #{resnet_block_forward.1} parent=0 // pred_check_branch
    %20 = sbr.rel (0) target = $region17
  $region16: #{resnet_block_forward.1} parent=0 // pred_region
    _
  $region17: #{resnet_block_forward.1} parent=0 // pred_fallthru
    _
  // Predicated region
  $region18: #{resnet_block_forward.1} parent=0 // pred_check
    _
  $region19: #{resnet_block_forward.1} parent=0 // pred_check_branch
    %22 = sbr.rel (0) target = $region21
  $region20: #{resnet_block_forward.1} parent=0 // pred_region
    _
  $region21: #{resnet_block_forward.1} parent=0 // pred_fallthru
    _
  // Predicated region
  $region22: #{resnet_block_forward.1} parent=0 // pred_check
    _
  $region23: #{resnet_block_forward.1} parent=0 // pred_check_branch
    %24 = sbr.rel (0) target = $region25
  $region24: #{resnet_block_forward.1} parent=0 // pred_region
    _
  $region25: #{resnet_block_forward.1} parent=0 // pred_fallthru
    _
  // Predicated region
  $region26: #{resnet_block_forward.1} parent=0 // pred_check
    _
  $region27: #{resnet_block_forward.1} parent=0 // pred_check_branch
    %26 = sbr.rel (0) target = $region29
  $region28: #{resnet_block_forward.1} parent=0 // pred_region
    _
  $region29: #{resnet_block_forward.1} parent=0 // pred_fallthru
    _
  // Predicated region
  $region30: #{resnet_block_forward.1} parent=0 // pred_check
    _
  $region31: #{resnet_block_forward.1} parent=0 // pred_check_branch
    %28 = sbr.rel (0) target = $region33
  $region32: #{resnet_block_forward.1} parent=0 // pred_region
    _
  $region33: #{resnet_block_forward.1} parent=0 // pred_fallthru
    _
  %v30 = vld [vmem:[%s1] sm:$0xf]
  %v31 = vld [vmem:[%s2] sm:$0xff]
  %v32 = vld [vmem:[%s4] sm:$0xff]
  %v33 = vld [vmem:[%s5] sm:$0xf]
  %v34 = vld [vmem:[%s5 + $0x4] sm:$0xf]
  %v35 = vld [vmem:[%s5 + $0x8] sm:$0xf]
  %v36 = vld [vmem:[%s5 + $0xc] sm:$0xf]
  %v37 = vld [vmem:[%s6] sm:$0xff]
  %v38 = vld [vmem:[%s6 + $0x8] sm:$0xff]
  %v39 = vld [vmem:[%s6 + $0x10] sm:$0xff]
  %v40 = vld [vmem:[%s6 + $0x18] sm:$0xff]
  %41 = vst [vmem:[#allocation2] sm:$0xff] 0
  %42 = vst [vmem:[#allocation2 + $0x8] sm:$0xff] 0
  %43 = vst [vmem:[#allocation2 + $0x10] sm:$0xff] 0
  %44 = vst [vmem:[#allocation2 + $0x18] sm:$0xff] 0
  %45 = vst [vmem:[#allocation2 + $0x20] sm:$0xff] 0
  %46 = vst [vmem:[#allocation2 + $0x28] sm:$0xf] 0
  %v47 = vld [vmem:[%s0] sm:$0xff]
  %v48 = vld [vmem:[%s0 + $0x8] sm:$0xff]
  %v49 = vld [vmem:[%s0 + $0x10] sm:$0xff]
  %v50 = vld [vmem:[%s0 + $0x18] sm:$0xff]
  %v51 = vld [vmem:[%s0 + $0x20] sm:$0xff]
  %v52 = vld [vmem:[%s0 + $0x28] sm:$0xff]
  %v53 = vld [vmem:[%s0 + $0x30] sm:$0xff]
  %v54 = vld [vmem:[%s0 + $0x38] sm:$0xff]
  %v55 = vld [vmem:[%s0 + $0x40] sm:$0xff]
  %v56 = vld [vmem:[%s0 + $0x48] sm:$0xff]
  %v57 = vld [vmem:[%s0 + $0x50] sm:$0xff]
  %v58 = vld [vmem:[%s0 + $0x58] sm:$0xff]
  %v59 = vld [vmem:[%s0 + $0x60] sm:$0xff]
  %v60 = vld [vmem:[%s0 + $0x68] sm:$0xff]
  %v61 = vld [vmem:[%s0 + $0x70] sm:$0xff]
  %v62 = vld [vmem:[%s0 + $0x78] sm:$0xff]
  %v63 = vpack.c.bf16 %v51, %v47
  %v64 = vpack.c.bf16 %v52, %v48
  %v65 = vpack.c.bf16 %v53, %v49
  %v66 = vpack.c.bf16 %v54, %v50
  %v67 = vpack.c.bf16 %v59, %v55
  %v68 = vpack.c.bf16 %v60, %v56
  %v69 = vpack.c.bf16 %v61, %v57
  %v70 = vpack.c.bf16 %v62, %v58
  %72 = vset.pattern.permute.xlu0 0
  %73 = vperm.xlu0 %72, %v31
  %v74 = vpop.permute.xlu0 %73
  %vm76 = vcmask 261120
  %v78 = vsel %vm76, %v30, 0
  %80 = vmatprep.subr.bf16.mxu0 0
  %81 = vmatpush1.bf16.msra.mxu0 0
  %82 = vmatprep.subr.bf16.mxu0 0
  %83 = vmatpush1.bf16.msra.mxu0 0
  %84 = vmatprep.subr.bf16.mxu0 0
  %85 = vmatpush1.bf16.msra.mxu0 0
  %86 = vmatprep.subr.bf16.mxu0 0
  %87 = vmatpush1.bf16.msra.mxu0 0
  %88 = vmatprep.subr.bf16.mxu0 0
  %89 = vmatpush1.bf16.msra.mxu0 0
  %90 = vmatprep.subr.bf16.mxu0 0
  %91 = vmatpush1.bf16.msra.mxu0 0
  %92 = vmatprep.subr.bf16.mxu0 %v68
  %93 = vmatpush1.bf16.msra.mxu0 %v67
  %94 = vmatprep.subr.bf16.mxu0 %v64
  %95 = vmatpush1.bf16.msra.mxu0 %v63
  %96 = vmatprep.subr.bf16.mxu0 0
  %97 = vmatpush2.bf16.msra.mxu0 0
  %98 = vmatprep.subr.bf16.mxu0 0
  %99 = vmatpush2.bf16.msra.mxu0 0
  %100 = vmatprep.subr.bf16.mxu0 0
  %101 = vmatpush2.bf16.msra.mxu0 0
  %102 = vmatprep.subr.bf16.mxu0 0
  %103 = vmatpush2.bf16.msra.mxu0 0
  %104 = vmatprep.subr.bf16.mxu0 0
  %105 = vmatpush2.bf16.msra.mxu0 0
  %106 = vmatprep.subr.bf16.mxu0 0
  %107 = vmatpush2.bf16.msra.mxu0 0
  %108 = vmatprep.subr.bf16.mxu0 0
  %109 = vmatpush2.bf16.msra.mxu0 0
  %110 = vmatprep.subr.bf16.mxu0 0
  %111 = vmatpush2.bf16.msra.mxu0 0
  %112 = vmatprep.mubr.bf16.mxu0 0
  %113 = vmatmul.mubr.bf16.gmra.mxu0 %v78
  %v114 = vpop.f32.mrf.mxu0
  %v115 = vadd.f32 %v74, %v114
  %v116 = vpop.f32.mrf.mxu0
  %v117 = vadd.f32 %v74, %v116
  %v118 = vpop.f32.mrf.mxu0
  %v119 = vpop.f32.mrf.mxu0
  %120 = vdwg.mxu0
  %121 = vmatprep.subr.bf16.mxu0 0
  %122 = vmatpush1.bf16.msra.mxu0 0
  %123 = vmatprep.subr.bf16.mxu0 0
  %124 = vmatpush1.bf16.msra.mxu0 0
  %125 = vmatprep.subr.bf16.mxu0 0
  %126 = vmatpush1.bf16.msra.mxu0 0
  %127 = vmatprep.subr.bf16.mxu0 0
  %128 = vmatpush1.bf16.msra.mxu0 0
  %129 = vmatprep.subr.bf16.mxu0 0
  %130 = vmatpush1.bf16.msra.mxu0 0
  %131 = vmatprep.subr.bf16.mxu0 0
  %132 = vmatpush1.bf16.msra.mxu0 0
  %133 = vmatprep.subr.bf16.mxu0 %v70
  %134 = vmatpush1.bf16.msra.mxu0 %v69
  %135 = vmatprep.subr.bf16.mxu0 %v66
  %136 = vmatpush1.bf16.msra.mxu0 %v65
  %137 = vmatprep.subr.bf16.mxu0 0
  %138 = vmatpush2.bf16.msra.mxu0 0
  %139 = vmatprep.subr.bf16.mxu0 0
  %140 = vmatpush2.bf16.msra.mxu0 0
  %141 = vmatprep.subr.bf16.mxu0 0
  %142 = vmatpush2.bf16.msra.mxu0 0
  %143 = vmatprep.subr.bf16.mxu0 0
  %144 = vmatpush2.bf16.msra.mxu0 0
  %145 = vmatprep.subr.bf16.mxu0 0
  %146 = vmatpush2.bf16.msra.mxu0 0
  %147 = vmatprep.subr.bf16.mxu0 0
  %148 = vmatpush2.bf16.msra.mxu0 0
  %149 = vmatprep.subr.bf16.mxu0 0
  %150 = vmatpush2.bf16.msra.mxu0 0
  %151 = vmatprep.subr.bf16.mxu0 0
  %152 = vmatpush2.bf16.msra.mxu0 0
  %153 = vmatprep.mubr.bf16.mxu0 0
  %154 = vmatmul.mubr.bf16.gmra.mxu0 %v78
  %v155 = vpop.f32.mrf.mxu0
  %v156 = vadd.f32 %v74, %v155
  %v157 = vpop.f32.mrf.mxu0
  %v158 = vadd.f32 %v74, %v157
  %v159 = vpop.f32.mrf.mxu0
  %v160 = vpop.f32.mrf.mxu0
  %161 = vdwg.mxu0
  %v162 = vmax.f32 %v115, 0.0
  %v163 = vmax.f32 %v117, 0.0
  %v164 = vmax.f32 %v156, 0.0
  %v165 = vmax.f32 %v158, 0.0
  %v166 = vpack.c.bf16 %v162, %v162
  %v167 = vpack.c.bf16 %v163, %v163
  %v168 = vpack.c.bf16 %v164, %v164
  %v169 = vpack.c.bf16 %v165, %v165
  %v174 = vunpack.c.l.b16 %v166
  %v175 = vunpack.c.l.b16 %v167
  %v176 = vunpack.c.l.b16 %v168
  %v177 = vunpack.c.l.b16 %v169
  %v178 = vpack.c.b16 %v175, %v174
  %v179 = vpack.c.b16 %v177, %v176
  %182 = vst [vmem:[#allocation2 + $0x4] sm:$0xff] %v178
  %183 = vst [vmem:[#allocation2 + $0xc] sm:$0xff] %v179
  %s184 = scalar_lea.vmem %s0, 128
  %v185 = vld [vmem:[%s184] sm:$0xff]
  %v186 = vld [vmem:[%s184 + $0x8] sm:$0xff]
  %v187 = vld [vmem:[%s184 + $0x10] sm:$0xff]
  %v188 = vld [vmem:[%s184 + $0x18] sm:$0xff]
  %v189 = vld [vmem:[%s184 + $0x20] sm:$0xff]
  %v190 = vld [vmem:[%s184 + $0x28] sm:$0xff]
  %v191 = vld [vmem:[%s184 + $0x30] sm:$0xff]
  %v192 = vld [vmem:[%s184 + $0x38] sm:$0xff]
  %v193 = vld [vmem:[%s184 + $0x40] sm:$0xff]
  %v194 = vld [vmem:[%s184 + $0x48] sm:$0xff]
  %v195 = vld [vmem:[%s184 + $0x50] sm:$0xff]
  %v196 = vld [vmem:[%s184 + $0x58] sm:$0xff]
  %v197 = vld [vmem:[%s184 + $0x60] sm:$0xff]
  %v198 = vld [vmem:[%s184 + $0x68] sm:$0xff]
  %v199 = vld [vmem:[%s184 + $0x70] sm:$0xff]
  %v200 = vld [vmem:[%s184 + $0x78] sm:$0xff]
  %v201 = vpack.c.bf16 %v189, %v185
  %v202 = vpack.c.bf16 %v190, %v186
  %v203 = vpack.c.bf16 %v191, %v187
  %v204 = vpack.c.bf16 %v192, %v188
  %v205 = vpack.c.bf16 %v197, %v193
  %v206 = vpack.c.bf16 %v198, %v194
  %v207 = vpack.c.bf16 %v199, %v195
  %v208 = vpack.c.bf16 %v200, %v196
  %209 = vmatprep.subr.bf16.mxu0 0
  %210 = vmatpush1.bf16.msra.mxu0 0
  %211 = vmatprep.subr.bf16.mxu0 0
  %212 = vmatpush1.bf16.msra.mxu0 0
  %213 = vmatprep.subr.bf16.mxu0 0
  %214 = vmatpush1.bf16.msra.mxu0 0
  %215 = vmatprep.subr.bf16.mxu0 0
  %216 = vmatpush1.bf16.msra.mxu0 0
  %217 = vmatprep.subr.bf16.mxu0 0
  %218 = vmatpush1.bf16.msra.mxu0 0
  %219 = vmatprep.subr.bf16.mxu0 0
  %220 = vmatpush1.bf16.msra.mxu0 0
  %221 = vmatprep.subr.bf16.mxu0 %v206
  %222 = vmatpush1.bf16.msra.mxu0 %v205
  %223 = vmatprep.subr.bf16.mxu0 %v202
  %224 = vmatpush1.bf16.msra.mxu0 %v201
  %225 = vmatprep.subr.bf16.mxu0 0
  %226 = vmatpush2.bf16.msra.mxu0 0
  %227 = vmatprep.subr.bf16.mxu0 0
  %228 = vmatpush2.bf16.msra.mxu0 0
  %229 = vmatprep.subr.bf16.mxu0 0
  %230 = vmatpush2.bf16.msra.mxu0 0
  %231 = vmatprep.subr.bf16.mxu0 0
  %232 = vmatpush2.bf16.msra.mxu0 0
  %233 = vmatprep.subr.bf16.mxu0 0
  %234 = vmatpush2.bf16.msra.mxu0 0
  %235 = vmatprep.subr.bf16.mxu0 0
  %236 = vmatpush2.bf16.msra.mxu0 0
  %237 = vmatprep.subr.bf16.mxu0 0
  %238 = vmatpush2.bf16.msra.mxu0 0
  %239 = vmatprep.subr.bf16.mxu0 0
  %240 = vmatpush2.bf16.msra.mxu0 0
  %241 = vmatprep.mubr.bf16.mxu0 0
  %242 = vmatmul.mubr.bf16.gmra.mxu0 %v78
  %v243 = vpop.f32.mrf.mxu0
  %v244 = vadd.f32 %v74, %v243
  %v245 = vpop.f32.mrf.mxu0
  %v246 = vadd.f32 %v74, %v245
  %v247 = vpop.f32.mrf.mxu0
  %v248 = vpop.f32.mrf.mxu0
  %249 = vdwg.mxu0
  %250 = vmatprep.subr.bf16.mxu0 0
  %251 = vmatpush1.bf16.msra.mxu0 0
  %252 = vmatprep.subr.bf16.mxu0 0
  %253 = vmatpush1.bf16.msra.mxu0 0
  %254 = vmatprep.subr.bf16.mxu0 0
  %255 = vmatpush1.bf16.msra.mxu0 0
  %256 = vmatprep.subr.bf16.mxu0 0
  %257 = vmatpush1.bf16.msra.mxu0 0
  %258 = vmatprep.subr.bf16.mxu0 0
  %259 = vmatpush1.bf16.msra.mxu0 0
  %260 = vmatprep.subr.bf16.mxu0 0
  %261 = vmatpush1.bf16.msra.mxu0 0
  %262 = vmatprep.subr.bf16.mxu0 %v208
  %263 = vmatpush1.bf16.msra.mxu0 %v207
  %264 = vmatprep.subr.bf16.mxu0 %v204
  %265 = vmatpush1.bf16.msra.mxu0 %v203
  %266 = vmatprep.subr.bf16.mxu0 0
  %267 = vmatpush2.bf16.msra.mxu0 0
  %268 = vmatprep.subr.bf16.mxu0 0
  %269 = vmatpush2.bf16.msra.mxu0 0
  %270 = vmatprep.subr.bf16.mxu0 0
  %271 = vmatpush2.bf16.msra.mxu0 0
  %272 = vmatprep.subr.bf16.mxu0 0
  %273 = vmatpush2.bf16.msra.mxu0 0
  %274 = vmatprep.subr.bf16.mxu0 0
  %275 = vmatpush2.bf16.msra.mxu0 0
  %276 = vmatprep.subr.bf16.mxu0 0
  %277 = vmatpush2.bf16.msra.mxu0 0
  %278 = vmatprep.subr.bf16.mxu0 0
  %279 = vmatpush2.bf16.msra.mxu0 0
  %280 = vmatprep.subr.bf16.mxu0 0
  %281 = vmatpush2.bf16.msra.mxu0 0
  %282 = vmatprep.mubr.bf16.mxu0 0
  %283 = vmatmul.mubr.bf16.gmra.mxu0 %v78
  %v284 = vpop.f32.mrf.mxu0
  %v285 = vadd.f32 %v74, %v284
  %v286 = vpop.f32.mrf.mxu0
  %v287 = vadd.f32 %v74, %v286
  %v288 = vpop.f32.mrf.mxu0
  %v289 = vpop.f32.mrf.mxu0
  %290 = vdwg.mxu0
  %v291 = vmax.f32 %v244, 0.0
  %v292 = vmax.f32 %v246, 0.0
  %v293 = vmax.f32 %v285, 0.0
  %v294 = vmax.f32 %v287, 0.0
  %v295 = vpack.c.bf16 %v291, %v291
  %v296 = vpack.c.bf16 %v292, %v292
  %v297 = vpack.c.bf16 %v293, %v293
  %v298 = vpack.c.bf16 %v294, %v294
  %v303 = vunpack.c.l.b16 %v295
  %v304 = vunpack.c.l.b16 %v296
  %v305 = vunpack.c.l.b16 %v297
  %v306 = vunpack.c.l.b16 %v298
  %v307 = vpack.c.b16 %v304, %v303
  %v308 = vpack.c.b16 %v306, %v305
  %311 = vst [vmem:[#allocation2 + $0x18] sm:$0xff] %v307
  %312 = vst [vmem:[#allocation2 + $0x20] sm:$0xff] %v308
  %v313 = vld [vmem:[%s7] sm:$0xff]
  %v314 = vld [vmem:[%s7 + $0x8] sm:$0xff]
  %v315 = vld [vmem:[%s7 + $0x10] sm:$0xff]
  %v316 = vld [vmem:[%s7 + $0x18] sm:$0xff]
  %v317 = vld [vmem:[#allocation2] sm:$0xff]
  %v318 = vld [vmem:[#allocation2 + $0x8] sm:$0xff]
  %v319 = vld [vmem:[#allocation2 + $0x10] sm:$0xf]
  %v320 = vunpack.c.l.bf16 %v317
  %v321 = vunpack.c.h.bf16 %v317
  %v322 = vunpack.c.l.bf16 %v318
  %v323 = vunpack.c.h.bf16 %v318
  %v324 = vunpack.c.l.bf16 %v319
  %329 = vrot.lane.b32.xlu0 %v313, 55
  %v330 = vpop.permute.xlu0 %329
  %331 = vrot.lane.b32.xlu0 %v314, 55
  %v332 = vpop.permute.xlu0 %331
  %333 = vrot.lane.b32.xlu0 %v315, 55
  %v334 = vpop.permute.xlu0 %333
  %335 = vrot.lane.b32.xlu0 %v316, 55
  %v336 = vpop.permute.xlu0 %335
  %vm337 = vcmask 449536
  %v338 = vsel %vm337, %v330, %v332
  %v339 = vsel %vm337, %v332, %v334
  %v340 = vsel %vm337, %v334, %v336
  %v346 = vmul.f32 %v320, %v330
  %v347 = vmul.f32 %v321, %v338
  %v348 = vmul.f32 %v322, %v339
  %v349 = vmul.f32 %v323, %v340
  %v350 = vmul.f32 %v324, %v336
  %v351 = vpack.c.bf16 %v346, %v346
  %v352 = vpack.c.bf16 %v347, %v347
  %v353 = vpack.c.bf16 %v348, %v348
  %v354 = vpack.c.bf16 %v349, %v349
  %v355 = vpack.c.bf16 %v350, %v350
  %v361 = vunpack.c.l.b16 %v351
  %v362 = vunpack.c.l.b16 %v352
  %v363 = vunpack.c.l.b16 %v353
  %v364 = vunpack.c.l.b16 %v354
  %v365 = vunpack.c.l.b16 %v355
  %v366 = vpack.c.b16 %v362, %v361
  %v367 = vpack.c.b16 %v364, %v363
  %v368 = vpack.c.b16 %v365, %v365
  %369 = vrot.lane.b32.xlu0 %v366, 73
  %v370 = vpop.permute.xlu0 %369
  %371 = vrot.lane.b32.xlu0 %v367, 73
  %v372 = vpop.permute.xlu0 %371
  %373 = vrot.lane.b32.xlu0 %v368, 73
  %v374 = vpop.permute.xlu0 %373
  %v375 = vrot.slane %v370, 4
  %v376 = vrot.slane %v372, 4
  %v377 = vrot.slane %v374, 4
  %vm378 = vcmask 1043456
  %v379 = vsel %vm378, %v375, %v376
  %vm380 = vcmask 596992
  %v381 = vsel %vm380, %v370, %v379
  %v382 = vsel %vm378, %v376, %v377
  %v383 = vsel %vm380, %v372, %v382
  %386 = vst [vmem:[#allocation3] sm:$0xff] %v381
  %387 = vst [vmem:[#allocation3 + $0x8] sm:$0xff] %v383
  %v388 = vld [vmem:[#allocation2 + $0x14] sm:$0xff]
  %v389 = vld [vmem:[#allocation2 + $0x1c] sm:$0xff]
  %v390 = vld [vmem:[#allocation2 + $0x24] sm:$0xf]
  %v391 = vunpack.c.l.bf16 %v388
  %v392 = vunpack.c.h.bf16 %v388
  %v393 = vunpack.c.l.bf16 %v389
  %v394 = vunpack.c.h.bf16 %v389
  %v395 = vunpack.c.l.bf16 %v390
  %v396 = vmul.f32 %v391, %v330
  %v397 = vmul.f32 %v392, %v338
  %v398 = vmul.f32 %v393, %v339
  %v399 = vmul.f32 %v394, %v340
  %v400 = vmul.f32 %v395, %v336
  %v401 = vpack.c.bf16 %v396, %v396
  %v402 = vpack.c.bf16 %v397, %v397
  %v403 = vpack.c.bf16 %v398, %v398
  %v404 = vpack.c.bf16 %v399, %v399
  %v405 = vpack.c.bf16 %v400, %v400
  %v411 = vunpack.c.l.b16 %v401
  %v412 = vunpack.c.l.b16 %v402
  %v413 = vunpack.c.l.b16 %v403
  %v414 = vunpack.c.l.b16 %v404
  %v415 = vunpack.c.l.b16 %v405
  %v416 = vpack.c.b16 %v412, %v411
  %v417 = vpack.c.b16 %v414, %v413
  %v418 = vpack.c.b16 %v415, %v415
  %419 = vrot.lane.b32.xlu0 %v416, 73
  %v420 = vpop.permute.xlu0 %419
  %421 = vrot.lane.b32.xlu0 %v417, 73
  %v422 = vpop.permute.xlu0 %421
  %423 = vrot.lane.b32.xlu0 %v418, 73
  %v424 = vpop.permute.xlu0 %423
  %v425 = vrot.slane %v420, 4
  %v426 = vrot.slane %v422, 4
  %v427 = vrot.slane %v424, 4
  %v428 = vsel %vm378, %v425, %v426
  %v429 = vsel %vm380, %v420, %v428
  %v430 = vsel %vm378, %v426, %v427
  %v431 = vsel %vm380, %v422, %v430
  %434 = vst [vmem:[#allocation3 + $0x10] sm:$0xff] %v429
  %435 = vst [vmem:[#allocation3 + $0x18] sm:$0xff] %v431
  %s436 = scalar_lea.vmem %s7, 32
  %v437 = vld [vmem:[%s436] sm:$0xff]
  %v438 = vld [vmem:[%s436 + $0x8] sm:$0xff]
  %v439 = vld [vmem:[%s436 + $0x10] sm:$0xff]
  %v440 = vld [vmem:[%s436 + $0x18] sm:$0xff]
  %v441 = vld [vmem:[#allocation2] sm:$0xff]
  %v442 = vld [vmem:[#allocation2 + $0x8] sm:$0xff]
  %v443 = vld [vmem:[#allocation2 + $0x10] sm:$0xf]
  %v444 = vunpack.c.l.bf16 %v441
  %v445 = vunpack.c.h.bf16 %v441
  %v446 = vunpack.c.l.bf16 %v442
  %v447 = vunpack.c.h.bf16 %v442
  %v448 = vunpack.c.l.bf16 %v443
  %453 = vrot.lane.b32.xlu0 %v437, 56
  %v454 = vpop.permute.xlu0 %453
  %455 = vrot.lane.b32.xlu0 %v438, 56
  %v456 = vpop.permute.xlu0 %455
  %457 = vrot.lane.b32.xlu0 %v439, 56
  %v458 = vpop.permute.xlu0 %457
  %459 = vrot.lane.b32.xlu0 %v440, 56
  %v460 = vpop.permute.xlu0 %459
  %vm461 = vcmask 457728
  %v462 = vsel %vm461, %v454, %v456
  %v463 = vsel %vm461, %v456, %v458
  %v464 = vsel %vm461, %v458, %v460
  %v470 = vmul.f32 %v444, %v454
  %v471 = vmul.f32 %v445, %v462
  %v472 = vmul.f32 %v446, %v463
  %v473 = vmul.f32 %v447, %v464
  %v474 = vmul.f32 %v448, %v460
  %v475 = vpack.c.bf16 %v470, %v470
  %v476 = vpack.c.bf16 %v471, %v471
  %v477 = vpack.c.bf16 %v472, %v472
  %v478 = vpack.c.bf16 %v473, %v473
  %v479 = vpack.c.bf16 %v474, %v474
  %v485 = vunpack.c.l.b16 %v475
  %v486 = vunpack.c.l.b16 %v476
  %v487 = vunpack.c.l.b16 %v477
  %v488 = vunpack.c.l.b16 %v478
  %v489 = vunpack.c.l.b16 %v479
  %v490 = vpack.c.b16 %v486, %v485
  %v491 = vpack.c.b16 %v488, %v487
  %v492 = vpack.c.b16 %v489, %v489
  %493 = vrot.lane.b32.xlu0 %v490, 72
  %v494 = vpop.permute.xlu0 %493
  %495 = vrot.lane.b32.xlu0 %v491, 72
  %v496 = vpop.permute.xlu0 %495
  %497 = vrot.lane.b32.xlu0 %v492, 72
  %v498 = vpop.permute.xlu0 %497
  %v499 = vrot.slane %v494, 4
  %v500 = vrot.slane %v496, 4
  %v501 = vrot.slane %v498, 4
  %v502 = vsel %vm378, %v499, %v500
  %vm503 = vcmask 588800
  %v504 = vsel %vm503, %v494, %v502
  %v505 = vsel %vm378, %v500, %v501
  %v506 = vsel %vm503, %v496, %v505
  %509 = vst [vmem:[#allocation3 + $0x20] sm:$0xff] %v504
  %510 = vst [vmem:[#allocation3 + $0x28] sm:$0xff] %v506
  %v511 = vld [vmem:[#allocation2 + $0x14] sm:$0xff]
  %v512 = vld [vmem:[#allocation2 + $0x1c] sm:$0xff]
  %v513 = vld [vmem:[#allocation2 + $0x24] sm:$0xf]
  %v514 = vunpack.c.l.bf16 %v511
  %v515 = vunpack.c.h.bf16 %v511
  %v516 = vunpack.c.l.bf16 %v512
  %v517 = vunpack.c.h.bf16 %v512
  %v518 = vunpack.c.l.bf16 %v513
  %v519 = vmul.f32 %v514, %v454
  %v520 = vmul.f32 %v515, %v462
  %v521 = vmul.f32 %v516, %v463
  %v522 = vmul.f32 %v517, %v464
  %v523 = vmul.f32 %v518, %v460
  %v524 = vpack.c.bf16 %v519, %v519
  %v525 = vpack.c.bf16 %v520, %v520
  %v526 = vpack.c.bf16 %v521, %v521
  %v527 = vpack.c.bf16 %v522, %v522
  %v528 = vpack.c.bf16 %v523, %v523
  %v534 = vunpack.c.l.b16 %v524
  %v535 = vunpack.c.l.b16 %v525
  %v536 = vunpack.c.l.b16 %v526
  %v537 = vunpack.c.l.b16 %v527
  %v538 = vunpack.c.l.b16 %v528
  %v539 = vpack.c.b16 %v535, %v534
  %v540 = vpack.c.b16 %v537, %v536
  %v541 = vpack.c.b16 %v538, %v538
  %542 = vrot.lane.b32.xlu0 %v539, 72
  %v543 = vpop.permute.xlu0 %542
  %544 = vrot.lane.b32.xlu0 %v540, 72
  %v545 = vpop.permute.xlu0 %544
  %546 = vrot.lane.b32.xlu0 %v541, 72
  %v547 = vpop.permute.xlu0 %546
  %v548 = vrot.slane %v543, 4
  %v549 = vrot.slane %v545, 4
  %v550 = vrot.slane %v547, 4
  %v551 = vsel %vm378, %v548, %v549
  %v552 = vsel %vm503, %v543, %v551
  %v553 = vsel %vm378, %v549, %v550
  %v554 = vsel %vm503, %v545, %v553
  %557 = vst [vmem:[#allocation3 + $0x30] sm:$0xff] %v552
  %558 = vst [vmem:[#allocation3 + $0x38] sm:$0xff] %v554
  %s559 = scalar_lea.vmem %s7, 64
  %v560 = vld [vmem:[%s559] sm:$0xff]
  %v561 = vld [vmem:[%s559 + $0x8] sm:$0xff]
  %v562 = vld [vmem:[%s559 + $0x10] sm:$0xff]
  %v563 = vld [vmem:[%s559 + $0x18] sm:$0xff]
  %v564 = vld [vmem:[#allocation2] sm:$0xff]
  %v565 = vld [vmem:[#allocation2 + $0x8] sm:$0xff]
  %v566 = vld [vmem:[#allocation2 + $0x10] sm:$0xf]
  %v567 = vunpack.c.l.bf16 %v564
  %v568 = vunpack.c.h.bf16 %v564
  %v569 = vunpack.c.l.bf16 %v565
  %v570 = vunpack.c.h.bf16 %v565
  %v571 = vunpack.c.l.bf16 %v566
  %576 = vrot.lane.b32.xlu0 %v560, 57
  %v577 = vpop.permute.xlu0 %576
  %578 = vrot.lane.b32.xlu0 %v561, 57
  %v579 = vpop.permute.xlu0 %578
  %580 = vrot.lane.b32.xlu0 %v562, 57
  %v581 = vpop.permute.xlu0 %580
  %582 = vrot.lane.b32.xlu0 %v563, 57
  %v583 = vpop.permute.xlu0 %582
  %vm584 = vcmask 465920
  %v585 = vsel %vm584, %v577, %v579
  %v586 = vsel %vm584, %v579, %v581
  %v587 = vsel %vm584, %v581, %v583
  %v593 = vmul.f32 %v567, %v577
  %v594 = vmul.f32 %v568, %v585
  %v595 = vmul.f32 %v569, %v586
  %v596 = vmul.f32 %v570, %v587
  %v597 = vmul.f32 %v571, %v583
  %v598 = vpack.c.bf16 %v593, %v593
  %v599 = vpack.c.bf16 %v594, %v594
  %v600 = vpack.c.bf16 %v595, %v595
  %v601 = vpack.c.bf16 %v596, %v596
  %v602 = vpack.c.bf16 %v597, %v597
  %v608 = vunpack.c.l.b16 %v598
  %v609 = vunpack.c.l.b16 %v599
  %v610 = vunpack.c.l.b16 %v600
  %v611 = vunpack.c.l.b16 %v601
  %v612 = vunpack.c.l.b16 %v602
  %v613 = vpack.c.b16 %v609, %v608
  %v614 = vpack.c.b16 %v611, %v610
  %v615 = vpack.c.b16 %v612, %v612
  %616 = vrot.lane.b32.xlu0 %v613, 71
  %v617 = vpop.permute.xlu0 %616
  %618 = vrot.lane.b32.xlu0 %v614, 71
  %v619 = vpop.permute.xlu0 %618
  %620 = vrot.lane.b32.xlu0 %v615, 71
  %v621 = vpop.permute.xlu0 %620
  %v622 = vrot.slane %v617, 4
  %v623 = vrot.slane %v619, 4
  %v624 = vrot.slane %v621, 4
  %v625 = vsel %vm378, %v622, %v623
  %vm626 = vcmask 580608
  %v627 = vsel %vm626, %v617, %v625
  %v628 = vsel %vm378, %v623, %v624
  %v629 = vsel %vm626, %v619, %v628
  %632 = vst [vmem:[#allocation3 + $0x40] sm:$0xff] %v627
  %633 = vst [vmem:[#allocation3 + $0x48] sm:$0xff] %v629
  %v634 = vld [vmem:[#allocation2 + $0x14] sm:$0xff]
  %v635 = vld [vmem:[#allocation2 + $0x1c] sm:$0xff]
  %v636 = vld [vmem:[#allocation2 + $0x24] sm:$0xf]
  %v637 = vunpack.c.l.bf16 %v634
  %v638 = vunpack.c.h.bf16 %v634
  %v639 = vunpack.c.l.bf16 %v635
  %v640 = vunpack.c.h.bf16 %v635
  %v641 = vunpack.c.l.bf16 %v636
  %v642 = vmul.f32 %v637, %v577
  %v643 = vmul.f32 %v638, %v585
  %v644 = vmul.f32 %v639, %v586
  %v645 = vmul.f32 %v640, %v587
  %v646 = vmul.f32 %v641, %v583
  %v647 = vpack.c.bf16 %v642, %v642
  %v648 = vpack.c.bf16 %v643, %v643
  %v649 = vpack.c.bf16 %v644, %v644
  %v650 = vpack.c.bf16 %v645, %v645
  %v651 = vpack.c.bf16 %v646, %v646
  %v657 = vunpack.c.l.b16 %v647
  %v658 = vunpack.c.l.b16 %v648
  %v659 = vunpack.c.l.b16 %v649
  %v660 = vunpack.c.l.b16 %v650
  %v661 = vunpack.c.l.b16 %v651
  %v662 = vpack.c.b16 %v658, %v657
  %v663 = vpack.c.b16 %v660, %v659
  %v664 = vpack.c.b16 %v661, %v661
  %665 = vrot.lane.b32.xlu0 %v662, 71
  %v666 = vpop.permute.xlu0 %665
  %667 = vrot.lane.b32.xlu0 %v663, 71
  %v668 = vpop.permute.xlu0 %667
  %669 = vrot.lane.b32.xlu0 %v664, 71
  %v670 = vpop.permute.xlu0 %669
  %v671 = vrot.slane %v666, 4
  %v672 = vrot.slane %v668, 4
  %v673 = vrot.slane %v670, 4
  %v674 = vsel %vm378, %v671, %v672
  %v675 = vsel %vm626, %v666, %v674
  %v676 = vsel %vm378, %v672, %v673
  %v677 = vsel %vm626, %v668, %v676
  %680 = vst [vmem:[#allocation3 + $0x50] sm:$0xff] %v675
  %681 = vst [vmem:[#allocation3 + $0x58] sm:$0xff] %v677
  %s682 = scalar_lea.vmem %s7, 96
  %v683 = vld [vmem:[%s682] sm:$0xff]
  %v684 = vld [vmem:[%s682 + $0x8] sm:$0xff]
  %v685 = vld [vmem:[%s682 + $0x10] sm:$0xff]
  %v686 = vld [vmem:[%s682 + $0x18] sm:$0xff]
  %v687 = vld [vmem:[#allocation2] sm:$0xff]
  %v688 = vld [vmem:[#allocation2 + $0x8] sm:$0xff]
  %v689 = vld [vmem:[#allocation2 + $0x10] sm:$0xf]
  %v690 = vunpack.c.l.bf16 %v687
  %v691 = vunpack.c.h.bf16 %v687
  %v692 = vunpack.c.l.bf16 %v688
  %v693 = vunpack.c.h.bf16 %v688
  %v694 = vunpack.c.l.bf16 %v689
  %699 = vrot.lane.b32.xlu0 %v683, 63
  %v700 = vpop.permute.xlu0 %699
  %701 = vrot.lane.b32.xlu0 %v684, 63
  %v702 = vpop.permute.xlu0 %701
  %703 = vrot.lane.b32.xlu0 %v685, 63
  %v704 = vpop.permute.xlu0 %703
  %705 = vrot.lane.b32.xlu0 %v686, 63
  %v706 = vpop.permute.xlu0 %705
  %vm707 = vcmask 515072
  %v708 = vsel %vm707, %v700, %v702
  %v709 = vsel %vm707, %v702, %v704
  %v710 = vsel %vm707, %v704, %v706
  %v716 = vmul.f32 %v690, %v700
  %v717 = vmul.f32 %v691, %v708
  %v718 = vmul.f32 %v692, %v709
  %v719 = vmul.f32 %v693, %v710
  %v720 = vmul.f32 %v694, %v706
  %v721 = vpack.c.bf16 %v716, %v716
  %v722 = vpack.c.bf16 %v717, %v717
  %v723 = vpack.c.bf16 %v718, %v718
  %v724 = vpack.c.bf16 %v719, %v719
  %v725 = vpack.c.bf16 %v720, %v720
  %v731 = vunpack.c.l.b16 %v721
  %v732 = vunpack.c.l.b16 %v722
  %v733 = vunpack.c.l.b16 %v723
  %v734 = vunpack.c.l.b16 %v724
  %v735 = vunpack.c.l.b16 %v725
  %v736 = vpack.c.b16 %v732, %v731
  %v737 = vpack.c.b16 %v734, %v733
  %v738 = vpack.c.b16 %v735, %v735
  %739 = vrot.lane.b32.xlu0 %v736, 65
  %v740 = vpop.permute.xlu0 %739
  %741 = vrot.lane.b32.xlu0 %v737, 65
  %v742 = vpop.permute.xlu0 %741
  %743 = vrot.lane.b32.xlu0 %v738, 65
  %v744 = vpop.permute.xlu0 %743
  %v745 = vrot.slane %v740, 4
  %v746 = vrot.slane %v742, 4
  %v747 = vrot.slane %v744, 4
  %v748 = vsel %vm378, %v745, %v746
  %vm749 = vcmask 531456
  %v750 = vsel %vm749, %v740, %v748
  %v751 = vsel %vm378, %v746, %v747
  %v752 = vsel %vm749, %v742, %v751
  %755 = vst [vmem:[#allocation3 + $0x60] sm:$0xff] %v750
  %756 = vst [vmem:[#allocation3 + $0x68] sm:$0xff] %v752
  %v757 = vld [vmem:[#allocation2 + $0x14] sm:$0xff]
  %v758 = vld [vmem:[#allocation2 + $0x1c] sm:$0xff]
  %v759 = vld [vmem:[#allocation2 + $0x24] sm:$0xf]
  %v760 = vunpack.c.l.bf16 %v757
  %v761 = vunpack.c.h.bf16 %v757
  %v762 = vunpack.c.l.bf16 %v758
  %v763 = vunpack.c.h.bf16 %v758
  %v764 = vunpack.c.l.bf16 %v759
  %v765 = vmul.f32 %v760, %v700
  %v766 = vmul.f32 %v761, %v708
  %v767 = vmul.f32 %v762, %v709
  %v768 = vmul.f32 %v763, %v710
  %v769 = vmul.f32 %v764, %v706
  %v770 = vpack.c.bf16 %v765, %v765
  %v771 = vpack.c.bf16 %v766, %v766
  %v772 = vpack.c.bf16 %v767, %v767
  %v773 = vpack.c.bf16 %v768, %v768
  %v774 = vpack.c.bf16 %v769, %v769
  %v780 = vunpack.c.l.b16 %v770
  %v781 = vunpack.c.l.b16 %v771
  %v782 = vunpack.c.l.b16 %v772
  %v783 = vunpack.c.l.b16 %v773
  %v784 = vunpack.c.l.b16 %v774
  %v785 = vpack.c.b16 %v781, %v780
  %v786 = vpack.c.b16 %v783, %v782
  %v787 = vpack.c.b16 %v784, %v784
  %788 = vrot.lane.b32.xlu0 %v785, 65
  %v789 = vpop.permute.xlu0 %788
  %790 = vrot.lane.b32.xlu0 %v786, 65
  %v791 = vpop.permute.xlu0 %790
  %792 = vrot.lane.b32.xlu0 %v787, 65
  %v793 = vpop.permute.xlu0 %792
  %v794 = vrot.slane %v789, 4
  %v795 = vrot.slane %v791, 4
  %v796 = vrot.slane %v793, 4
  %v797 = vsel %vm378, %v794, %v795
  %v798 = vsel %vm749, %v789, %v797
  %v799 = vsel %vm378, %v795, %v796
  %v800 = vsel %vm749, %v791, %v799
  %803 = vst [vmem:[#allocation3 + $0x70] sm:$0xff] %v798
  %804 = vst [vmem:[#allocation3 + $0x78] sm:$0xff] %v800
  %v805 = vld [vmem:[#allocation2] sm:$0xff]
  %v806 = vld [vmem:[#allocation2 + $0x8] sm:$0xff]
  %v807 = vld [vmem:[#allocation2 + $0x10] sm:$0xf]
  %811 = vrot.lane.b32.xlu0 %v805, 64
  %v812 = vpop.permute.xlu0 %811
  %813 = vrot.lane.b32.xlu0 %v806, 64
  %v814 = vpop.permute.xlu0 %813
  %815 = vrot.lane.b32.xlu0 %v807, 64
  %v816 = vpop.permute.xlu0 %815
  %v817 = vrot.slane %v812, 4
  %v818 = vrot.slane %v814, 4
  %v819 = vrot.slane %v816, 4
  %v820 = vsel %vm378, %v817, %v818
  %vm821 = vcmask 523264
  %v822 = vsel %vm821, %v812, %v820
  %v823 = vsel %vm378, %v818, %v819
  %v824 = vsel %vm821, %v814, %v823
  %827 = vst [vmem:[#allocation3 + $0x80] sm:$0xff] %v822
  %828 = vst [vmem:[#allocation3 + $0x88] sm:$0xff] %v824
  %v829 = vld [vmem:[#allocation2 + $0x14] sm:$0xff]
  %v830 = vld [vmem:[#allocation2 + $0x1c] sm:$0xff]
  %v831 = vld [vmem:[#allocation2 + $0x24] sm:$0xf]
  %835 = vrot.lane.b32.xlu0 %v829, 64
  %v836 = vpop.permute.xlu0 %835
  %837 = vrot.lane.b32.xlu0 %v830, 64
  %v838 = vpop.permute.xlu0 %837
  %839 = vrot.lane.b32.xlu0 %v831, 64
  %v840 = vpop.permute.xlu0 %839
  %v841 = vrot.slane %v836, 4
  %v842 = vrot.slane %v838, 4
  %v843 = vrot.slane %v840, 4
  %v844 = vsel %vm378, %v841, %v842
  %v845 = vsel %vm821, %v836, %v844
  %v846 = vsel %vm378, %v842, %v843
  %v847 = vsel %vm821, %v838, %v846
  %850 = vst [vmem:[#allocation3 + $0x90] sm:$0xff] %v845
  %851 = vst [vmem:[#allocation3 + $0x98] sm:$0xff] %v847
  %s852 = scalar_lea.vmem %s7, 160
  %v853 = vld [vmem:[%s852] sm:$0xff]
  %v854 = vld [vmem:[%s852 + $0x8] sm:$0xff]
  %v855 = vld [vmem:[%s852 + $0x10] sm:$0xff]
  %v856 = vld [vmem:[%s852 + $0x18] sm:$0xff]
  %v857 = vld [vmem:[#allocation2] sm:$0xff]
  %v858 = vld [vmem:[#allocation2 + $0x8] sm:$0xff]
  %v859 = vld [vmem:[#allocation2 + $0x10] sm:$0xf]
  %v860 = vunpack.c.l.bf16 %v857
  %v861 = vunpack.c.h.bf16 %v857
  %v862 = vunpack.c.l.bf16 %v858
  %v863 = vunpack.c.h.bf16 %v858
  %v864 = vunpack.c.l.bf16 %v859
  %869 = vrot.lane.b32.xlu0 %v853, 65
  %v870 = vpop.permute.xlu0 %869
  %871 = vrot.lane.b32.xlu0 %v854, 65
  %v872 = vpop.permute.xlu0 %871
  %873 = vrot.lane.b32.xlu0 %v855, 65
  %v874 = vpop.permute.xlu0 %873
  %875 = vrot.lane.b32.xlu0 %v856, 65
  %v876 = vpop.permute.xlu0 %875
  %vm877 = vcmask 531456
  %v878 = vsel %vm877, %v870, %v872
  %v879 = vsel %vm877, %v872, %v874
  %v880 = vsel %vm877, %v874, %v876
  %v886 = vmul.f32 %v860, %v870
  %v887 = vmul.f32 %v861, %v878
  %v888 = vmul.f32 %v862, %v879
  %v889 = vmul.f32 %v863, %v880
  %v890 = vmul.f32 %v864, %v876
  %v891 = vpack.c.bf16 %v886, %v886
  %v892 = vpack.c.bf16 %v887, %v887
  %v893 = vpack.c.bf16 %v888, %v888
  %v894 = vpack.c.bf16 %v889, %v889
  %v895 = vpack.c.bf16 %v890, %v890
  %v901 = vunpack.c.l.b16 %v891
  %v902 = vunpack.c.l.b16 %v892
  %v903 = vunpack.c.l.b16 %v893
  %v904 = vunpack.c.l.b16 %v894
  %v905 = vunpack.c.l.b16 %v895
  %v906 = vpack.c.b16 %v902, %v901
  %v907 = vpack.c.b16 %v904, %v903
  %v908 = vpack.c.b16 %v905, %v905
  %909 = vrot.lane.b32.xlu0 %v906, 63
  %v910 = vpop.permute.xlu0 %909
  %911 = vrot.lane.b32.xlu0 %v907, 63
  %v912 = vpop.permute.xlu0 %911
  %913 = vrot.lane.b32.xlu0 %v908, 63
  %v914 = vpop.permute.xlu0 %913
  %v915 = vrot.slane %v910, 4
  %v916 = vrot.slane %v912, 4
  %v917 = vrot.slane %v914, 4
  %v918 = vsel %vm378, %v915, %v916
  %vm919 = vcmask 515072
  %v920 = vsel %vm919, %v910, %v918
  %v921 = vsel %vm378, %v916, %v917
  %v922 = vsel %vm919, %v912, %v921
  %925 = vst [vmem:[#allocation3 + $0xa0] sm:$0xff] %v920
  %926 = vst [vmem:[#allocation3 + $0xa8] sm:$0xff] %v922
  %v927 = vld [vmem:[#allocation2 + $0x14] sm:$0xff]
  %v928 = vld [vmem:[#allocation2 + $0x1c] sm:$0xff]
  %v929 = vld [vmem:[#allocation2 + $0x24] sm:$0xf]
  %v930 = vunpack.c.l.bf16 %v927
  %v931 = vunpack.c.h.bf16 %v927
  %v932 = vunpack.c.l.bf16 %v928
  %v933 = vunpack.c.h.bf16 %v928
  %v934 = vunpack.c.l.bf16 %v929
  %v935 = vmul.f32 %v930, %v870
  %v936 = vmul.f32 %v931, %v878
  %v937 = vmul.f32 %v932, %v879
  %v938 = vmul.f32 %v933, %v880
  %v939 = vmul.f32 %v934, %v876
  %v940 = vpack.c.bf16 %v935, %v935
  %v941 = vpack.c.bf16 %v936, %v936
  %v942 = vpack.c.bf16 %v937, %v937
  %v943 = vpack.c.bf16 %v938, %v938
  %v944 = vpack.c.bf16 %v939, %v939
  %v950 = vunpack.c.l.b16 %v940
  %v951 = vunpack.c.l.b16 %v941
  %v952 = vunpack.c.l.b16 %v942
  %v953 = vunpack.c.l.b16 %v943
  %v954 = vunpack.c.l.b16 %v944
  %v955 = vpack.c.b16 %v951, %v950
  %v956 = vpack.c.b16 %v953, %v952
  %v957 = vpack.c.b16 %v954, %v954
  %958 = vrot.lane.b32.xlu0 %v955, 63
  %v959 = vpop.permute.xlu0 %958
  %960 = vrot.lane.b32.xlu0 %v956, 63
  %v961 = vpop.permute.xlu0 %960
  %962 = vrot.lane.b32.xlu0 %v957, 63
  %v963 = vpop.permute.xlu0 %962
  %v964 = vrot.slane %v959, 4
  %v965 = vrot.slane %v961, 4
  %v966 = vrot.slane %v963, 4
  %v967 = vsel %vm378, %v964, %v965
  %v968 = vsel %vm919, %v959, %v967
  %v969 = vsel %vm378, %v965, %v966
  %v970 = vsel %vm919, %v961, %v969
  %973 = vst [vmem:[#allocation3 + $0xb0] sm:$0xff] %v968
  %974 = vst [vmem:[#allocation3 + $0xb8] sm:$0xff] %v970
  %s975 = scalar_lea.vmem %s7, 192
  %v976 = vld [vmem:[%s975] sm:$0xff]
  %v977 = vld [vmem:[%s975 + $0x8] sm:$0xff]
  %v978 = vld [vmem:[%s975 + $0x10] sm:$0xff]
  %v979 = vld [vmem:[%s975 + $0x18] sm:$0xff]
  %v980 = vld [vmem:[#allocation2] sm:$0xff]
  %v981 = vld [vmem:[#allocation2 + $0x8] sm:$0xff]
  %v982 = vld [vmem:[#allocation2 + $0x10] sm:$0xf]
  %v983 = vunpack.c.l.bf16 %v980
  %v984 = vunpack.c.h.bf16 %v980
  %v985 = vunpack.c.l.bf16 %v981
  %v986 = vunpack.c.h.bf16 %v981
  %v987 = vunpack.c.l.bf16 %v982
  %992 = vrot.lane.b32.xlu0 %v976, 71
  %v993 = vpop.permute.xlu0 %992
  %994 = vrot.lane.b32.xlu0 %v977, 71
  %v995 = vpop.permute.xlu0 %994
  %996 = vrot.lane.b32.xlu0 %v978, 71
  %v997 = vpop.permute.xlu0 %996
  %998 = vrot.lane.b32.xlu0 %v979, 71
  %v999 = vpop.permute.xlu0 %998
  %vm1000 = vcmask 580608
  %v1001 = vsel %vm1000, %v993, %v995
  %v1002 = vsel %vm1000, %v995, %v997
  %v1003 = vsel %vm1000, %v997, %v999
  %v1009 = vmul.f32 %v983, %v993
  %v1010 = vmul.f32 %v984, %v1001
  %v1011 = vmul.f32 %v985, %v1002
  %v1012 = vmul.f32 %v986, %v1003
  %v1013 = vmul.f32 %v987, %v999
  %v1014 = vpack.c.bf16 %v1009, %v1009
  %v1015 = vpack.c.bf16 %v1010, %v1010
  %v1016 = vpack.c.bf16 %v1011, %v1011
  %v1017 = vpack.c.bf16 %v1012, %v1012
  %v1018 = vpack.c.bf16 %v1013, %v1013
  %v1024 = vunpack.c.l.b16 %v1014
  %v1025 = vunpack.c.l.b16 %v1015
  %v1026 = vunpack.c.l.b16 %v1016
  %v1027 = vunpack.c.l.b16 %v1017
  %v1028 = vunpack.c.l.b16 %v1018
  %v1029 = vpack.c.b16 %v1025, %v1024
  %v1030 = vpack.c.b16 %v1027, %v1026
  %v1031 = vpack.c.b16 %v1028, %v1028
  %1032 = vrot.lane.b32.xlu0 %v1029, 57
  %v1033 = vpop.permute.xlu0 %1032
  %1034 = vrot.lane.b32.xlu0 %v1030, 57
  %v1035 = vpop.permute.xlu0 %1034
  %1036 = vrot.lane.b32.xlu0 %v1031, 57
  %v1037 = vpop.permute.xlu0 %1036
  %v1038 = vrot.slane %v1033, 4
  %v1039 = vrot.slane %v1035, 4
  %v1040 = vrot.slane %v1037, 4
  %v1041 = vsel %vm378, %v1038, %v1039
  %vm1042 = vcmask 465920
  %v1043 = vsel %vm1042, %v1033, %v1041
  %v1044 = vsel %vm378, %v1039, %v1040
  %v1045 = vsel %vm1042, %v1035, %v1044
  %1048 = vst [vmem:[#allocation3 + $0xc0] sm:$0xff] %v1043
  %1049 = vst [vmem:[#allocation3 + $0xc8] sm:$0xff] %v1045
  %v1050 = vld [vmem:[#allocation2 + $0x14] sm:$0xff]
  %v1051 = vld [vmem:[#allocation2 + $0x1c] sm:$0xff]
  %v1052 = vld [vmem:[#allocation2 + $0x24] sm:$0xf]
  %v1053 = vunpack.c.l.bf16 %v1050
  %v1054 = vunpack.c.h.bf16 %v1050
  %v1055 = vunpack.c.l.bf16 %v1051
  %v1056 = vunpack.c.h.bf16 %v1051
  %v1057 = vunpack.c.l.bf16 %v1052
  %v1058 = vmul.f32 %v1053, %v993
  %v1059 = vmul.f32 %v1054, %v1001
  %v1060 = vmul.f32 %v1055, %v1002
  %v1061 = vmul.f32 %v1056, %v1003
  %v1062 = vmul.f32 %v1057, %v999
  %v1063 = vpack.c.bf16 %v1058, %v1058
  %v1064 = vpack.c.bf16 %v1059, %v1059
  %v1065 = vpack.c.bf16 %v1060, %v1060
  %v1066 = vpack.c.bf16 %v1061, %v1061
  %v1067 = vpack.c.bf16 %v1062, %v1062
  %v1073 = vunpack.c.l.b16 %v1063
  %v1074 = vunpack.c.l.b16 %v1064
  %v1075 = vunpack.c.l.b16 %v1065
  %v1076 = vunpack.c.l.b16 %v1066
  %v1077 = vunpack.c.l.b16 %v1067
  %v1078 = vpack.c.b16 %v1074, %v1073
  %v1079 = vpack.c.b16 %v1076, %v1075
  %v1080 = vpack.c.b16 %v1077, %v1077
  %1081 = vrot.lane.b32.xlu0 %v1078, 57
  %v1082 = vpop.permute.xlu0 %1081
  %1083 = vrot.lane.b32.xlu0 %v1079, 57
  %v1084 = vpop.permute.xlu0 %1083
  %1085 = vrot.lane.b32.xlu0 %v1080, 57
  %v1086 = vpop.permute.xlu0 %1085
  %v1087 = vrot.slane %v1082, 4
  %v1088 = vrot.slane %v1084, 4
  %v1089 = vrot.slane %v1086, 4
  %v1090 = vsel %vm378, %v1087, %v1088
  %v1091 = vsel %vm1042, %v1082, %v1090
  %v1092 = vsel %vm378, %v1088, %v1089
  %v1093 = vsel %vm1042, %v1084, %v1092
  %1096 = vst [vmem:[#allocation3 + $0xd0] sm:$0xff] %v1091
  %1097 = vst [vmem:[#allocation3 + $0xd8] sm:$0xff] %v1093
  %s1098 = scalar_lea.vmem %s7, 224
  %v1099 = vld [vmem:[%s1098] sm:$0xff]
  %v1100 = vld [vmem:[%s1098 + $0x8] sm:$0xff]
  %v1101 = vld [vmem:[%s1098 + $0x10] sm:$0xff]
  %v1102 = vld [vmem:[%s1098 + $0x18] sm:$0xff]
  %v1103 = vld [vmem:[#allocation2] sm:$0xff]
  %v1104 = vld [vmem:[#allocation2 + $0x8] sm:$0xff]
  %v1105 = vld [vmem:[#allocation2 + $0x10] sm:$0xf]
  %v1106 = vunpack.c.l.bf16 %v1103
  %v1107 = vunpack.c.h.bf16 %v1103
  %v1108 = vunpack.c.l.bf16 %v1104
  %v1109 = vunpack.c.h.bf16 %v1104
  %v1110 = vunpack.c.l.bf16 %v1105
  %1115 = vrot.lane.b32.xlu0 %v1099, 72
  %v1116 = vpop.permute.xlu0 %1115
  %1117 = vrot.lane.b32.xlu0 %v1100, 72
  %v1118 = vpop.permute.xlu0 %1117
  %1119 = vrot.lane.b32.xlu0 %v1101, 72
  %v1120 = vpop.permute.xlu0 %1119
  %1121 = vrot.lane.b32.xlu0 %v1102, 72
  %v1122 = vpop.permute.xlu0 %1121
  %vm1123 = vcmask 588800
  %v1124 = vsel %vm1123, %v1116, %v1118
  %v1125 = vsel %vm1123, %v1118, %v1120
  %v1126 = vsel %vm1123, %v1120, %v1122
  %v1132 = vmul.f32 %v1106, %v1116
  %v1133 = vmul.f32 %v1107, %v1124
  %v1134 = vmul.f32 %v1108, %v1125
  %v1135 = vmul.f32 %v1109, %v1126
  %v1136 = vmul.f32 %v1110, %v1122
  %v1137 = vpack.c.bf16 %v1132, %v1132
  %v1138 = vpack.c.bf16 %v1133, %v1133
  %v1139 = vpack.c.bf16 %v1134, %v1134
  %v1140 = vpack.c.bf16 %v1135, %v1135
  %v1141 = vpack.c.bf16 %v1136, %v1136
  %v1147 = vunpack.c.l.b16 %v1137
  %v1148 = vunpack.c.l.b16 %v1138
  %v1149 = vunpack.c.l.b16 %v1139
  %v1150 = vunpack.c.l.b16 %v1140
  %v1151 = vunpack.c.l.b16 %v1141
  %v1152 = vpack.c.b16 %v1148, %v1147
  %v1153 = vpack.c.b16 %v1150, %v1149
  %v1154 = vpack.c.b16 %v1151, %v1151
  %1155 = vrot.lane.b32.xlu0 %v1152, 56
  %v1156 = vpop.permute.xlu0 %1155
  %1157 = vrot.lane.b32.xlu0 %v1153, 56
  %v1158 = vpop.permute.xlu0 %1157
  %1159 = vrot.lane.b32.xlu0 %v1154, 56
  %v1160 = vpop.permute.xlu0 %1159
  %v1161 = vrot.slane %v1156, 4
  %v1162 = vrot.slane %v1158, 4
  %v1163 = vrot.slane %v1160, 4
  %v1164 = vsel %vm378, %v1161, %v1162
  %vm1165 = vcmask 457728
  %v1166 = vsel %vm1165, %v1156, %v1164
  %v1167 = vsel %vm378, %v1162, %v1163
  %v1168 = vsel %vm1165, %v1158, %v1167
  %1171 = vst [vmem:[#allocation3 + $0xe0] sm:$0xff] %v1166
  %1172 = vst [vmem:[#allocation3 + $0xe8] sm:$0xff] %v1168
  %v1173 = vld [vmem:[#allocation2 + $0x14] sm:$0xff]
  %v1174 = vld [vmem:[#allocation2 + $0x1c] sm:$0xff]
  %v1175 = vld [vmem:[#allocation2 + $0x24] sm:$0xf]
  %v1176 = vunpack.c.l.bf16 %v1173
  %v1177 = vunpack.c.h.bf16 %v1173
  %v1178 = vunpack.c.l.bf16 %v1174
  %v1179 = vunpack.c.h.bf16 %v1174
  %v1180 = vunpack.c.l.bf16 %v1175
  %v1181 = vmul.f32 %v1176, %v1116
  %v1182 = vmul.f32 %v1177, %v1124
  %v1183 = vmul.f32 %v1178, %v1125
  %v1184 = vmul.f32 %v1179, %v1126
  %v1185 = vmul.f32 %v1180, %v1122
  %v1186 = vpack.c.bf16 %v1181, %v1181
  %v1187 = vpack.c.bf16 %v1182, %v1182
  %v1188 = vpack.c.bf16 %v1183, %v1183
  %v1189 = vpack.c.bf16 %v1184, %v1184
  %v1190 = vpack.c.bf16 %v1185, %v1185
  %v1196 = vunpack.c.l.b16 %v1186
  %v1197 = vunpack.c.l.b16 %v1187
  %v1198 = vunpack.c.l.b16 %v1188
  %v1199 = vunpack.c.l.b16 %v1189
  %v1200 = vunpack.c.l.b16 %v1190
  %v1201 = vpack.c.b16 %v1197, %v1196
  %v1202 = vpack.c.b16 %v1199, %v1198
  %v1203 = vpack.c.b16 %v1200, %v1200
  %1204 = vrot.lane.b32.xlu0 %v1201, 56
  %v1205 = vpop.permute.xlu0 %1204
  %1206 = vrot.lane.b32.xlu0 %v1202, 56
  %v1207 = vpop.permute.xlu0 %1206
  %1208 = vrot.lane.b32.xlu0 %v1203, 56
  %v1209 = vpop.permute.xlu0 %1208
  %v1210 = vrot.slane %v1205, 4
  %v1211 = vrot.slane %v1207, 4
  %v1212 = vrot.slane %v1209, 4
  %v1213 = vsel %vm378, %v1210, %v1211
  %v1214 = vsel %vm1165, %v1205, %v1213
  %v1215 = vsel %vm378, %v1211, %v1212
  %v1216 = vsel %vm1165, %v1207, %v1215
  %1219 = vst [vmem:[#allocation3 + $0xf0] sm:$0xff] %v1214
  %1220 = vst [vmem:[#allocation3 + $0xf8] sm:$0xff] %v1216
  %s1221 = scalar_lea.vmem %s7, 256
  %v1222 = vld [vmem:[%s1221] sm:$0xff]
  %v1223 = vld [vmem:[%s1221 + $0x8] sm:$0xff]
  %v1224 = vld [vmem:[%s1221 + $0x10] sm:$0xff]
  %v1225 = vld [vmem:[%s1221 + $0x18] sm:$0xff]
  %v1226 = vld [vmem:[#allocation2] sm:$0xff]
  %v1227 = vld [vmem:[#allocation2 + $0x8] sm:$0xff]
  %v1228 = vld [vmem:[#allocation2 + $0x10] sm:$0xf]
  %v1229 = vunpack.c.l.bf16 %v1226
  %v1230 = vunpack.c.h.bf16 %v1226
  %v1231 = vunpack.c.l.bf16 %v1227
  %v1232 = vunpack.c.h.bf16 %v1227
  %v1233 = vunpack.c.l.bf16 %v1228
  %1238 = vrot.lane.b32.xlu0 %v1222, 73
  %v1239 = vpop.permute.xlu0 %1238
  %1240 = vrot.lane.b32.xlu0 %v1223, 73
  %v1241 = vpop.permute.xlu0 %1240
  %1242 = vrot.lane.b32.xlu0 %v1224, 73
  %v1243 = vpop.permute.xlu0 %1242
  %1244 = vrot.lane.b32.xlu0 %v1225, 73
  %v1245 = vpop.permute.xlu0 %1244
  %vm1246 = vcmask 596992
  %v1247 = vsel %vm1246, %v1239, %v1241
  %v1248 = vsel %vm1246, %v1241, %v1243
  %v1249 = vsel %vm1246, %v1243, %v1245
  %v1255 = vmul.f32 %v1229, %v1239
  %v1256 = vmul.f32 %v1230, %v1247
  %v1257 = vmul.f32 %v1231, %v1248
  %v1258 = vmul.f32 %v1232, %v1249
  %v1259 = vmul.f32 %v1233, %v1245
  %v1260 = vpack.c.bf16 %v1255, %v1255
  %v1261 = vpack.c.bf16 %v1256, %v1256
  %v1262 = vpack.c.bf16 %v1257, %v1257
  %v1263 = vpack.c.bf16 %v1258, %v1258
  %v1264 = vpack.c.bf16 %v1259, %v1259
  %v1270 = vunpack.c.l.b16 %v1260
  %v1271 = vunpack.c.l.b16 %v1261
  %v1272 = vunpack.c.l.b16 %v1262
  %v1273 = vunpack.c.l.b16 %v1263
  %v1274 = vunpack.c.l.b16 %v1264
  %v1275 = vpack.c.b16 %v1271, %v1270
  %v1276 = vpack.c.b16 %v1273, %v1272
  %v1277 = vpack.c.b16 %v1274, %v1274
  %1278 = vrot.lane.b32.xlu0 %v1275, 55
  %v1279 = vpop.permute.xlu0 %1278
  %1280 = vrot.lane.b32.xlu0 %v1276, 55
  %v1281 = vpop.permute.xlu0 %1280
  %1282 = vrot.lane.b32.xlu0 %v1277, 55
  %v1283 = vpop.permute.xlu0 %1282
  %v1284 = vrot.slane %v1279, 4
  %v1285 = vrot.slane %v1281, 4
  %v1286 = vrot.slane %v1283, 4
  %v1287 = vsel %vm378, %v1284, %v1285
  %vm1288 = vcmask 449536
  %v1289 = vsel %vm1288, %v1279, %v1287
  %v1290 = vsel %vm378, %v1285, %v1286
  %v1291 = vsel %vm1288, %v1281, %v1290
  %1294 = vst [vmem:[#allocation3 + $0x100] sm:$0xff] %v1289
  %1295 = vst [vmem:[#allocation3 + $0x108] sm:$0xff] %v1291
  %v1296 = vld [vmem:[#allocation2 + $0x14] sm:$0xff]
  %v1297 = vld [vmem:[#allocation2 + $0x1c] sm:$0xff]
  %v1298 = vld [vmem:[#allocation2 + $0x24] sm:$0xf]
  %v1299 = vunpack.c.l.bf16 %v1296
  %v1300 = vunpack.c.h.bf16 %v1296
  %v1301 = vunpack.c.l.bf16 %v1297
  %v1302 = vunpack.c.h.bf16 %v1297
  %v1303 = vunpack.c.l.bf16 %v1298
  %v1304 = vmul.f32 %v1299, %v1239
  %v1305 = vmul.f32 %v1300, %v1247
  %v1306 = vmul.f32 %v1301, %v1248
  %v1307 = vmul.f32 %v1302, %v1249
  %v1308 = vmul.f32 %v1303, %v1245
  %v1309 = vpack.c.bf16 %v1304, %v1304
  %v1310 = vpack.c.bf16 %v1305, %v1305
  %v1311 = vpack.c.bf16 %v1306, %v1306
  %v1312 = vpack.c.bf16 %v1307, %v1307
  %v1313 = vpack.c.bf16 %v1308, %v1308
  %v1319 = vunpack.c.l.b16 %v1309
  %v1320 = vunpack.c.l.b16 %v1310
  %v1321 = vunpack.c.l.b16 %v1311
  %v1322 = vunpack.c.l.b16 %v1312
  %v1323 = vunpack.c.l.b16 %v1313
  %v1324 = vpack.c.b16 %v1320, %v1319
  %v1325 = vpack.c.b16 %v1322, %v1321
  %v1326 = vpack.c.b16 %v1323, %v1323
  %1327 = vrot.lane.b32.xlu0 %v1324, 55
  %v1328 = vpop.permute.xlu0 %1327
  %1329 = vrot.lane.b32.xlu0 %v1325, 55
  %v1330 = vpop.permute.xlu0 %1329
  %1331 = vrot.lane.b32.xlu0 %v1326, 55
  %v1332 = vpop.permute.xlu0 %1331
  %v1333 = vrot.slane %v1328, 4
  %v1334 = vrot.slane %v1330, 4
  %v1335 = vrot.slane %v1332, 4
  %v1336 = vsel %vm378, %v1333, %v1334
  %v1337 = vsel %vm1288, %v1328, %v1336
  %v1338 = vsel %vm378, %v1334, %v1335
  %v1339 = vsel %vm1288, %v1330, %v1338
  %1342 = vst [vmem:[#allocation3 + $0x110] sm:$0xff] %v1337
  %1343 = vst [vmem:[#allocation3 + $0x118] sm:$0xff] %v1339
  %v1344 = vld [vmem:[%s3] sm:$0xf]
  %v1345 = vld [vmem:[#allocation3] sm:$0xff]
  %v1346 = vld [vmem:[#allocation3 + $0x8] sm:$0xff]
  %v1347 = vld [vmem:[#allocation3 + $0x10] sm:$0xff]
  %v1348 = vld [vmem:[#allocation3 + $0x18] sm:$0xff]
  %v1349 = vld [vmem:[#allocation3 + $0x20] sm:$0xff]
  %v1350 = vld [vmem:[#allocation3 + $0x28] sm:$0xff]
  %v1351 = vld [vmem:[#allocation3 + $0x30] sm:$0xff]
  %v1352 = vld [vmem:[#allocation3 + $0x38] sm:$0xff]
  %v1353 = vld [vmem:[#allocation3 + $0x40] sm:$0xff]
  %v1354 = vld [vmem:[#allocation3 + $0x48] sm:$0xff]
  %v1355 = vld [vmem:[#allocation3 + $0x50] sm:$0xff]
  %v1356 = vld [vmem:[#allocation3 + $0x58] sm:$0xff]
  %v1357 = vld [vmem:[#allocation3 + $0x60] sm:$0xff]
  %v1358 = vld [vmem:[#allocation3 + $0x68] sm:$0xff]
  %v1359 = vld [vmem:[#allocation3 + $0x70] sm:$0xff]
  %v1360 = vld [vmem:[#allocation3 + $0x78] sm:$0xff]
  %v1361 = vld [vmem:[#allocation3 + $0x80] sm:$0xff]
  %v1362 = vld [vmem:[#allocation3 + $0x88] sm:$0xff]
  %v1363 = vld [vmem:[#allocation3 + $0x90] sm:$0xff]
  %v1364 = vld [vmem:[#allocation3 + $0x98] sm:$0xff]
  %v1365 = vld [vmem:[#allocation3 + $0xa0] sm:$0xff]
  %v1366 = vld [vmem:[#allocation3 + $0xa8] sm:$0xff]
  %v1367 = vld [vmem:[#allocation3 + $0xb0] sm:$0xff]
  %v1368 = vld [vmem:[#allocation3 + $0xb8] sm:$0xff]
  %v1369 = vld [vmem:[#allocation3 + $0xc0] sm:$0xff]
  %v1370 = vld [vmem:[#allocation3 + $0xc8] sm:$0xff]
  %v1371 = vld [vmem:[#allocation3 + $0xd0] sm:$0xff]
  %v1372 = vld [vmem:[#allocation3 + $0xd8] sm:$0xff]
  %v1373 = vld [vmem:[#allocation3 + $0xe0] sm:$0xff]
  %v1374 = vld [vmem:[#allocation3 + $0xe8] sm:$0xff]
  %v1375 = vld [vmem:[#allocation3 + $0xf0] sm:$0xff]
  %v1376 = vld [vmem:[#allocation3 + $0xf8] sm:$0xff]
  %v1377 = vld [vmem:[#allocation3 + $0x100] sm:$0xff]
  %v1378 = vld [vmem:[#allocation3 + $0x108] sm:$0xff]
  %v1379 = vld [vmem:[#allocation3 + $0x110] sm:$0xff]
  %v1380 = vld [vmem:[#allocation3 + $0x118] sm:$0xff]
  %v1417 = vunpack.c.l.b16 %v1345
  %v1418 = vunpack.c.h.b16 %v1345
  %v1419 = vunpack.c.l.b16 %v1346
  %v1420 = vunpack.c.h.b16 %v1346
  %v1421 = vunpack.c.l.b16 %v1347
  %v1422 = vunpack.c.h.b16 %v1347
  %v1423 = vunpack.c.l.b16 %v1348
  %v1424 = vunpack.c.h.b16 %v1348
  %v1425 = vunpack.c.l.b16 %v1349
  %v1426 = vunpack.c.h.b16 %v1349
  %v1427 = vunpack.c.l.b16 %v1350
  %v1428 = vunpack.c.h.b16 %v1350
  %v1429 = vunpack.c.l.b16 %v1351
  %v1430 = vunpack.c.h.b16 %v1351
  %v1431 = vunpack.c.l.b16 %v1352
  %v1432 = vunpack.c.h.b16 %v1352
  %v1433 = vunpack.c.l.b16 %v1353
  %v1434 = vunpack.c.h.b16 %v1353
  %v1435 = vunpack.c.l.b16 %v1354
  %v1436 = vunpack.c.h.b16 %v1354
  %v1437 = vunpack.c.l.b16 %v1355
  %v1438 = vunpack.c.h.b16 %v1355
  %v1439 = vunpack.c.l.b16 %v1356
  %v1440 = vunpack.c.h.b16 %v1356
  %v1441 = vunpack.c.l.b16 %v1357
  %v1442 = vunpack.c.h.b16 %v1357
  %v1443 = vunpack.c.l.b16 %v1358
  %v1444 = vunpack.c.h.b16 %v1358
  %v1445 = vunpack.c.l.b16 %v1359
  %v1446 = vunpack.c.h.b16 %v1359
  %v1447 = vunpack.c.l.b16 %v1360
  %v1448 = vunpack.c.h.b16 %v1360
  %v1449 = vunpack.c.l.b16 %v1361
  %v1450 = vunpack.c.h.b16 %v1361
  %v1451 = vunpack.c.l.b16 %v1362
  %v1452 = vunpack.c.h.b16 %v1362
  %v1453 = vunpack.c.l.b16 %v1363
  %v1454 = vunpack.c.h.b16 %v1363
  %v1455 = vunpack.c.l.b16 %v1364
  %v1456 = vunpack.c.h.b16 %v1364
  %v1457 = vunpack.c.l.b16 %v1365
  %v1458 = vunpack.c.h.b16 %v1365
  %v1459 = vunpack.c.l.b16 %v1366
  %v1460 = vunpack.c.h.b16 %v1366
  %v1461 = vunpack.c.l.b16 %v1367
  %v1462 = vunpack.c.h.b16 %v1367
  %v1463 = vunpack.c.l.b16 %v1368
  %v1464 = vunpack.c.h.b16 %v1368
  %v1465 = vunpack.c.l.b16 %v1369
  %v1466 = vunpack.c.h.b16 %v1369
  %v1467 = vunpack.c.l.b16 %v1370
  %v1468 = vunpack.c.h.b16 %v1370
  %v1469 = vunpack.c.l.b16 %v1371
  %v1470 = vunpack.c.h.b16 %v1371
  %v1471 = vunpack.c.l.b16 %v1372
  %v1472 = vunpack.c.h.b16 %v1372
  %v1473 = vunpack.c.l.b16 %v1373
  %v1474 = vunpack.c.h.b16 %v1373
  %v1475 = vunpack.c.l.b16 %v1374
  %v1476 = vunpack.c.h.b16 %v1374
  %v1477 = vunpack.c.l.b16 %v1375
  %v1478 = vunpack.c.h.b16 %v1375
  %v1479 = vunpack.c.l.b16 %v1376
  %v1480 = vunpack.c.h.b16 %v1376
  %v1481 = vunpack.c.l.b16 %v1377
  %v1482 = vunpack.c.h.b16 %v1377
  %v1483 = vunpack.c.l.b16 %v1378
  %v1484 = vunpack.c.h.b16 %v1378
  %v1485 = vunpack.c.l.b16 %v1379
  %v1486 = vunpack.c.h.b16 %v1379
  %v1487 = vunpack.c.l.b16 %v1380
  %v1488 = vunpack.c.h.b16 %v1380
  %v1489 = vpack.c.b16 %v1425, %v1417
  %v1490 = vpack.c.b16 %v1426, %v1418
  %v1491 = vpack.c.b16 %v1427, %v1419
  %v1492 = vpack.c.b16 %v1428, %v1420
  %v1493 = vpack.c.b16 %v1429, %v1421
  %v1494 = vpack.c.b16 %v1430, %v1422
  %v1495 = vpack.c.b16 %v1431, %v1423
  %v1496 = vpack.c.b16 %v1432, %v1424
  %v1497 = vpack.c.b16 %v1441, %v1433
  %v1498 = vpack.c.b16 %v1442, %v1434
  %v1499 = vpack.c.b16 %v1443, %v1435
  %v1500 = vpack.c.b16 %v1444, %v1436
  %v1501 = vpack.c.b16 %v1445, %v1437
  %v1502 = vpack.c.b16 %v1446, %v1438
  %v1503 = vpack.c.b16 %v1447, %v1439
  %v1504 = vpack.c.b16 %v1448, %v1440
  %v1505 = vpack.c.b16 %v1457, %v1449
  %v1506 = vpack.c.b16 %v1458, %v1450
  %v1507 = vpack.c.b16 %v1459, %v1451
  %v1508 = vpack.c.b16 %v1460, %v1452
  %v1509 = vpack.c.b16 %v1461, %v1453
  %v1510 = vpack.c.b16 %v1462, %v1454
  %v1511 = vpack.c.b16 %v1463, %v1455
  %v1512 = vpack.c.b16 %v1464, %v1456
  %v1513 = vpack.c.b16 %v1473, %v1465
  %v1514 = vpack.c.b16 %v1474, %v1466
  %v1515 = vpack.c.b16 %v1475, %v1467
  %v1516 = vpack.c.b16 %v1476, %v1468
  %v1517 = vpack.c.b16 %v1477, %v1469
  %v1518 = vpack.c.b16 %v1478, %v1470
  %v1519 = vpack.c.b16 %v1479, %v1471
  %v1520 = vpack.c.b16 %v1480, %v1472
  %v1521 = vpack.c.b16 %v1481, %v1481
  %v1522 = vpack.c.b16 %v1482, %v1482
  %v1523 = vpack.c.b16 %v1483, %v1483
  %v1524 = vpack.c.b16 %v1484, %v1484
  %v1525 = vpack.c.b16 %v1485, %v1485
  %v1526 = vpack.c.b16 %v1486, %v1486
  %v1527 = vpack.c.b16 %v1487, %v1487
  %v1528 = vpack.c.b16 %v1488, %v1488
  %v1562 = vsel %vm1123, %v1344, 0
  %vm1564 = vcmask 1043456
  %v1566 = vsel %vm1564, %v1521, 0
  %v1569 = vsel %vm1564, %v1522, 0
  %v1572 = vsel %vm1564, %v1523, 0
  %v1575 = vsel %vm1564, %v1524, 0
  %v1578 = vsel %vm1564, %v1525, 0
  %v1581 = vsel %vm1564, %v1526, 0
  %v1584 = vsel %vm1564, %v1527, 0
  %v1587 = vsel %vm1564, %v1528, 0
  %1589 = vmatprep.subr.bf16.mxu0 0
  %1590 = vmatpush1.bf16.msra.mxu0 0
  %1591 = vmatprep.subr.bf16.mxu0 0
  %1592 = vmatpush1.bf16.msra.mxu0 0
  %1593 = vmatprep.subr.bf16.mxu0 0
  %1594 = vmatpush1.bf16.msra.mxu0 0
  %1595 = vmatprep.subr.bf16.mxu0 %v1569
  %1596 = vmatpush1.bf16.msra.mxu0 %v1566
  %1597 = vmatprep.subr.bf16.mxu0 %v1514
  %1598 = vmatpush1.bf16.msra.mxu0 %v1513
  %1599 = vmatprep.subr.bf16.mxu0 %v1506
  %1600 = vmatpush1.bf16.msra.mxu0 %v1505
  %1601 = vmatprep.subr.bf16.mxu0 %v1498
  %1602 = vmatpush1.bf16.msra.mxu0 %v1497
  %1603 = vmatprep.subr.bf16.mxu0 %v1490
  %1604 = vmatpush1.bf16.msra.mxu0 %v1489
  %1605 = vmatprep.subr.bf16.mxu0 0
  %1606 = vmatpush2.bf16.msra.mxu0 0
  %1607 = vmatprep.subr.bf16.mxu0 0
  %1608 = vmatpush2.bf16.msra.mxu0 0
  %1609 = vmatprep.subr.bf16.mxu0 0
  %1610 = vmatpush2.bf16.msra.mxu0 0
  %1611 = vmatprep.subr.bf16.mxu0 0
  %1612 = vmatpush2.bf16.msra.mxu0 0
  %1613 = vmatprep.subr.bf16.mxu0 0
  %1614 = vmatpush2.bf16.msra.mxu0 0
  %1615 = vmatprep.subr.bf16.mxu0 0
  %1616 = vmatpush2.bf16.msra.mxu0 0
  %1617 = vmatprep.subr.bf16.mxu0 0
  %1618 = vmatpush2.bf16.msra.mxu0 0
  %1619 = vmatprep.subr.bf16.mxu0 0
  %1620 = vmatpush2.bf16.msra.mxu0 0
  %1621 = vmatprep.mubr.bf16.mxu0 0
  %1622 = vmatmul.mubr.bf16.gmra.mxu0 %v1562
  %v1623 = vpop.f32.mrf.mxu0
  %v1624 = vadd.f32 0.0, %v1623
  %v1625 = vpop.f32.mrf.mxu0
  %v1626 = vadd.f32 0.0, %v1625
  %v1627 = vpop.f32.mrf.mxu0
  %v1628 = vpop.f32.mrf.mxu0
  %1629 = vdwg.mxu0
  %1630 = vmatprep.subr.bf16.mxu0 0
  %1631 = vmatpush1.bf16.msra.mxu0 0
  %1632 = vmatprep.subr.bf16.mxu0 0
  %1633 = vmatpush1.bf16.msra.mxu0 0
  %1634 = vmatprep.subr.bf16.mxu0 0
  %1635 = vmatpush1.bf16.msra.mxu0 0
  %1636 = vmatprep.subr.bf16.mxu0 %v1575
  %1637 = vmatpush1.bf16.msra.mxu0 %v1572
  %1638 = vmatprep.subr.bf16.mxu0 %v1516
  %1639 = vmatpush1.bf16.msra.mxu0 %v1515
  %1640 = vmatprep.subr.bf16.mxu0 %v1508
  %1641 = vmatpush1.bf16.msra.mxu0 %v1507
  %1642 = vmatprep.subr.bf16.mxu0 %v1500
  %1643 = vmatpush1.bf16.msra.mxu0 %v1499
  %1644 = vmatprep.subr.bf16.mxu0 %v1492
  %1645 = vmatpush1.bf16.msra.mxu0 %v1491
  %1646 = vmatprep.subr.bf16.mxu0 0
  %1647 = vmatpush2.bf16.msra.mxu0 0
  %1648 = vmatprep.subr.bf16.mxu0 0
  %1649 = vmatpush2.bf16.msra.mxu0 0
  %1650 = vmatprep.subr.bf16.mxu0 0
  %1651 = vmatpush2.bf16.msra.mxu0 0
  %1652 = vmatprep.subr.bf16.mxu0 0
  %1653 = vmatpush2.bf16.msra.mxu0 0
  %1654 = vmatprep.subr.bf16.mxu0 0
  %1655 = vmatpush2.bf16.msra.mxu0 0
  %1656 = vmatprep.subr.bf16.mxu0 0
  %1657 = vmatpush2.bf16.msra.mxu0 0
  %1658 = vmatprep.subr.bf16.mxu0 0
  %1659 = vmatpush2.bf16.msra.mxu0 0
  %1660 = vmatprep.subr.bf16.mxu0 0
  %1661 = vmatpush2.bf16.msra.mxu0 0
  %1662 = vmatprep.mubr.bf16.mxu0 0
  %1663 = vmatmul.mubr.bf16.gmra.mxu0 %v1562
  %v1664 = vpop.f32.mrf.mxu0
  %v1665 = vadd.f32 0.0, %v1664
  %v1666 = vpop.f32.mrf.mxu0
  %v1667 = vadd.f32 0.0, %v1666
  %v1668 = vpop.f32.mrf.mxu0
  %v1669 = vpop.f32.mrf.mxu0
  %1670 = vdwg.mxu0
  %1671 = vmatprep.subr.bf16.mxu0 0
  %1672 = vmatpush1.bf16.msra.mxu0 0
  %1673 = vmatprep.subr.bf16.mxu0 0
  %1674 = vmatpush1.bf16.msra.mxu0 0
  %1675 = vmatprep.subr.bf16.mxu0 0
  %1676 = vmatpush1.bf16.msra.mxu0 0
  %1677 = vmatprep.subr.bf16.mxu0 %v1581
  %1678 = vmatpush1.bf16.msra.mxu0 %v1578
  %1679 = vmatprep.subr.bf16.mxu0 %v1518
  %1680 = vmatpush1.bf16.msra.mxu0 %v1517
  %1681 = vmatprep.subr.bf16.mxu0 %v1510
  %1682 = vmatpush1.bf16.msra.mxu0 %v1509
  %1683 = vmatprep.subr.bf16.mxu0 %v1502
  %1684 = vmatpush1.bf16.msra.mxu0 %v1501
  %1685 = vmatprep.subr.bf16.mxu0 %v1494
  %1686 = vmatpush1.bf16.msra.mxu0 %v1493
  %1687 = vmatprep.subr.bf16.mxu0 0
  %1688 = vmatpush2.bf16.msra.mxu0 0
  %1689 = vmatprep.subr.bf16.mxu0 0
  %1690 = vmatpush2.bf16.msra.mxu0 0
  %1691 = vmatprep.subr.bf16.mxu0 0
  %1692 = vmatpush2.bf16.msra.mxu0 0
  %1693 = vmatprep.subr.bf16.mxu0 0
  %1694 = vmatpush2.bf16.msra.mxu0 0
  %1695 = vmatprep.subr.bf16.mxu0 0
  %1696 = vmatpush2.bf16.msra.mxu0 0
  %1697 = vmatprep.subr.bf16.mxu0 0
  %1698 = vmatpush2.bf16.msra.mxu0 0
  %1699 = vmatprep.subr.bf16.mxu0 0
  %1700 = vmatpush2.bf16.msra.mxu0 0
  %1701 = vmatprep.subr.bf16.mxu0 0
  %1702 = vmatpush2.bf16.msra.mxu0 0
  %1703 = vmatprep.mubr.bf16.mxu0 0
  %1704 = vmatmul.mubr.bf16.gmra.mxu0 %v1562
  %v1705 = vpop.f32.mrf.mxu0
  %v1706 = vadd.f32 0.0, %v1705
  %v1707 = vpop.f32.mrf.mxu0
  %v1708 = vadd.f32 0.0, %v1707
  %v1709 = vpop.f32.mrf.mxu0
  %v1710 = vpop.f32.mrf.mxu0
  %1711 = vdwg.mxu0
  %1712 = vmatprep.subr.bf16.mxu0 0
  %1713 = vmatpush1.bf16.msra.mxu0 0
  %1714 = vmatprep.subr.bf16.mxu0 0
  %1715 = vmatpush1.bf16.msra.mxu0 0
  %1716 = vmatprep.subr.bf16.mxu0 0
  %1717 = vmatpush1.bf16.msra.mxu0 0
  %1718 = vmatprep.subr.bf16.mxu0 %v1587
  %1719 = vmatpush1.bf16.msra.mxu0 %v1584
  %1720 = vmatprep.subr.bf16.mxu0 %v1520
  %1721 = vmatpush1.bf16.msra.mxu0 %v1519
  %1722 = vmatprep.subr.bf16.mxu0 %v1512
  %1723 = vmatpush1.bf16.msra.mxu0 %v1511
  %1724 = vmatprep.subr.bf16.mxu0 %v1504
  %1725 = vmatpush1.bf16.msra.mxu0 %v1503
  %1726 = vmatprep.subr.bf16.mxu0 %v1496
  %1727 = vmatpush1.bf16.msra.mxu0 %v1495
  %1728 = vmatprep.subr.bf16.mxu0 0
  %1729 = vmatpush2.bf16.msra.mxu0 0
  %1730 = vmatprep.subr.bf16.mxu0 0
  %1731 = vmatpush2.bf16.msra.mxu0 0
  %1732 = vmatprep.subr.bf16.mxu0 0
  %1733 = vmatpush2.bf16.msra.mxu0 0
  %1734 = vmatprep.subr.bf16.mxu0 0
  %1735 = vmatpush2.bf16.msra.mxu0 0
  %1736 = vmatprep.subr.bf16.mxu0 0
  %1737 = vmatpush2.bf16.msra.mxu0 0
  %1738 = vmatprep.subr.bf16.mxu0 0
  %1739 = vmatpush2.bf16.msra.mxu0 0
  %1740 = vmatprep.subr.bf16.mxu0 0
  %1741 = vmatpush2.bf16.msra.mxu0 0
  %1742 = vmatprep.subr.bf16.mxu0 0
  %1743 = vmatpush2.bf16.msra.mxu0 0
  %1744 = vmatprep.mubr.bf16.mxu0 0
  %1745 = vmatmul.mubr.bf16.gmra.mxu0 %v1562
  %v1746 = vpop.f32.mrf.mxu0
  %v1747 = vadd.f32 0.0, %v1746
  %v1748 = vpop.f32.mrf.mxu0
  %v1749 = vadd.f32 0.0, %v1748
  %v1750 = vpop.f32.mrf.mxu0
  %v1751 = vpop.f32.mrf.mxu0
  %1752 = vdwg.mxu0
  %1753 = vst [vmem:[#allocation4] sm:$0xff] %v1624
  %1754 = vst [vmem:[#allocation4 + $0x8] sm:$0xff] %v1626
  %1755 = vst [vmem:[#allocation4 + $0x10] sm:$0xff] %v1665
  %1756 = vst [vmem:[#allocation4 + $0x18] sm:$0xff] %v1667
  %1757 = vst [vmem:[#allocation4 + $0x20] sm:$0xff] %v1706
  %1758 = vst [vmem:[#allocation4 + $0x28] sm:$0xff] %v1708
  %1759 = vst [vmem:[#allocation4 + $0x30] sm:$0xff] %v1747
  %1760 = vst [vmem:[#allocation4 + $0x38] sm:$0xff] %v1749
  %v1761 = vld [vmem:[%s7] sm:$0xff]
  %v1762 = vld [vmem:[%s7 + $0x8] sm:$0xff]
  %v1763 = vld [vmem:[%s7 + $0x10] sm:$0xff]
  %v1764 = vld [vmem:[%s7 + $0x18] sm:$0xff]
  %v1765 = vld [vmem:[#allocation2] sm:$0xff]
  %v1766 = vld [vmem:[#allocation2 + $0x8] sm:$0xff]
  %v1767 = vld [vmem:[#allocation2 + $0x10] sm:$0xf]
  %v1768 = vunpack.c.l.bf16 %v1765
  %v1769 = vunpack.c.h.bf16 %v1765
  %v1770 = vunpack.c.l.bf16 %v1766
  %v1771 = vunpack.c.h.bf16 %v1766
  %v1772 = vunpack.c.l.bf16 %v1767
  %1777 = vrot.lane.b32.xlu0 %v1761, 119
  %v1778 = vpop.permute.xlu0 %1777
  %1779 = vrot.lane.b32.xlu0 %v1762, 119
  %v1780 = vpop.permute.xlu0 %1779
  %1781 = vrot.lane.b32.xlu0 %v1763, 119
  %v1782 = vpop.permute.xlu0 %1781
  %1783 = vrot.lane.b32.xlu0 %v1764, 119
  %v1784 = vpop.permute.xlu0 %1783
  %vm1785 = vcmask 973824
  %v1786 = vsel %vm1785, %v1778, %v1780
  %v1787 = vsel %vm1785, %v1780, %v1782
  %v1788 = vsel %vm1785, %v1782, %v1784
  %v1794 = vmul.f32 %v1768, %v1778
  %v1795 = vmul.f32 %v1769, %v1786
  %v1796 = vmul.f32 %v1770, %v1787
  %v1797 = vmul.f32 %v1771, %v1788
  %v1798 = vmul.f32 %v1772, %v1784
  %v1799 = vpack.c.bf16 %v1794, %v1794
  %v1800 = vpack.c.bf16 %v1795, %v1795
  %v1801 = vpack.c.bf16 %v1796, %v1796
  %v1802 = vpack.c.bf16 %v1797, %v1797
  %v1803 = vpack.c.bf16 %v1798, %v1798
  %v1809 = vunpack.c.l.b16 %v1799
  %v1810 = vunpack.c.l.b16 %v1800
  %v1811 = vunpack.c.l.b16 %v1801
  %v1812 = vunpack.c.l.b16 %v1802
  %v1813 = vunpack.c.l.b16 %v1803
  %v1814 = vpack.c.b16 %v1810, %v1809
  %v1815 = vpack.c.b16 %v1812, %v1811
  %v1816 = vpack.c.b16 %v1813, %v1813
  %1817 = vrot.lane.b32.xlu0 %v1814, 9
  %v1818 = vpop.permute.xlu0 %1817
  %1819 = vrot.lane.b32.xlu0 %v1815, 9
  %v1820 = vpop.permute.xlu0 %1819
  %1821 = vrot.lane.b32.xlu0 %v1816, 9
  %v1822 = vpop.permute.xlu0 %1821
  %v1823 = vrot.slane %v1818, 4
  %v1824 = vrot.slane %v1820, 4
  %v1825 = vrot.slane %v1822, 4
  %v1826 = vsel %vm378, %v1823, %v1824
  %vm1827 = vcmask 72704
  %v1828 = vsel %vm1827, %v1818, %v1826
  %v1829 = vsel %vm378, %v1824, %v1825
  %v1830 = vsel %vm1827, %v1820, %v1829
  %1833 = vst [vmem:[#allocation3] sm:$0xff] %v1828
  %1834 = vst [vmem:[#allocation3 + $0x8] sm:$0xff] %v1830
  %v1835 = vld [vmem:[#allocation2 + $0x14] sm:$0xff]
  %v1836 = vld [vmem:[#allocation2 + $0x1c] sm:$0xff]
  %v1837 = vld [vmem:[#allocation2 + $0x24] sm:$0xf]
  %v1838 = vunpack.c.l.bf16 %v1835
  %v1839 = vunpack.c.h.bf16 %v1835
  %v1840 = vunpack.c.l.bf16 %v1836
  %v1841 = vunpack.c.h.bf16 %v1836
  %v1842 = vunpack.c.l.bf16 %v1837
  %v1843 = vmul.f32 %v1838, %v1778
  %v1844 = vmul.f32 %v1839, %v1786
  %v1845 = vmul.f32 %v1840, %v1787
  %v1846 = vmul.f32 %v1841, %v1788
  %v1847 = vmul.f32 %v1842, %v1784
  %v1848 = vpack.c.bf16 %v1843, %v1843
  %v1849 = vpack.c.bf16 %v1844, %v1844
  %v1850 = vpack.c.bf16 %v1845, %v1845
  %v1851 = vpack.c.bf16 %v1846, %v1846
  %v1852 = vpack.c.bf16 %v1847, %v1847
  %v1858 = vunpack.c.l.b16 %v1848
  %v1859 = vunpack.c.l.b16 %v1849
  %v1860 = vunpack.c.l.b16 %v1850
  %v1861 = vunpack.c.l.b16 %v1851
  %v1862 = vunpack.c.l.b16 %v1852
  %v1863 = vpack.c.b16 %v1859, %v1858
  %v1864 = vpack.c.b16 %v1861, %v1860
  %v1865 = vpack.c.b16 %v1862, %v1862
  %1866 = vrot.lane.b32.xlu0 %v1863, 9
  %v1867 = vpop.permute.xlu0 %1866
  %1868 = vrot.lane.b32.xlu0 %v1864, 9
  %v1869 = vpop.permute.xlu0 %1868
  %1870 = vrot.lane.b32.xlu0 %v1865, 9
  %v1871 = vpop.permute.xlu0 %1870
  %v1872 = vrot.slane %v1867, 4
  %v1873 = vrot.slane %v1869, 4
  %v1874 = vrot.slane %v1871, 4
  %v1875 = vsel %vm378, %v1872, %v1873
  %v1876 = vsel %vm1827, %v1867, %v1875
  %v1877 = vsel %vm378, %v1873, %v1874
  %v1878 = vsel %vm1827, %v1869, %v1877
  %1881 = vst [vmem:[#allocation3 + $0x10] sm:$0xff] %v1876
  %1882 = vst [vmem:[#allocation3 + $0x18] sm:$0xff] %v1878
  %v1883 = vld [vmem:[%s436] sm:$0xff]
  %v1884 = vld [vmem:[%s436 + $0x8] sm:$0xff]
  %v1885 = vld [vmem:[%s436 + $0x10] sm:$0xff]
  %v1886 = vld [vmem:[%s436 + $0x18] sm:$0xff]
  %v1887 = vld [vmem:[#allocation2] sm:$0xff]
  %v1888 = vld [vmem:[#allocation2 + $0x8] sm:$0xff]
  %v1889 = vld [vmem:[#allocation2 + $0x10] sm:$0xf]
  %v1890 = vunpack.c.l.bf16 %v1887
  %v1891 = vunpack.c.h.bf16 %v1887
  %v1892 = vunpack.c.l.bf16 %v1888
  %v1893 = vunpack.c.h.bf16 %v1888
  %v1894 = vunpack.c.l.bf16 %v1889
  %1899 = vrot.lane.b32.xlu0 %v1883, 120
  %v1900 = vpop.permute.xlu0 %1899
  %1901 = vrot.lane.b32.xlu0 %v1884, 120
  %v1902 = vpop.permute.xlu0 %1901
  %1903 = vrot.lane.b32.xlu0 %v1885, 120
  %v1904 = vpop.permute.xlu0 %1903
  %1905 = vrot.lane.b32.xlu0 %v1886, 120
  %v1906 = vpop.permute.xlu0 %1905
  %vm1907 = vcmask 982016
  %v1908 = vsel %vm1907, %v1900, %v1902
  %v1909 = vsel %vm1907, %v1902, %v1904
  %v1910 = vsel %vm1907, %v1904, %v1906
  %v1916 = vmul.f32 %v1890, %v1900
  %v1917 = vmul.f32 %v1891, %v1908
  %v1918 = vmul.f32 %v1892, %v1909
  %v1919 = vmul.f32 %v1893, %v1910
  %v1920 = vmul.f32 %v1894, %v1906
  %v1921 = vpack.c.bf16 %v1916, %v1916
  %v1922 = vpack.c.bf16 %v1917, %v1917
  %v1923 = vpack.c.bf16 %v1918, %v1918
  %v1924 = vpack.c.bf16 %v1919, %v1919
  %v1925 = vpack.c.bf16 %v1920, %v1920
  %v1931 = vunpack.c.l.b16 %v1921
  %v1932 = vunpack.c.l.b16 %v1922
  %v1933 = vunpack.c.l.b16 %v1923
  %v1934 = vunpack.c.l.b16 %v1924
  %v1935 = vunpack.c.l.b16 %v1925
  %v1936 = vpack.c.b16 %v1932, %v1931
  %v1937 = vpack.c.b16 %v1934, %v1933
  %v1938 = vpack.c.b16 %v1935, %v1935
  %1939 = vrot.lane.b32.xlu0 %v1936, 8
  %v1940 = vpop.permute.xlu0 %1939
  %1941 = vrot.lane.b32.xlu0 %v1937, 8
  %v1942 = vpop.permute.xlu0 %1941
  %1943 = vrot.lane.b32.xlu0 %v1938, 8
  %v1944 = vpop.permute.xlu0 %1943
  %v1945 = vrot.slane %v1940, 4
  %v1946 = vrot.slane %v1942, 4
  %v1947 = vrot.slane %v1944, 4
  %v1948 = vsel %vm378, %v1945, %v1946
  %vm1949 = vcmask 64512
  %v1950 = vsel %vm1949, %v1940, %v1948
  %v1951 = vsel %vm378, %v1946, %v1947
  %v1952 = vsel %vm1949, %v1942, %v1951
  %1955 = vst [vmem:[#allocation3 + $0x20] sm:$0xff] %v1950
  %1956 = vst [vmem:[#allocation3 + $0x28] sm:$0xff] %v1952
  %v1957 = vld [vmem:[#allocation2 + $0x14] sm:$0xff]
  %v1958 = vld [vmem:[#allocation2 + $0x1c] sm:$0xff]
  %v1959 = vld [vmem:[#allocation2 + $0x24] sm:$0xf]
  %v1960 = vunpack.c.l.bf16 %v1957
  %v1961 = vunpack.c.h.bf16 %v1957
  %v1962 = vunpack.c.l.bf16 %v1958
  %v1963 = vunpack.c.h.bf16 %v1958
  %v1964 = vunpack.c.l.bf16 %v1959
  %v1965 = vmul.f32 %v1960, %v1900
  %v1966 = vmul.f32 %v1961, %v1908
  %v1967 = vmul.f32 %v1962, %v1909
  %v1968 = vmul.f32 %v1963, %v1910
  %v1969 = vmul.f32 %v1964, %v1906
  %v1970 = vpack.c.bf16 %v1965, %v1965
  %v1971 = vpack.c.bf16 %v1966, %v1966
  %v1972 = vpack.c.bf16 %v1967, %v1967
  %v1973 = vpack.c.bf16 %v1968, %v1968
  %v1974 = vpack.c.bf16 %v1969, %v1969
  %v1980 = vunpack.c.l.b16 %v1970
  %v1981 = vunpack.c.l.b16 %v1971
  %v1982 = vunpack.c.l.b16 %v1972
  %v1983 = vunpack.c.l.b16 %v1973
  %v1984 = vunpack.c.l.b16 %v1974
  %v1985 = vpack.c.b16 %v1981, %v1980
  %v1986 = vpack.c.b16 %v1983, %v1982
  %v1987 = vpack.c.b16 %v1984, %v1984
  %1988 = vrot.lane.b32.xlu0 %v1985, 8
  %v1989 = vpop.permute.xlu0 %1988
  %1990 = vrot.lane.b32.xlu0 %v1986, 8
  %v1991 = vpop.permute.xlu0 %1990
  %1992 = vrot.lane.b32.xlu0 %v1987, 8
  %v1993 = vpop.permute.xlu0 %1992
  %v1994 = vrot.slane %v1989, 4
  %v1995 = vrot.slane %v1991, 4
  %v1996 = vrot.slane %v1993, 4
  %v1997 = vsel %vm378, %v1994, %v1995
  %v1998 = vsel %vm1949, %v1989, %v1997
  %v1999 = vsel %vm378, %v1995, %v1996
  %v2000 = vsel %vm1949, %v1991, %v1999
  %2003 = vst [vmem:[#allocation3 + $0x30] sm:$0xff] %v1998
  %2004 = vst [vmem:[#allocation3 + $0x38] sm:$0xff] %v2000
  %v2005 = vld [vmem:[%s559] sm:$0xff]
  %v2006 = vld [vmem:[%s559 + $0x8] sm:$0xff]
  %v2007 = vld [vmem:[%s559 + $0x10] sm:$0xff]
  %v2008 = vld [vmem:[%s559 + $0x18] sm:$0xff]
  %v2009 = vld [vmem:[#allocation2] sm:$0xff]
  %v2010 = vld [vmem:[#allocation2 + $0x8] sm:$0xff]
  %v2011 = vld [vmem:[#allocation2 + $0x10] sm:$0xf]
  %v2012 = vunpack.c.l.bf16 %v2009
  %v2013 = vunpack.c.h.bf16 %v2009
  %v2014 = vunpack.c.l.bf16 %v2010
  %v2015 = vunpack.c.h.bf16 %v2010
  %v2016 = vunpack.c.l.bf16 %v2011
  %2021 = vrot.lane.b32.xlu0 %v2005, 121
  %v2022 = vpop.permute.xlu0 %2021
  %2023 = vrot.lane.b32.xlu0 %v2006, 121
  %v2024 = vpop.permute.xlu0 %2023
  %2025 = vrot.lane.b32.xlu0 %v2007, 121
  %v2026 = vpop.permute.xlu0 %2025
  %2027 = vrot.lane.b32.xlu0 %v2008, 121
  %v2028 = vpop.permute.xlu0 %2027
  %vm2029 = vcmask 990208
  %v2030 = vsel %vm2029, %v2022, %v2024
  %v2031 = vsel %vm2029, %v2024, %v2026
  %v2032 = vsel %vm2029, %v2026, %v2028
  %v2038 = vmul.f32 %v2012, %v2022
  %v2039 = vmul.f32 %v2013, %v2030
  %v2040 = vmul.f32 %v2014, %v2031
  %v2041 = vmul.f32 %v2015, %v2032
  %v2042 = vmul.f32 %v2016, %v2028
  %v2043 = vpack.c.bf16 %v2038, %v2038
  %v2044 = vpack.c.bf16 %v2039, %v2039
  %v2045 = vpack.c.bf16 %v2040, %v2040
  %v2046 = vpack.c.bf16 %v2041, %v2041
  %v2047 = vpack.c.bf16 %v2042, %v2042
  %v2053 = vunpack.c.l.b16 %v2043
  %v2054 = vunpack.c.l.b16 %v2044
  %v2055 = vunpack.c.l.b16 %v2045
  %v2056 = vunpack.c.l.b16 %v2046
  %v2057 = vunpack.c.l.b16 %v2047
  %v2058 = vpack.c.b16 %v2054, %v2053
  %v2059 = vpack.c.b16 %v2056, %v2055
  %v2060 = vpack.c.b16 %v2057, %v2057
  %2061 = vrot.lane.b32.xlu0 %v2058, 7
  %v2062 = vpop.permute.xlu0 %2061
  %2063 = vrot.lane.b32.xlu0 %v2059, 7
  %v2064 = vpop.permute.xlu0 %2063
  %2065 = vrot.lane.b32.xlu0 %v2060, 7
  %v2066 = vpop.permute.xlu0 %2065
  %v2067 = vrot.slane %v2062, 4
  %v2068 = vrot.slane %v2064, 4
  %v2069 = vrot.slane %v2066, 4
  %v2070 = vsel %vm378, %v2067, %v2068
  %vm2071 = vcmask 56320
  %v2072 = vsel %vm2071, %v2062, %v2070
  %v2073 = vsel %vm378, %v2068, %v2069
  %v2074 = vsel %vm2071, %v2064, %v2073
  %2077 = vst [vmem:[#allocation3 + $0x40] sm:$0xff] %v2072
  %2078 = vst [vmem:[#allocation3 + $0x48] sm:$0xff] %v2074
  %v2079 = vld [vmem:[#allocation2 + $0x14] sm:$0xff]
  %v2080 = vld [vmem:[#allocation2 + $0x1c] sm:$0xff]
  %v2081 = vld [vmem:[#allocation2 + $0x24] sm:$0xf]
  %v2082 = vunpack.c.l.bf16 %v2079
  %v2083 = vunpack.c.h.bf16 %v2079
  %v2084 = vunpack.c.l.bf16 %v2080
  %v2085 = vunpack.c.h.bf16 %v2080
  %v2086 = vunpack.c.l.bf16 %v2081
  %v2087 = vmul.f32 %v2082, %v2022
  %v2088 = vmul.f32 %v2083, %v2030
  %v2089 = vmul.f32 %v2084, %v2031
  %v2090 = vmul.f32 %v2085, %v2032
  %v2091 = vmul.f32 %v2086, %v2028
  %v2092 = vpack.c.bf16 %v2087, %v2087
  %v2093 = vpack.c.bf16 %v2088, %v2088
  %v2094 = vpack.c.bf16 %v2089, %v2089
  %v2095 = vpack.c.bf16 %v2090, %v2090
  %v2096 = vpack.c.bf16 %v2091, %v2091
  %v2102 = vunpack.c.l.b16 %v2092
  %v2103 = vunpack.c.l.b16 %v2093
  %v2104 = vunpack.c.l.b16 %v2094
  %v2105 = vunpack.c.l.b16 %v2095
  %v2106 = vunpack.c.l.b16 %v2096
  %v2107 = vpack.c.b16 %v2103, %v2102
  %v2108 = vpack.c.b16 %v2105, %v2104
  %v2109 = vpack.c.b16 %v2106, %v2106
  %2110 = vrot.lane.b32.xlu0 %v2107, 7
  %v2111 = vpop.permute.xlu0 %2110
  %2112 = vrot.lane.b32.xlu0 %v2108, 7
  %v2113 = vpop.permute.xlu0 %2112
  %2114 = vrot.lane.b32.xlu0 %v2109, 7
  %v2115 = vpop.permute.xlu0 %2114
  %v2116 = vrot.slane %v2111, 4
  %v2117 = vrot.slane %v2113, 4
  %v2118 = vrot.slane %v2115, 4
  %v2119 = vsel %vm378, %v2116, %v2117
  %v2120 = vsel %vm2071, %v2111, %v2119
  %v2121 = vsel %vm378, %v2117, %v2118
  %v2122 = vsel %vm2071, %v2113, %v2121
  %2125 = vst [vmem:[#allocation3 + $0x50] sm:$0xff] %v2120
  %2126 = vst [vmem:[#allocation3 + $0x58] sm:$0xff] %v2122
  %v2127 = vld [vmem:[%s682] sm:$0xff]
  %v2128 = vld [vmem:[%s682 + $0x8] sm:$0xff]
  %v2129 = vld [vmem:[%s682 + $0x10] sm:$0xff]
  %v2130 = vld [vmem:[%s682 + $0x18] sm:$0xff]
  %v2131 = vld [vmem:[#allocation2] sm:$0xff]
  %v2132 = vld [vmem:[#allocation2 + $0x8] sm:$0xff]
  %v2133 = vld [vmem:[#allocation2 + $0x10] sm:$0xf]
  %v2134 = vunpack.c.l.bf16 %v2131
  %v2135 = vunpack.c.h.bf16 %v2131
  %v2136 = vunpack.c.l.bf16 %v2132
  %v2137 = vunpack.c.h.bf16 %v2132
  %v2138 = vunpack.c.l.bf16 %v2133
  %2143 = vrot.lane.b32.xlu0 %v2127, 127
  %v2144 = vpop.permute.xlu0 %2143
  %2145 = vrot.lane.b32.xlu0 %v2128, 127
  %v2146 = vpop.permute.xlu0 %2145
  %2147 = vrot.lane.b32.xlu0 %v2129, 127
  %v2148 = vpop.permute.xlu0 %2147
  %2149 = vrot.lane.b32.xlu0 %v2130, 127
  %v2150 = vpop.permute.xlu0 %2149
  %vm2151 = vcmask 1039360
  %v2152 = vsel %vm2151, %v2144, %v2146
  %v2153 = vsel %vm2151, %v2146, %v2148
  %v2154 = vsel %vm2151, %v2148, %v2150
  %v2160 = vmul.f32 %v2134, %v2144
  %v2161 = vmul.f32 %v2135, %v2152
  %v2162 = vmul.f32 %v2136, %v2153
  %v2163 = vmul.f32 %v2137, %v2154
  %v2164 = vmul.f32 %v2138, %v2150
  %v2165 = vpack.c.bf16 %v2160, %v2160
  %v2166 = vpack.c.bf16 %v2161, %v2161
  %v2167 = vpack.c.bf16 %v2162, %v2162
  %v2168 = vpack.c.bf16 %v2163, %v2163
  %v2169 = vpack.c.bf16 %v2164, %v2164
  %v2175 = vunpack.c.l.b16 %v2165
  %v2176 = vunpack.c.l.b16 %v2166
  %v2177 = vunpack.c.l.b16 %v2167
  %v2178 = vunpack.c.l.b16 %v2168
  %v2179 = vunpack.c.l.b16 %v2169
  %v2180 = vpack.c.b16 %v2176, %v2175
  %v2181 = vpack.c.b16 %v2178, %v2177
  %v2182 = vpack.c.b16 %v2179, %v2179
  %2183 = vrot.lane.b32.xlu0 %v2180, 1
  %v2184 = vpop.permute.xlu0 %2183
  %2185 = vrot.lane.b32.xlu0 %v2181, 1
  %v2186 = vpop.permute.xlu0 %2185
  %2187 = vrot.lane.b32.xlu0 %v2182, 1
  %v2188 = vpop.permute.xlu0 %2187
  %v2189 = vrot.slane %v2184, 4
  %v2190 = vrot.slane %v2186, 4
  %v2191 = vrot.slane %v2188, 4
  %v2192 = vsel %vm378, %v2189, %v2190
  %vm2193 = vcmask 7168
  %v2194 = vsel %vm2193, %v2184, %v2192
  %v2195 = vsel %vm378, %v2190, %v2191
  %v2196 = vsel %vm2193, %v2186, %v2195
  %2199 = vst [vmem:[#allocation3 + $0x60] sm:$0xff] %v2194
  %2200 = vst [vmem:[#allocation3 + $0x68] sm:$0xff] %v2196
  %v2201 = vld [vmem:[#allocation2 + $0x14] sm:$0xff]
  %v2202 = vld [vmem:[#allocation2 + $0x1c] sm:$0xff]
  %v2203 = vld [vmem:[#allocation2 + $0x24] sm:$0xf]
  %v2204 = vunpack.c.l.bf16 %v2201
  %v2205 = vunpack.c.h.bf16 %v2201
  %v2206 = vunpack.c.l.bf16 %v2202
  %v2207 = vunpack.c.h.bf16 %v2202
  %v2208 = vunpack.c.l.bf16 %v2203
  %v2209 = vmul.f32 %v2204, %v2144
  %v2210 = vmul.f32 %v2205, %v2152
  %v2211 = vmul.f32 %v2206, %v2153
  %v2212 = vmul.f32 %v2207, %v2154
  %v2213 = vmul.f32 %v2208, %v2150
  %v2214 = vpack.c.bf16 %v2209, %v2209
  %v2215 = vpack.c.bf16 %v2210, %v2210
  %v2216 = vpack.c.bf16 %v2211, %v2211
  %v2217 = vpack.c.bf16 %v2212, %v2212
  %v2218 = vpack.c.bf16 %v2213, %v2213
  %v2224 = vunpack.c.l.b16 %v2214
  %v2225 = vunpack.c.l.b16 %v2215
  %v2226 = vunpack.c.l.b16 %v2216
  %v2227 = vunpack.c.l.b16 %v2217
  %v2228 = vunpack.c.l.b16 %v2218
  %v2229 = vpack.c.b16 %v2225, %v2224
  %v2230 = vpack.c.b16 %v2227, %v2226
  %v2231 = vpack.c.b16 %v2228, %v2228
  %2232 = vrot.lane.b32.xlu0 %v2229, 1
  %v2233 = vpop.permute.xlu0 %2232
  %2234 = vrot.lane.b32.xlu0 %v2230, 1
  %v2235 = vpop.permute.xlu0 %2234
  %2236 = vrot.lane.b32.xlu0 %v2231, 1
  %v2237 = vpop.permute.xlu0 %2236
  %v2238 = vrot.slane %v2233, 4
  %v2239 = vrot.slane %v2235, 4
  %v2240 = vrot.slane %v2237, 4
  %v2241 = vsel %vm378, %v2238, %v2239
  %v2242 = vsel %vm2193, %v2233, %v2241
  %v2243 = vsel %vm378, %v2239, %v2240
  %v2244 = vsel %vm2193, %v2235, %v2243
  %2247 = vst [vmem:[#allocation3 + $0x70] sm:$0xff] %v2242
  %2248 = vst [vmem:[#allocation3 + $0x78] sm:$0xff] %v2244
  %v2249 = vld [vmem:[#allocation2 + $0x4] sm:$0xff]
  %v2250 = vld [vmem:[#allocation2 + $0xc] sm:$0xff]
  %2251 = vst [vmem:[#allocation3 + $0x80] sm:$0xff] %v2249
  %2252 = vst [vmem:[#allocation3 + $0x88] sm:$0xff] %v2250
  %v2253 = vld [vmem:[#allocation2 + $0x18] sm:$0xff]
  %v2254 = vld [vmem:[#allocation2 + $0x20] sm:$0xff]
  %2255 = vst [vmem:[#allocation3 + $0x90] sm:$0xff] %v2253
  %2256 = vst [vmem:[#allocation3 + $0x98] sm:$0xff] %v2254
  %v2257 = vld [vmem:[%s852] sm:$0xff]
  %v2258 = vld [vmem:[%s852 + $0x8] sm:$0xff]
  %v2259 = vld [vmem:[%s852 + $0x10] sm:$0xff]
  %v2260 = vld [vmem:[%s852 + $0x18] sm:$0xff]
  %v2261 = vld [vmem:[#allocation2 + $0x4] sm:$0xff]
  %v2262 = vld [vmem:[#allocation2 + $0xc] sm:$0xff]
  %v2263 = vld [vmem:[#allocation2 + $0x14] sm:$0xf]
  %v2264 = vunpack.c.l.bf16 %v2261
  %v2265 = vunpack.c.h.bf16 %v2261
  %v2266 = vunpack.c.l.bf16 %v2262
  %v2267 = vunpack.c.h.bf16 %v2262
  %v2268 = vunpack.c.l.bf16 %v2263
  %2273 = vrot.lane.b32.xlu0 %v2257, 1
  %v2274 = vpop.permute.xlu0 %2273
  %2275 = vrot.lane.b32.xlu0 %v2258, 1
  %v2276 = vpop.permute.xlu0 %2275
  %2277 = vrot.lane.b32.xlu0 %v2259, 1
  %v2278 = vpop.permute.xlu0 %2277
  %2279 = vrot.lane.b32.xlu0 %v2260, 1
  %v2280 = vpop.permute.xlu0 %2279
  %vm2281 = vcmask 7168
  %v2282 = vsel %vm2281, %v2274, %v2276
  %v2283 = vsel %vm2281, %v2276, %v2278
  %v2284 = vsel %vm2281, %v2278, %v2280
  %v2290 = vmul.f32 %v2264, %v2274
  %v2291 = vmul.f32 %v2265, %v2282
  %v2292 = vmul.f32 %v2266, %v2283
  %v2293 = vmul.f32 %v2267, %v2284
  %v2294 = vmul.f32 %v2268, %v2280
  %v2295 = vpack.c.bf16 %v2290, %v2290
  %v2296 = vpack.c.bf16 %v2291, %v2291
  %v2297 = vpack.c.bf16 %v2292, %v2292
  %v2298 = vpack.c.bf16 %v2293, %v2293
  %v2299 = vpack.c.bf16 %v2294, %v2294
  %v2305 = vunpack.c.l.b16 %v2295
  %v2306 = vunpack.c.l.b16 %v2296
  %v2307 = vunpack.c.l.b16 %v2297
  %v2308 = vunpack.c.l.b16 %v2298
  %v2309 = vunpack.c.l.b16 %v2299
  %v2310 = vpack.c.b16 %v2306, %v2305
  %v2311 = vpack.c.b16 %v2308, %v2307
  %v2312 = vpack.c.b16 %v2309, %v2309
  %2313 = vrot.lane.b32.xlu0 %v2310, 127
  %v2314 = vpop.permute.xlu0 %2313
  %2315 = vrot.lane.b32.xlu0 %v2311, 127
  %v2316 = vpop.permute.xlu0 %2315
  %2317 = vrot.lane.b32.xlu0 %v2312, 127
  %v2318 = vpop.permute.xlu0 %2317
  %v2319 = vrot.slane %v2314, 4
  %v2320 = vrot.slane %v2316, 4
  %v2321 = vrot.slane %v2318, 4
  %v2322 = vsel %vm378, %v2319, %v2320
  %vm2323 = vcmask 1039360
  %v2324 = vsel %vm2323, %v2314, %v2322
  %v2325 = vsel %vm378, %v2320, %v2321
  %v2326 = vsel %vm2323, %v2316, %v2325
  %2329 = vst [vmem:[#allocation3 + $0xa0] sm:$0xff] %v2324
  %2330 = vst [vmem:[#allocation3 + $0xa8] sm:$0xff] %v2326
  %v2331 = vld [vmem:[#allocation2 + $0x18] sm:$0xff]
  %v2332 = vld [vmem:[#allocation2 + $0x20] sm:$0xff]
  %v2333 = vld [vmem:[#allocation2 + $0x28] sm:$0xf]
  %v2334 = vunpack.c.l.bf16 %v2331
  %v2335 = vunpack.c.h.bf16 %v2331
  %v2336 = vunpack.c.l.bf16 %v2332
  %v2337 = vunpack.c.h.bf16 %v2332
  %v2338 = vunpack.c.l.bf16 %v2333
  %v2339 = vmul.f32 %v2334, %v2274
  %v2340 = vmul.f32 %v2335, %v2282
  %v2341 = vmul.f32 %v2336, %v2283
  %v2342 = vmul.f32 %v2337, %v2284
  %v2343 = vmul.f32 %v2338, %v2280
  %v2344 = vpack.c.bf16 %v2339, %v2339
  %v2345 = vpack.c.bf16 %v2340, %v2340
  %v2346 = vpack.c.bf16 %v2341, %v2341
  %v2347 = vpack.c.bf16 %v2342, %v2342
  %v2348 = vpack.c.bf16 %v2343, %v2343
  %v2354 = vunpack.c.l.b16 %v2344
  %v2355 = vunpack.c.l.b16 %v2345
  %v2356 = vunpack.c.l.b16 %v2346
  %v2357 = vunpack.c.l.b16 %v2347
  %v2358 = vunpack.c.l.b16 %v2348
  %v2359 = vpack.c.b16 %v2355, %v2354
  %v2360 = vpack.c.b16 %v2357, %v2356
  %v2361 = vpack.c.b16 %v2358, %v2358
  %2362 = vrot.lane.b32.xlu0 %v2359, 127
  %v2363 = vpop.permute.xlu0 %2362
  %2364 = vrot.lane.b32.xlu0 %v2360, 127
  %v2365 = vpop.permute.xlu0 %2364
  %2366 = vrot.lane.b32.xlu0 %v2361, 127
  %v2367 = vpop.permute.xlu0 %2366
  %v2368 = vrot.slane %v2363, 4
  %v2369 = vrot.slane %v2365, 4
  %v2370 = vrot.slane %v2367, 4
  %v2371 = vsel %vm378, %v2368, %v2369
  %v2372 = vsel %vm2323, %v2363, %v2371
  %v2373 = vsel %vm378, %v2369, %v2370
  %v2374 = vsel %vm2323, %v2365, %v2373
  %2377 = vst [vmem:[#allocation3 + $0xb0] sm:$0xff] %v2372
  %2378 = vst [vmem:[#allocation3 + $0xb8] sm:$0xff] %v2374
  %v2379 = vld [vmem:[%s975] sm:$0xff]
  %v2380 = vld [vmem:[%s975 + $0x8] sm:$0xff]
  %v2381 = vld [vmem:[%s975 + $0x10] sm:$0xff]
  %v2382 = vld [vmem:[%s975 + $0x18] sm:$0xff]
  %v2383 = vld [vmem:[#allocation2 + $0x4] sm:$0xff]
  %v2384 = vld [vmem:[#allocation2 + $0xc] sm:$0xff]
  %v2385 = vld [vmem:[#allocation2 + $0x14] sm:$0xf]
  %v2386 = vunpack.c.l.bf16 %v2383
  %v2387 = vunpack.c.h.bf16 %v2383
  %v2388 = vunpack.c.l.bf16 %v2384
  %v2389 = vunpack.c.h.bf16 %v2384
  %v2390 = vunpack.c.l.bf16 %v2385
  %2395 = vrot.lane.b32.xlu0 %v2379, 7
  %v2396 = vpop.permute.xlu0 %2395
  %2397 = vrot.lane.b32.xlu0 %v2380, 7
  %v2398 = vpop.permute.xlu0 %2397
  %2399 = vrot.lane.b32.xlu0 %v2381, 7
  %v2400 = vpop.permute.xlu0 %2399
  %2401 = vrot.lane.b32.xlu0 %v2382, 7
  %v2402 = vpop.permute.xlu0 %2401
  %vm2403 = vcmask 56320
  %v2404 = vsel %vm2403, %v2396, %v2398
  %v2405 = vsel %vm2403, %v2398, %v2400
  %v2406 = vsel %vm2403, %v2400, %v2402
  %v2412 = vmul.f32 %v2386, %v2396
  %v2413 = vmul.f32 %v2387, %v2404
  %v2414 = vmul.f32 %v2388, %v2405
  %v2415 = vmul.f32 %v2389, %v2406
  %v2416 = vmul.f32 %v2390, %v2402
  %v2417 = vpack.c.bf16 %v2412, %v2412
  %v2418 = vpack.c.bf16 %v2413, %v2413
  %v2419 = vpack.c.bf16 %v2414, %v2414
  %v2420 = vpack.c.bf16 %v2415, %v2415
  %v2421 = vpack.c.bf16 %v2416, %v2416
  %v2427 = vunpack.c.l.b16 %v2417
  %v2428 = vunpack.c.l.b16 %v2418
  %v2429 = vunpack.c.l.b16 %v2419
  %v2430 = vunpack.c.l.b16 %v2420
  %v2431 = vunpack.c.l.b16 %v2421
  %v2432 = vpack.c.b16 %v2428, %v2427
  %v2433 = vpack.c.b16 %v2430, %v2429
  %v2434 = vpack.c.b16 %v2431, %v2431
  %2435 = vrot.lane.b32.xlu0 %v2432, 121
  %v2436 = vpop.permute.xlu0 %2435
  %2437 = vrot.lane.b32.xlu0 %v2433, 121
  %v2438 = vpop.permute.xlu0 %2437
  %2439 = vrot.lane.b32.xlu0 %v2434, 121
  %v2440 = vpop.permute.xlu0 %2439
  %v2441 = vrot.slane %v2436, 4
  %v2442 = vrot.slane %v2438, 4
  %v2443 = vrot.slane %v2440, 4
  %v2444 = vsel %vm378, %v2441, %v2442
  %vm2445 = vcmask 990208
  %v2446 = vsel %vm2445, %v2436, %v2444
  %v2447 = vsel %vm378, %v2442, %v2443
  %v2448 = vsel %vm2445, %v2438, %v2447
  %2451 = vst [vmem:[#allocation3 + $0xc0] sm:$0xff] %v2446
  %2452 = vst [vmem:[#allocation3 + $0xc8] sm:$0xff] %v2448
  %v2453 = vld [vmem:[#allocation2 + $0x18] sm:$0xff]
  %v2454 = vld [vmem:[#allocation2 + $0x20] sm:$0xff]
  %v2455 = vld [vmem:[#allocation2 + $0x28] sm:$0xf]
  %v2456 = vunpack.c.l.bf16 %v2453
  %v2457 = vunpack.c.h.bf16 %v2453
  %v2458 = vunpack.c.l.bf16 %v2454
  %v2459 = vunpack.c.h.bf16 %v2454
  %v2460 = vunpack.c.l.bf16 %v2455
  %v2461 = vmul.f32 %v2456, %v2396
  %v2462 = vmul.f32 %v2457, %v2404
  %v2463 = vmul.f32 %v2458, %v2405
  %v2464 = vmul.f32 %v2459, %v2406
  %v2465 = vmul.f32 %v2460, %v2402
  %v2466 = vpack.c.bf16 %v2461, %v2461
  %v2467 = vpack.c.bf16 %v2462, %v2462
  %v2468 = vpack.c.bf16 %v2463, %v2463
  %v2469 = vpack.c.bf16 %v2464, %v2464
  %v2470 = vpack.c.bf16 %v2465, %v2465
  %v2476 = vunpack.c.l.b16 %v2466
  %v2477 = vunpack.c.l.b16 %v2467
  %v2478 = vunpack.c.l.b16 %v2468
  %v2479 = vunpack.c.l.b16 %v2469
  %v2480 = vunpack.c.l.b16 %v2470
  %v2481 = vpack.c.b16 %v2477, %v2476
  %v2482 = vpack.c.b16 %v2479, %v2478
  %v2483 = vpack.c.b16 %v2480, %v2480
  %2484 = vrot.lane.b32.xlu0 %v2481, 121
  %v2485 = vpop.permute.xlu0 %2484
  %2486 = vrot.lane.b32.xlu0 %v2482, 121
  %v2487 = vpop.permute.xlu0 %2486
  %2488 = vrot.lane.b32.xlu0 %v2483, 121
  %v2489 = vpop.permute.xlu0 %2488
  %v2490 = vrot.slane %v2485, 4
  %v2491 = vrot.slane %v2487, 4
  %v2492 = vrot.slane %v2489, 4
  %v2493 = vsel %vm378, %v2490, %v2491
  %v2494 = vsel %vm2445, %v2485, %v2493
  %v2495 = vsel %vm378, %v2491, %v2492
  %v2496 = vsel %vm2445, %v2487, %v2495
  %2499 = vst [vmem:[#allocation3 + $0xd0] sm:$0xff] %v2494
  %2500 = vst [vmem:[#allocation3 + $0xd8] sm:$0xff] %v2496
  %v2501 = vld [vmem:[%s1098] sm:$0xff]
  %v2502 = vld [vmem:[%s1098 + $0x8] sm:$0xff]
  %v2503 = vld [vmem:[%s1098 + $0x10] sm:$0xff]
  %v2504 = vld [vmem:[%s1098 + $0x18] sm:$0xff]
  %v2505 = vld [vmem:[#allocation2 + $0x4] sm:$0xff]
  %v2506 = vld [vmem:[#allocation2 + $0xc] sm:$0xff]
  %v2507 = vld [vmem:[#allocation2 + $0x14] sm:$0xf]
  %v2508 = vunpack.c.l.bf16 %v2505
  %v2509 = vunpack.c.h.bf16 %v2505
  %v2510 = vunpack.c.l.bf16 %v2506
  %v2511 = vunpack.c.h.bf16 %v2506
  %v2512 = vunpack.c.l.bf16 %v2507
  %2517 = vrot.lane.b32.xlu0 %v2501, 8
  %v2518 = vpop.permute.xlu0 %2517
  %2519 = vrot.lane.b32.xlu0 %v2502, 8
  %v2520 = vpop.permute.xlu0 %2519
  %2521 = vrot.lane.b32.xlu0 %v2503, 8
  %v2522 = vpop.permute.xlu0 %2521
  %2523 = vrot.lane.b32.xlu0 %v2504, 8
  %v2524 = vpop.permute.xlu0 %2523
  %vm2525 = vcmask 64512
  %v2526 = vsel %vm2525, %v2518, %v2520
  %v2527 = vsel %vm2525, %v2520, %v2522
  %v2528 = vsel %vm2525, %v2522, %v2524
  %v2534 = vmul.f32 %v2508, %v2518
  %v2535 = vmul.f32 %v2509, %v2526
  %v2536 = vmul.f32 %v2510, %v2527
  %v2537 = vmul.f32 %v2511, %v2528
  %v2538 = vmul.f32 %v2512, %v2524
  %v2539 = vpack.c.bf16 %v2534, %v2534
  %v2540 = vpack.c.bf16 %v2535, %v2535
  %v2541 = vpack.c.bf16 %v2536, %v2536
  %v2542 = vpack.c.bf16 %v2537, %v2537
  %v2543 = vpack.c.bf16 %v2538, %v2538
  %v2549 = vunpack.c.l.b16 %v2539
  %v2550 = vunpack.c.l.b16 %v2540
  %v2551 = vunpack.c.l.b16 %v2541
  %v2552 = vunpack.c.l.b16 %v2542
  %v2553 = vunpack.c.l.b16 %v2543
  %v2554 = vpack.c.b16 %v2550, %v2549
  %v2555 = vpack.c.b16 %v2552, %v2551
  %v2556 = vpack.c.b16 %v2553, %v2553
  %2557 = vrot.lane.b32.xlu0 %v2554, 120
  %v2558 = vpop.permute.xlu0 %2557
  %2559 = vrot.lane.b32.xlu0 %v2555, 120
  %v2560 = vpop.permute.xlu0 %2559
  %2561 = vrot.lane.b32.xlu0 %v2556, 120
  %v2562 = vpop.permute.xlu0 %2561
  %v2563 = vrot.slane %v2558, 4
  %v2564 = vrot.slane %v2560, 4
  %v2565 = vrot.slane %v2562, 4
  %v2566 = vsel %vm378, %v2563, %v2564
  %vm2567 = vcmask 982016
  %v2568 = vsel %vm2567, %v2558, %v2566
  %v2569 = vsel %vm378, %v2564, %v2565
  %v2570 = vsel %vm2567, %v2560, %v2569
  %2573 = vst [vmem:[#allocation3 + $0xe0] sm:$0xff] %v2568
  %2574 = vst [vmem:[#allocation3 + $0xe8] sm:$0xff] %v2570
  %v2575 = vld [vmem:[#allocation2 + $0x18] sm:$0xff]
  %v2576 = vld [vmem:[#allocation2 + $0x20] sm:$0xff]
  %v2577 = vld [vmem:[#allocation2 + $0x28] sm:$0xf]
  %v2578 = vunpack.c.l.bf16 %v2575
  %v2579 = vunpack.c.h.bf16 %v2575
  %v2580 = vunpack.c.l.bf16 %v2576
  %v2581 = vunpack.c.h.bf16 %v2576
  %v2582 = vunpack.c.l.bf16 %v2577
  %v2583 = vmul.f32 %v2578, %v2518
  %v2584 = vmul.f32 %v2579, %v2526
  %v2585 = vmul.f32 %v2580, %v2527
  %v2586 = vmul.f32 %v2581, %v2528
  %v2587 = vmul.f32 %v2582, %v2524
  %v2588 = vpack.c.bf16 %v2583, %v2583
  %v2589 = vpack.c.bf16 %v2584, %v2584
  %v2590 = vpack.c.bf16 %v2585, %v2585
  %v2591 = vpack.c.bf16 %v2586, %v2586
  %v2592 = vpack.c.bf16 %v2587, %v2587
  %v2598 = vunpack.c.l.b16 %v2588
  %v2599 = vunpack.c.l.b16 %v2589
  %v2600 = vunpack.c.l.b16 %v2590
  %v2601 = vunpack.c.l.b16 %v2591
  %v2602 = vunpack.c.l.b16 %v2592
  %v2603 = vpack.c.b16 %v2599, %v2598
  %v2604 = vpack.c.b16 %v2601, %v2600
  %v2605 = vpack.c.b16 %v2602, %v2602
  %2606 = vrot.lane.b32.xlu0 %v2603, 120
  %v2607 = vpop.permute.xlu0 %2606
  %2608 = vrot.lane.b32.xlu0 %v2604, 120
  %v2609 = vpop.permute.xlu0 %2608
  %2610 = vrot.lane.b32.xlu0 %v2605, 120
  %v2611 = vpop.permute.xlu0 %2610
  %v2612 = vrot.slane %v2607, 4
  %v2613 = vrot.slane %v2609, 4
  %v2614 = vrot.slane %v2611, 4
  %v2615 = vsel %vm378, %v2612, %v2613
  %v2616 = vsel %vm2567, %v2607, %v2615
  %v2617 = vsel %vm378, %v2613, %v2614
  %v2618 = vsel %vm2567, %v2609, %v2617
  %2621 = vst [vmem:[#allocation3 + $0xf0] sm:$0xff] %v2616
  %2622 = vst [vmem:[#allocation3 + $0xf8] sm:$0xff] %v2618
  %v2623 = vld [vmem:[%s1221] sm:$0xff]
  %v2624 = vld [vmem:[%s1221 + $0x8] sm:$0xff]
  %v2625 = vld [vmem:[%s1221 + $0x10] sm:$0xff]
  %v2626 = vld [vmem:[%s1221 + $0x18] sm:$0xff]
  %v2627 = vld [vmem:[#allocation2 + $0x4] sm:$0xff]
  %v2628 = vld [vmem:[#allocation2 + $0xc] sm:$0xff]
  %v2629 = vld [vmem:[#allocation2 + $0x14] sm:$0xf]
  %v2630 = vunpack.c.l.bf16 %v2627
  %v2631 = vunpack.c.h.bf16 %v2627
  %v2632 = vunpack.c.l.bf16 %v2628
  %v2633 = vunpack.c.h.bf16 %v2628
  %v2634 = vunpack.c.l.bf16 %v2629
  %2639 = vrot.lane.b32.xlu0 %v2623, 9
  %v2640 = vpop.permute.xlu0 %2639
  %2641 = vrot.lane.b32.xlu0 %v2624, 9
  %v2642 = vpop.permute.xlu0 %2641
  %2643 = vrot.lane.b32.xlu0 %v2625, 9
  %v2644 = vpop.permute.xlu0 %2643
  %2645 = vrot.lane.b32.xlu0 %v2626, 9
  %v2646 = vpop.permute.xlu0 %2645
  %vm2647 = vcmask 72704
  %v2648 = vsel %vm2647, %v2640, %v2642
  %v2649 = vsel %vm2647, %v2642, %v2644
  %v2650 = vsel %vm2647, %v2644, %v2646
  %v2656 = vmul.f32 %v2630, %v2640
  %v2657 = vmul.f32 %v2631, %v2648
  %v2658 = vmul.f32 %v2632, %v2649
  %v2659 = vmul.f32 %v2633, %v2650
  %v2660 = vmul.f32 %v2634, %v2646
  %v2661 = vpack.c.bf16 %v2656, %v2656
  %v2662 = vpack.c.bf16 %v2657, %v2657
  %v2663 = vpack.c.bf16 %v2658, %v2658
  %v2664 = vpack.c.bf16 %v2659, %v2659
  %v2665 = vpack.c.bf16 %v2660, %v2660
  %v2671 = vunpack.c.l.b16 %v2661
  %v2672 = vunpack.c.l.b16 %v2662
  %v2673 = vunpack.c.l.b16 %v2663
  %v2674 = vunpack.c.l.b16 %v2664
  %v2675 = vunpack.c.l.b16 %v2665
  %v2676 = vpack.c.b16 %v2672, %v2671
  %v2677 = vpack.c.b16 %v2674, %v2673
  %v2678 = vpack.c.b16 %v2675, %v2675
  %2679 = vrot.lane.b32.xlu0 %v2676, 119
  %v2680 = vpop.permute.xlu0 %2679
  %2681 = vrot.lane.b32.xlu0 %v2677, 119
  %v2682 = vpop.permute.xlu0 %2681
  %2683 = vrot.lane.b32.xlu0 %v2678, 119
  %v2684 = vpop.permute.xlu0 %2683
  %v2685 = vrot.slane %v2680, 4
  %v2686 = vrot.slane %v2682, 4
  %v2687 = vrot.slane %v2684, 4
  %v2688 = vsel %vm378, %v2685, %v2686
  %vm2689 = vcmask 973824
  %v2690 = vsel %vm2689, %v2680, %v2688
  %v2691 = vsel %vm378, %v2686, %v2687
  %v2692 = vsel %vm2689, %v2682, %v2691
  %2695 = vst [vmem:[#allocation3 + $0x100] sm:$0xff] %v2690
  %2696 = vst [vmem:[#allocation3 + $0x108] sm:$0xff] %v2692
  %v2697 = vld [vmem:[#allocation2 + $0x18] sm:$0xff]
  %v2698 = vld [vmem:[#allocation2 + $0x20] sm:$0xff]
  %v2699 = vld [vmem:[#allocation2 + $0x28] sm:$0xf]
  %v2700 = vunpack.c.l.bf16 %v2697
  %v2701 = vunpack.c.h.bf16 %v2697
  %v2702 = vunpack.c.l.bf16 %v2698
  %v2703 = vunpack.c.h.bf16 %v2698
  %v2704 = vunpack.c.l.bf16 %v2699
  %v2705 = vmul.f32 %v2700, %v2640
  %v2706 = vmul.f32 %v2701, %v2648
  %v2707 = vmul.f32 %v2702, %v2649
  %v2708 = vmul.f32 %v2703, %v2650
  %v2709 = vmul.f32 %v2704, %v2646
  %v2710 = vpack.c.bf16 %v2705, %v2705
  %v2711 = vpack.c.bf16 %v2706, %v2706
  %v2712 = vpack.c.bf16 %v2707, %v2707
  %v2713 = vpack.c.bf16 %v2708, %v2708
  %v2714 = vpack.c.bf16 %v2709, %v2709
  %v2720 = vunpack.c.l.b16 %v2710
  %v2721 = vunpack.c.l.b16 %v2711
  %v2722 = vunpack.c.l.b16 %v2712
  %v2723 = vunpack.c.l.b16 %v2713
  %v2724 = vunpack.c.l.b16 %v2714
  %v2725 = vpack.c.b16 %v2721, %v2720
  %v2726 = vpack.c.b16 %v2723, %v2722
  %v2727 = vpack.c.b16 %v2724, %v2724
  %2728 = vrot.lane.b32.xlu0 %v2725, 119
  %v2729 = vpop.permute.xlu0 %2728
  %2730 = vrot.lane.b32.xlu0 %v2726, 119
  %v2731 = vpop.permute.xlu0 %2730
  %2732 = vrot.lane.b32.xlu0 %v2727, 119
  %v2733 = vpop.permute.xlu0 %2732
  %v2734 = vrot.slane %v2729, 4
  %v2735 = vrot.slane %v2731, 4
  %v2736 = vrot.slane %v2733, 4
  %v2737 = vsel %vm378, %v2734, %v2735
  %v2738 = vsel %vm2689, %v2729, %v2737
  %v2739 = vsel %vm378, %v2735, %v2736
  %v2740 = vsel %vm2689, %v2731, %v2739
  %2743 = vst [vmem:[#allocation3 + $0x110] sm:$0xff] %v2738
  %2744 = vst [vmem:[#allocation3 + $0x118] sm:$0xff] %v2740
  %s2745 = scalar_lea.vmem %s3, 4
  %v2746 = vld [vmem:[%s2745] sm:$0xf]
  %v2747 = vld [vmem:[#allocation3] sm:$0xff]
  %v2748 = vld [vmem:[#allocation3 + $0x8] sm:$0xff]
  %v2749 = vld [vmem:[#allocation3 + $0x10] sm:$0xff]
  %v2750 = vld [vmem:[#allocation3 + $0x18] sm:$0xff]
  %v2751 = vld [vmem:[#allocation3 + $0x20] sm:$0xff]
  %v2752 = vld [vmem:[#allocation3 + $0x28] sm:$0xff]
  %v2753 = vld [vmem:[#allocation3 + $0x30] sm:$0xff]
  %v2754 = vld [vmem:[#allocation3 + $0x38] sm:$0xff]
  %v2755 = vld [vmem:[#allocation3 + $0x40] sm:$0xff]
  %v2756 = vld [vmem:[#allocation3 + $0x48] sm:$0xff]
  %v2757 = vld [vmem:[#allocation3 + $0x50] sm:$0xff]
  %v2758 = vld [vmem:[#allocation3 + $0x58] sm:$0xff]
  %v2759 = vld [vmem:[#allocation3 + $0x60] sm:$0xff]
  %v2760 = vld [vmem:[#allocation3 + $0x68] sm:$0xff]
  %v2761 = vld [vmem:[#allocation3 + $0x70] sm:$0xff]
  %v2762 = vld [vmem:[#allocation3 + $0x78] sm:$0xff]
  %v2763 = vld [vmem:[#allocation3 + $0x80] sm:$0xff]
  %v2764 = vld [vmem:[#allocation3 + $0x88] sm:$0xff]
  %v2765 = vld [vmem:[#allocation3 + $0x90] sm:$0xff]
  %v2766 = vld [vmem:[#allocation3 + $0x98] sm:$0xff]
  %v2767 = vld [vmem:[#allocation3 + $0xa0] sm:$0xff]
  %v2768 = vld [vmem:[#allocation3 + $0xa8] sm:$0xff]
  %v2769 = vld [vmem:[#allocation3 + $0xb0] sm:$0xff]
  %v2770 = vld [vmem:[#allocation3 + $0xb8] sm:$0xff]
  %v2771 = vld [vmem:[#allocation3 + $0xc0] sm:$0xff]
  %v2772 = vld [vmem:[#allocation3 + $0xc8] sm:$0xff]
  %v2773 = vld [vmem:[#allocation3 + $0xd0] sm:$0xff]
  %v2774 = vld [vmem:[#allocation3 + $0xd8] sm:$0xff]
  %v2775 = vld [vmem:[#allocation3 + $0xe0] sm:$0xff]
  %v2776 = vld [vmem:[#allocation3 + $0xe8] sm:$0xff]
  %v2777 = vld [vmem:[#allocation3 + $0xf0] sm:$0xff]
  %v2778 = vld [vmem:[#allocation3 + $0xf8] sm:$0xff]
  %v2779 = vld [vmem:[#allocation3 + $0x100] sm:$0xff]
  %v2780 = vld [vmem:[#allocation3 + $0x108] sm:$0xff]
  %v2781 = vld [vmem:[#allocation3 + $0x110] sm:$0xff]
  %v2782 = vld [vmem:[#allocation3 + $0x118] sm:$0xff]
  %v2819 = vunpack.c.l.b16 %v2747
  %v2820 = vunpack.c.h.b16 %v2747
  %v2821 = vunpack.c.l.b16 %v2748
  %v2822 = vunpack.c.h.b16 %v2748
  %v2823 = vunpack.c.l.b16 %v2749
  %v2824 = vunpack.c.h.b16 %v2749
  %v2825 = vunpack.c.l.b16 %v2750
  %v2826 = vunpack.c.h.b16 %v2750
  %v2827 = vunpack.c.l.b16 %v2751
  %v2828 = vunpack.c.h.b16 %v2751
  %v2829 = vunpack.c.l.b16 %v2752
  %v2830 = vunpack.c.h.b16 %v2752
  %v2831 = vunpack.c.l.b16 %v2753
  %v2832 = vunpack.c.h.b16 %v2753
  %v2833 = vunpack.c.l.b16 %v2754
  %v2834 = vunpack.c.h.b16 %v2754
  %v2835 = vunpack.c.l.b16 %v2755
  %v2836 = vunpack.c.h.b16 %v2755
  %v2837 = vunpack.c.l.b16 %v2756
  %v2838 = vunpack.c.h.b16 %v2756
  %v2839 = vunpack.c.l.b16 %v2757
  %v2840 = vunpack.c.h.b16 %v2757
  %v2841 = vunpack.c.l.b16 %v2758
  %v2842 = vunpack.c.h.b16 %v2758
  %v2843 = vunpack.c.l.b16 %v2759
  %v2844 = vunpack.c.h.b16 %v2759
  %v2845 = vunpack.c.l.b16 %v2760
  %v2846 = vunpack.c.h.b16 %v2760
  %v2847 = vunpack.c.l.b16 %v2761
  %v2848 = vunpack.c.h.b16 %v2761
  %v2849 = vunpack.c.l.b16 %v2762
  %v2850 = vunpack.c.h.b16 %v2762
  %v2851 = vunpack.c.l.b16 %v2763
  %v2852 = vunpack.c.h.b16 %v2763
  %v2853 = vunpack.c.l.b16 %v2764
  %v2854 = vunpack.c.h.b16 %v2764
  %v2855 = vunpack.c.l.b16 %v2765
  %v2856 = vunpack.c.h.b16 %v2765
  %v2857 = vunpack.c.l.b16 %v2766
  %v2858 = vunpack.c.h.b16 %v2766
  %v2859 = vunpack.c.l.b16 %v2767
  %v2860 = vunpack.c.h.b16 %v2767
  %v2861 = vunpack.c.l.b16 %v2768
  %v2862 = vunpack.c.h.b16 %v2768
  %v2863 = vunpack.c.l.b16 %v2769
  %v2864 = vunpack.c.h.b16 %v2769
  %v2865 = vunpack.c.l.b16 %v2770
  %v2866 = vunpack.c.h.b16 %v2770
  %v2867 = vunpack.c.l.b16 %v2771
  %v2868 = vunpack.c.h.b16 %v2771
  %v2869 = vunpack.c.l.b16 %v2772
  %v2870 = vunpack.c.h.b16 %v2772
  %v2871 = vunpack.c.l.b16 %v2773
  %v2872 = vunpack.c.h.b16 %v2773
  %v2873 = vunpack.c.l.b16 %v2774
  %v2874 = vunpack.c.h.b16 %v2774
  %v2875 = vunpack.c.l.b16 %v2775
  %v2876 = vunpack.c.h.b16 %v2775
  %v2877 = vunpack.c.l.b16 %v2776
  %v2878 = vunpack.c.h.b16 %v2776
  %v2879 = vunpack.c.l.b16 %v2777
  %v2880 = vunpack.c.h.b16 %v2777
  %v2881 = vunpack.c.l.b16 %v2778
  %v2882 = vunpack.c.h.b16 %v2778
  %v2883 = vunpack.c.l.b16 %v2779
  %v2884 = vunpack.c.h.b16 %v2779
  %v2885 = vunpack.c.l.b16 %v2780
  %v2886 = vunpack.c.h.b16 %v2780
  %v2887 = vunpack.c.l.b16 %v2781
  %v2888 = vunpack.c.h.b16 %v2781
  %v2889 = vunpack.c.l.b16 %v2782
  %v2890 = vunpack.c.h.b16 %v2782
  %v2891 = vpack.c.b16 %v2827, %v2819
  %v2892 = vpack.c.b16 %v2828, %v2820
  %v2893 = vpack.c.b16 %v2829, %v2821
  %v2894 = vpack.c.b16 %v2830, %v2822
  %v2895 = vpack.c.b16 %v2831, %v2823
  %v2896 = vpack.c.b16 %v2832, %v2824
  %v2897 = vpack.c.b16 %v2833, %v2825
  %v2898 = vpack.c.b16 %v2834, %v2826
  %v2899 = vpack.c.b16 %v2843, %v2835
  %v2900 = vpack.c.b16 %v2844, %v2836
  %v2901 = vpack.c.b16 %v2845, %v2837
  %v2902 = vpack.c.b16 %v2846, %v2838
  %v2903 = vpack.c.b16 %v2847, %v2839
  %v2904 = vpack.c.b16 %v2848, %v2840
  %v2905 = vpack.c.b16 %v2849, %v2841
  %v2906 = vpack.c.b16 %v2850, %v2842
  %v2907 = vpack.c.b16 %v2859, %v2851
  %v2908 = vpack.c.b16 %v2860, %v2852
  %v2909 = vpack.c.b16 %v2861, %v2853
  %v2910 = vpack.c.b16 %v2862, %v2854
  %v2911 = vpack.c.b16 %v2863, %v2855
  %v2912 = vpack.c.b16 %v2864, %v2856
  %v2913 = vpack.c.b16 %v2865, %v2857
  %v2914 = vpack.c.b16 %v2866, %v2858
  %v2915 = vpack.c.b16 %v2875, %v2867
  %v2916 = vpack.c.b16 %v2876, %v2868
  %v2917 = vpack.c.b16 %v2877, %v2869
  %v2918 = vpack.c.b16 %v2878, %v2870
  %v2919 = vpack.c.b16 %v2879, %v2871
  %v2920 = vpack.c.b16 %v2880, %v2872
  %v2921 = vpack.c.b16 %v2881, %v2873
  %v2922 = vpack.c.b16 %v2882, %v2874
  %v2923 = vpack.c.b16 %v2883, %v2883
  %v2924 = vpack.c.b16 %v2884, %v2884
  %v2925 = vpack.c.b16 %v2885, %v2885
  %v2926 = vpack.c.b16 %v2886, %v2886
  %v2927 = vpack.c.b16 %v2887, %v2887
  %v2928 = vpack.c.b16 %v2888, %v2888
  %v2929 = vpack.c.b16 %v2889, %v2889
  %v2930 = vpack.c.b16 %v2890, %v2890
  %v2964 = vsel %vm1123, %v2746, 0
  %v2967 = vsel %vm1564, %v2923, 0
  %v2970 = vsel %vm1564, %v2924, 0
  %v2973 = vsel %vm1564, %v2925, 0
  %v2976 = vsel %vm1564, %v2926, 0
  %v2979 = vsel %vm1564, %v2927, 0
  %v2982 = vsel %vm1564, %v2928, 0
  %v2985 = vsel %vm1564, %v2929, 0
  %v2988 = vsel %vm1564, %v2930, 0
  %2990 = vmatprep.subr.bf16.mxu0 0
  %2991 = vmatpush1.bf16.msra.mxu0 0
  %2992 = vmatprep.subr.bf16.mxu0 0
  %2993 = vmatpush1.bf16.msra.mxu0 0
  %2994 = vmatprep.subr.bf16.mxu0 0
  %2995 = vmatpush1.bf16.msra.mxu0 0
  %2996 = vmatprep.subr.bf16.mxu0 %v2970
  %2997 = vmatpush1.bf16.msra.mxu0 %v2967
  %2998 = vmatprep.subr.bf16.mxu0 %v2916
  %2999 = vmatpush1.bf16.msra.mxu0 %v2915
  %3000 = vmatprep.subr.bf16.mxu0 %v2908
  %3001 = vmatpush1.bf16.msra.mxu0 %v2907
  %3002 = vmatprep.subr.bf16.mxu0 %v2900
  %3003 = vmatpush1.bf16.msra.mxu0 %v2899
  %3004 = vmatprep.subr.bf16.mxu0 %v2892
  %3005 = vmatpush1.bf16.msra.mxu0 %v2891
  %3006 = vmatprep.subr.bf16.mxu0 0
  %3007 = vmatpush2.bf16.msra.mxu0 0
  %3008 = vmatprep.subr.bf16.mxu0 0
  %3009 = vmatpush2.bf16.msra.mxu0 0
  %3010 = vmatprep.subr.bf16.mxu0 0
  %3011 = vmatpush2.bf16.msra.mxu0 0
  %3012 = vmatprep.subr.bf16.mxu0 0
  %3013 = vmatpush2.bf16.msra.mxu0 0
  %3014 = vmatprep.subr.bf16.mxu0 0
  %3015 = vmatpush2.bf16.msra.mxu0 0
  %3016 = vmatprep.subr.bf16.mxu0 0
  %3017 = vmatpush2.bf16.msra.mxu0 0
  %3018 = vmatprep.subr.bf16.mxu0 0
  %3019 = vmatpush2.bf16.msra.mxu0 0
  %3020 = vmatprep.subr.bf16.mxu0 0
  %3021 = vmatpush2.bf16.msra.mxu0 0
  %3022 = vmatprep.mubr.bf16.mxu0 0
  %3023 = vmatmul.mubr.bf16.gmra.mxu0 %v2964
  %v3024 = vpop.f32.mrf.mxu0
  %v3025 = vadd.f32 0.0, %v3024
  %v3026 = vpop.f32.mrf.mxu0
  %v3027 = vadd.f32 0.0, %v3026
  %v3028 = vpop.f32.mrf.mxu0
  %v3029 = vpop.f32.mrf.mxu0
  %3030 = vdwg.mxu0
  %3031 = vmatprep.subr.bf16.mxu0 0
  %3032 = vmatpush1.bf16.msra.mxu0 0
  %3033 = vmatprep.subr.bf16.mxu0 0
  %3034 = vmatpush1.bf16.msra.mxu0 0
  %3035 = vmatprep.subr.bf16.mxu0 0
  %3036 = vmatpush1.bf16.msra.mxu0 0
  %3037 = vmatprep.subr.bf16.mxu0 %v2976
  %3038 = vmatpush1.bf16.msra.mxu0 %v2973
  %3039 = vmatprep.subr.bf16.mxu0 %v2918
  %3040 = vmatpush1.bf16.msra.mxu0 %v2917
  %3041 = vmatprep.subr.bf16.mxu0 %v2910
  %3042 = vmatpush1.bf16.msra.mxu0 %v2909
  %3043 = vmatprep.subr.bf16.mxu0 %v2902
  %3044 = vmatpush1.bf16.msra.mxu0 %v2901
  %3045 = vmatprep.subr.bf16.mxu0 %v2894
  %3046 = vmatpush1.bf16.msra.mxu0 %v2893
  %3047 = vmatprep.subr.bf16.mxu0 0
  %3048 = vmatpush2.bf16.msra.mxu0 0
  %3049 = vmatprep.subr.bf16.mxu0 0
  %3050 = vmatpush2.bf16.msra.mxu0 0
  %3051 = vmatprep.subr.bf16.mxu0 0
  %3052 = vmatpush2.bf16.msra.mxu0 0
  %3053 = vmatprep.subr.bf16.mxu0 0
  %3054 = vmatpush2.bf16.msra.mxu0 0
  %3055 = vmatprep.subr.bf16.mxu0 0
  %3056 = vmatpush2.bf16.msra.mxu0 0
  %3057 = vmatprep.subr.bf16.mxu0 0
  %3058 = vmatpush2.bf16.msra.mxu0 0
  %3059 = vmatprep.subr.bf16.mxu0 0
  %3060 = vmatpush2.bf16.msra.mxu0 0
  %3061 = vmatprep.subr.bf16.mxu0 0
  %3062 = vmatpush2.bf16.msra.mxu0 0
  %3063 = vmatprep.mubr.bf16.mxu0 0
  %3064 = vmatmul.mubr.bf16.gmra.mxu0 %v2964
  %v3065 = vpop.f32.mrf.mxu0
  %v3066 = vadd.f32 0.0, %v3065
  %v3067 = vpop.f32.mrf.mxu0
  %v3068 = vadd.f32 0.0, %v3067
  %v3069 = vpop.f32.mrf.mxu0
  %v3070 = vpop.f32.mrf.mxu0
  %3071 = vdwg.mxu0
  %3072 = vmatprep.subr.bf16.mxu0 0
  %3073 = vmatpush1.bf16.msra.mxu0 0
  %3074 = vmatprep.subr.bf16.mxu0 0
  %3075 = vmatpush1.bf16.msra.mxu0 0
  %3076 = vmatprep.subr.bf16.mxu0 0
  %3077 = vmatpush1.bf16.msra.mxu0 0
  %3078 = vmatprep.subr.bf16.mxu0 %v2982
  %3079 = vmatpush1.bf16.msra.mxu0 %v2979
  %3080 = vmatprep.subr.bf16.mxu0 %v2920
  %3081 = vmatpush1.bf16.msra.mxu0 %v2919
  %3082 = vmatprep.subr.bf16.mxu0 %v2912
  %3083 = vmatpush1.bf16.msra.mxu0 %v2911
  %3084 = vmatprep.subr.bf16.mxu0 %v2904
  %3085 = vmatpush1.bf16.msra.mxu0 %v2903
  %3086 = vmatprep.subr.bf16.mxu0 %v2896
  %3087 = vmatpush1.bf16.msra.mxu0 %v2895
  %3088 = vmatprep.subr.bf16.mxu0 0
  %3089 = vmatpush2.bf16.msra.mxu0 0
  %3090 = vmatprep.subr.bf16.mxu0 0
  %3091 = vmatpush2.bf16.msra.mxu0 0
  %3092 = vmatprep.subr.bf16.mxu0 0
  %3093 = vmatpush2.bf16.msra.mxu0 0
  %3094 = vmatprep.subr.bf16.mxu0 0
  %3095 = vmatpush2.bf16.msra.mxu0 0
  %3096 = vmatprep.subr.bf16.mxu0 0
  %3097 = vmatpush2.bf16.msra.mxu0 0
  %3098 = vmatprep.subr.bf16.mxu0 0
  %3099 = vmatpush2.bf16.msra.mxu0 0
  %3100 = vmatprep.subr.bf16.mxu0 0
  %3101 = vmatpush2.bf16.msra.mxu0 0
  %3102 = vmatprep.subr.bf16.mxu0 0
  %3103 = vmatpush2.bf16.msra.mxu0 0
  %3104 = vmatprep.mubr.bf16.mxu0 0
  %3105 = vmatmul.mubr.bf16.gmra.mxu0 %v2964
  %v3106 = vpop.f32.mrf.mxu0
  %v3107 = vadd.f32 0.0, %v3106
  %v3108 = vpop.f32.mrf.mxu0
  %v3109 = vadd.f32 0.0, %v3108
  %v3110 = vpop.f32.mrf.mxu0
  %v3111 = vpop.f32.mrf.mxu0
  %3112 = vdwg.mxu0
  %3113 = vmatprep.subr.bf16.mxu0 0
  %3114 = vmatpush1.bf16.msra.mxu0 0
  %3115 = vmatprep.subr.bf16.mxu0 0
  %3116 = vmatpush1.bf16.msra.mxu0 0
  %3117 = vmatprep.subr.bf16.mxu0 0
  %3118 = vmatpush1.bf16.msra.mxu0 0
  %3119 = vmatprep.subr.bf16.mxu0 %v2988
  %3120 = vmatpush1.bf16.msra.mxu0 %v2985
  %3121 = vmatprep.subr.bf16.mxu0 %v2922
  %3122 = vmatpush1.bf16.msra.mxu0 %v2921
  %3123 = vmatprep.subr.bf16.mxu0 %v2914
  %3124 = vmatpush1.bf16.msra.mxu0 %v2913
  %3125 = vmatprep.subr.bf16.mxu0 %v2906
  %3126 = vmatpush1.bf16.msra.mxu0 %v2905
  %3127 = vmatprep.subr.bf16.mxu0 %v2898
  %3128 = vmatpush1.bf16.msra.mxu0 %v2897
  %3129 = vmatprep.subr.bf16.mxu0 0
  %3130 = vmatpush2.bf16.msra.mxu0 0
  %3131 = vmatprep.subr.bf16.mxu0 0
  %3132 = vmatpush2.bf16.msra.mxu0 0
  %3133 = vmatprep.subr.bf16.mxu0 0
  %3134 = vmatpush2.bf16.msra.mxu0 0
  %3135 = vmatprep.subr.bf16.mxu0 0
  %3136 = vmatpush2.bf16.msra.mxu0 0
  %3137 = vmatprep.subr.bf16.mxu0 0
  %3138 = vmatpush2.bf16.msra.mxu0 0
  %3139 = vmatprep.subr.bf16.mxu0 0
  %3140 = vmatpush2.bf16.msra.mxu0 0
  %3141 = vmatprep.subr.bf16.mxu0 0
  %3142 = vmatpush2.bf16.msra.mxu0 0
  %3143 = vmatprep.subr.bf16.mxu0 0
  %3144 = vmatpush2.bf16.msra.mxu0 0
  %3145 = vmatprep.mubr.bf16.mxu0 0
  %3146 = vmatmul.mubr.bf16.gmra.mxu0 %v2964
  %v3147 = vpop.f32.mrf.mxu0
  %v3148 = vadd.f32 0.0, %v3147
  %v3149 = vpop.f32.mrf.mxu0
  %v3150 = vadd.f32 0.0, %v3149
  %v3151 = vpop.f32.mrf.mxu0
  %v3152 = vpop.f32.mrf.mxu0
  %3153 = vdwg.mxu0
  %v3154 = vld [vmem:[#allocation4] sm:$0xff]
  %v3155 = vld [vmem:[#allocation4 + $0x8] sm:$0xff]
  %v3156 = vld [vmem:[#allocation4 + $0x10] sm:$0xff]
  %v3157 = vld [vmem:[#allocation4 + $0x18] sm:$0xff]
  %v3158 = vld [vmem:[#allocation4 + $0x20] sm:$0xff]
  %v3159 = vld [vmem:[#allocation4 + $0x28] sm:$0xff]
  %v3160 = vld [vmem:[#allocation4 + $0x30] sm:$0xff]
  %v3161 = vld [vmem:[#allocation4 + $0x38] sm:$0xff]
  %v3162 = vadd.f32 %v3154, %v3025
  %v3163 = vadd.f32 %v3155, %v3027
  %v3164 = vadd.f32 %v3156, %v3066
  %v3165 = vadd.f32 %v3157, %v3068
  %v3166 = vadd.f32 %v3158, %v3107
  %v3167 = vadd.f32 %v3159, %v3109
  %v3168 = vadd.f32 %v3160, %v3148
  %v3169 = vadd.f32 %v3161, %v3150
  %3170 = vst [vmem:[#allocation4] sm:$0xff] %v3162
  %3171 = vst [vmem:[#allocation4 + $0x8] sm:$0xff] %v3163
  %3172 = vst [vmem:[#allocation4 + $0x10] sm:$0xff] %v3164
  %3173 = vst [vmem:[#allocation4 + $0x18] sm:$0xff] %v3165
  %3174 = vst [vmem:[#allocation4 + $0x20] sm:$0xff] %v3166
  %3175 = vst [vmem:[#allocation4 + $0x28] sm:$0xff] %v3167
  %3176 = vst [vmem:[#allocation4 + $0x30] sm:$0xff] %v3168
  %3177 = vst [vmem:[#allocation4 + $0x38] sm:$0xff] %v3169
  %v3178 = vld [vmem:[%s7] sm:$0xff]
  %v3179 = vld [vmem:[%s7 + $0x8] sm:$0xff]
  %v3180 = vld [vmem:[%s7 + $0x10] sm:$0xff]
  %v3181 = vld [vmem:[%s7 + $0x18] sm:$0xff]
  %v3182 = vld [vmem:[#allocation2 + $0x4] sm:$0xff]
  %v3183 = vld [vmem:[#allocation2 + $0xc] sm:$0xff]
  %v3184 = vld [vmem:[#allocation2 + $0x14] sm:$0xf]
  %v3185 = vunpack.c.l.bf16 %v3182
  %v3186 = vunpack.c.h.bf16 %v3182
  %v3187 = vunpack.c.l.bf16 %v3183
  %v3188 = vunpack.c.h.bf16 %v3183
  %v3189 = vunpack.c.l.bf16 %v3184
  %3194 = vrot.lane.b32.xlu0 %v3178, 55
  %v3195 = vpop.permute.xlu0 %3194
  %3196 = vrot.lane.b32.xlu0 %v3179, 55
  %v3197 = vpop.permute.xlu0 %3196
  %3198 = vrot.lane.b32.xlu0 %v3180, 55
  %v3199 = vpop.permute.xlu0 %3198
  %3200 = vrot.lane.b32.xlu0 %v3181, 55
  %v3201 = vpop.permute.xlu0 %3200
  %v3202 = vsel %vm337, %v3195, %v3197
  %v3203 = vsel %vm337, %v3197, %v3199
  %v3204 = vsel %vm337, %v3199, %v3201
  %v3210 = vmul.f32 %v3185, %v3195
  %v3211 = vmul.f32 %v3186, %v3202
  %v3212 = vmul.f32 %v3187, %v3203
  %v3213 = vmul.f32 %v3188, %v3204
  %v3214 = vmul.f32 %v3189, %v3201
  %v3215 = vpack.c.bf16 %v3210, %v3210
  %v3216 = vpack.c.bf16 %v3211, %v3211
  %v3217 = vpack.c.bf16 %v3212, %v3212
  %v3218 = vpack.c.bf16 %v3213, %v3213
  %v3219 = vpack.c.bf16 %v3214, %v3214
  %v3225 = vunpack.c.l.b16 %v3215
  %v3226 = vunpack.c.l.b16 %v3216
  %v3227 = vunpack.c.l.b16 %v3217
  %v3228 = vunpack.c.l.b16 %v3218
  %v3229 = vunpack.c.l.b16 %v3219
  %v3230 = vpack.c.b16 %v3226, %v3225
  %v3231 = vpack.c.b16 %v3228, %v3227
  %v3232 = vpack.c.b16 %v3229, %v3229
  %3233 = vrot.lane.b32.xlu0 %v3230, 73
  %v3234 = vpop.permute.xlu0 %3233
  %3235 = vrot.lane.b32.xlu0 %v3231, 73
  %v3236 = vpop.permute.xlu0 %3235
  %3237 = vrot.lane.b32.xlu0 %v3232, 73
  %v3238 = vpop.permute.xlu0 %3237
  %v3239 = vrot.slane %v3234, 4
  %v3240 = vrot.slane %v3236, 4
  %v3241 = vrot.slane %v3238, 4
  %v3242 = vsel %vm378, %v3239, %v3240
  %v3243 = vsel %vm380, %v3234, %v3242
  %v3244 = vsel %vm378, %v3240, %v3241
  %v3245 = vsel %vm380, %v3236, %v3244
  %3248 = vst [vmem:[#allocation3] sm:$0xff] %v3243
  %3249 = vst [vmem:[#allocation3 + $0x8] sm:$0xff] %v3245
  %v3250 = vld [vmem:[#allocation2 + $0x18] sm:$0xff]
  %v3251 = vld [vmem:[#allocation2 + $0x20] sm:$0xff]
  %v3252 = vld [vmem:[#allocation2 + $0x28] sm:$0xf]
  %v3253 = vunpack.c.l.bf16 %v3250
  %v3254 = vunpack.c.h.bf16 %v3250
  %v3255 = vunpack.c.l.bf16 %v3251
  %v3256 = vunpack.c.h.bf16 %v3251
  %v3257 = vunpack.c.l.bf16 %v3252
  %v3258 = vmul.f32 %v3253, %v3195
  %v3259 = vmul.f32 %v3254, %v3202
  %v3260 = vmul.f32 %v3255, %v3203
  %v3261 = vmul.f32 %v3256, %v3204
  %v3262 = vmul.f32 %v3257, %v3201
  %v3263 = vpack.c.bf16 %v3258, %v3258
  %v3264 = vpack.c.bf16 %v3259, %v3259
  %v3265 = vpack.c.bf16 %v3260, %v3260
  %v3266 = vpack.c.bf16 %v3261, %v3261
  %v3267 = vpack.c.bf16 %v3262, %v3262
  %v3273 = vunpack.c.l.b16 %v3263
  %v3274 = vunpack.c.l.b16 %v3264
  %v3275 = vunpack.c.l.b16 %v3265
  %v3276 = vunpack.c.l.b16 %v3266
  %v3277 = vunpack.c.l.b16 %v3267
  %v3278 = vpack.c.b16 %v3274, %v3273
  %v3279 = vpack.c.b16 %v3276, %v3275
  %v3280 = vpack.c.b16 %v3277, %v3277
  %3281 = vrot.lane.b32.xlu0 %v3278, 73
  %v3282 = vpop.permute.xlu0 %3281
  %3283 = vrot.lane.b32.xlu0 %v3279, 73
  %v3284 = vpop.permute.xlu0 %3283
  %3285 = vrot.lane.b32.xlu0 %v3280, 73
  %v3286 = vpop.permute.xlu0 %3285
  %v3287 = vrot.slane %v3282, 4
  %v3288 = vrot.slane %v3284, 4
  %v3289 = vrot.slane %v3286, 4
  %v3290 = vsel %vm378, %v3287, %v3288
  %v3291 = vsel %vm380, %v3282, %v3290
  %v3292 = vsel %vm378, %v3288, %v3289
  %v3293 = vsel %vm380, %v3284, %v3292
  %3296 = vst [vmem:[#allocation3 + $0x10] sm:$0xff] %v3291
  %3297 = vst [vmem:[#allocation3 + $0x18] sm:$0xff] %v3293
  %v3298 = vld [vmem:[%s436] sm:$0xff]
  %v3299 = vld [vmem:[%s436 + $0x8] sm:$0xff]
  %v3300 = vld [vmem:[%s436 + $0x10] sm:$0xff]
  %v3301 = vld [vmem:[%s436 + $0x18] sm:$0xff]
  %v3302 = vld [vmem:[#allocation2 + $0x4] sm:$0xff]
  %v3303 = vld [vmem:[#allocation2 + $0xc] sm:$0xff]
  %v3304 = vld [vmem:[#allocation2 + $0x14] sm:$0xf]
  %v3305 = vunpack.c.l.bf16 %v3302
  %v3306 = vunpack.c.h.bf16 %v3302
  %v3307 = vunpack.c.l.bf16 %v3303
  %v3308 = vunpack.c.h.bf16 %v3303
  %v3309 = vunpack.c.l.bf16 %v3304
  %3314 = vrot.lane.b32.xlu0 %v3298, 56
  %v3315 = vpop.permute.xlu0 %3314
  %3316 = vrot.lane.b32.xlu0 %v3299, 56
  %v3317 = vpop.permute.xlu0 %3316
  %3318 = vrot.lane.b32.xlu0 %v3300, 56
  %v3319 = vpop.permute.xlu0 %3318
  %3320 = vrot.lane.b32.xlu0 %v3301, 56
  %v3321 = vpop.permute.xlu0 %3320
  %v3322 = vsel %vm461, %v3315, %v3317
  %v3323 = vsel %vm461, %v3317, %v3319
  %v3324 = vsel %vm461, %v3319, %v3321
  %v3330 = vmul.f32 %v3305, %v3315
  %v3331 = vmul.f32 %v3306, %v3322
  %v3332 = vmul.f32 %v3307, %v3323
  %v3333 = vmul.f32 %v3308, %v3324
  %v3334 = vmul.f32 %v3309, %v3321
  %v3335 = vpack.c.bf16 %v3330, %v3330
  %v3336 = vpack.c.bf16 %v3331, %v3331
  %v3337 = vpack.c.bf16 %v3332, %v3332
  %v3338 = vpack.c.bf16 %v3333, %v3333
  %v3339 = vpack.c.bf16 %v3334, %v3334
  %v3345 = vunpack.c.l.b16 %v3335
  %v3346 = vunpack.c.l.b16 %v3336
  %v3347 = vunpack.c.l.b16 %v3337
  %v3348 = vunpack.c.l.b16 %v3338
  %v3349 = vunpack.c.l.b16 %v3339
  %v3350 = vpack.c.b16 %v3346, %v3345
  %v3351 = vpack.c.b16 %v3348, %v3347
  %v3352 = vpack.c.b16 %v3349, %v3349
  %3353 = vrot.lane.b32.xlu0 %v3350, 72
  %v3354 = vpop.permute.xlu0 %3353
  %3355 = vrot.lane.b32.xlu0 %v3351, 72
  %v3356 = vpop.permute.xlu0 %3355
  %3357 = vrot.lane.b32.xlu0 %v3352, 72
  %v3358 = vpop.permute.xlu0 %3357
  %v3359 = vrot.slane %v3354, 4
  %v3360 = vrot.slane %v3356, 4
  %v3361 = vrot.slane %v3358, 4
  %v3362 = vsel %vm378, %v3359, %v3360
  %v3363 = vsel %vm503, %v3354, %v3362
  %v3364 = vsel %vm378, %v3360, %v3361
  %v3365 = vsel %vm503, %v3356, %v3364
  %3368 = vst [vmem:[#allocation3 + $0x20] sm:$0xff] %v3363
  %3369 = vst [vmem:[#allocation3 + $0x28] sm:$0xff] %v3365
  %v3370 = vld [vmem:[#allocation2 + $0x18] sm:$0xff]
  %v3371 = vld [vmem:[#allocation2 + $0x20] sm:$0xff]
  %v3372 = vld [vmem:[#allocation2 + $0x28] sm:$0xf]
  %v3373 = vunpack.c.l.bf16 %v3370
  %v3374 = vunpack.c.h.bf16 %v3370
  %v3375 = vunpack.c.l.bf16 %v3371
  %v3376 = vunpack.c.h.bf16 %v3371
  %v3377 = vunpack.c.l.bf16 %v3372
  %v3378 = vmul.f32 %v3373, %v3315
  %v3379 = vmul.f32 %v3374, %v3322
  %v3380 = vmul.f32 %v3375, %v3323
  %v3381 = vmul.f32 %v3376, %v3324
  %v3382 = vmul.f32 %v3377, %v3321
  %v3383 = vpack.c.bf16 %v3378, %v3378
  %v3384 = vpack.c.bf16 %v3379, %v3379
  %v3385 = vpack.c.bf16 %v3380, %v3380
  %v3386 = vpack.c.bf16 %v3381, %v3381
  %v3387 = vpack.c.bf16 %v3382, %v3382
  %v3393 = vunpack.c.l.b16 %v3383
  %v3394 = vunpack.c.l.b16 %v3384
  %v3395 = vunpack.c.l.b16 %v3385
  %v3396 = vunpack.c.l.b16 %v3386
  %v3397 = vunpack.c.l.b16 %v3387
  %v3398 = vpack.c.b16 %v3394, %v3393
  %v3399 = vpack.c.b16 %v3396, %v3395
  %v3400 = vpack.c.b16 %v3397, %v3397
  %3401 = vrot.lane.b32.xlu0 %v3398, 72
  %v3402 = vpop.permute.xlu0 %3401
  %3403 = vrot.lane.b32.xlu0 %v3399, 72
  %v3404 = vpop.permute.xlu0 %3403
  %3405 = vrot.lane.b32.xlu0 %v3400, 72
  %v3406 = vpop.permute.xlu0 %3405
  %v3407 = vrot.slane %v3402, 4
  %v3408 = vrot.slane %v3404, 4
  %v3409 = vrot.slane %v3406, 4
  %v3410 = vsel %vm378, %v3407, %v3408
  %v3411 = vsel %vm503, %v3402, %v3410
  %v3412 = vsel %vm378, %v3408, %v3409
  %v3413 = vsel %vm503, %v3404, %v3412
  %3416 = vst [vmem:[#allocation3 + $0x30] sm:$0xff] %v3411
  %3417 = vst [vmem:[#allocation3 + $0x38] sm:$0xff] %v3413
  %v3418 = vld [vmem:[%s559] sm:$0xff]
  %v3419 = vld [vmem:[%s559 + $0x8] sm:$0xff]
  %v3420 = vld [vmem:[%s559 + $0x10] sm:$0xff]
  %v3421 = vld [vmem:[%s559 + $0x18] sm:$0xff]
  %v3422 = vld [vmem:[#allocation2 + $0x4] sm:$0xff]
  %v3423 = vld [vmem:[#allocation2 + $0xc] sm:$0xff]
  %v3424 = vld [vmem:[#allocation2 + $0x14] sm:$0xf]
  %v3425 = vunpack.c.l.bf16 %v3422
  %v3426 = vunpack.c.h.bf16 %v3422
  %v3427 = vunpack.c.l.bf16 %v3423
  %v3428 = vunpack.c.h.bf16 %v3423
  %v3429 = vunpack.c.l.bf16 %v3424
  %3434 = vrot.lane.b32.xlu0 %v3418, 57
  %v3435 = vpop.permute.xlu0 %3434
  %3436 = vrot.lane.b32.xlu0 %v3419, 57
  %v3437 = vpop.permute.xlu0 %3436
  %3438 = vrot.lane.b32.xlu0 %v3420, 57
  %v3439 = vpop.permute.xlu0 %3438
  %3440 = vrot.lane.b32.xlu0 %v3421, 57
  %v3441 = vpop.permute.xlu0 %3440
  %v3442 = vsel %vm584, %v3435, %v3437
  %v3443 = vsel %vm584, %v3437, %v3439
  %v3444 = vsel %vm584, %v3439, %v3441
  %v3450 = vmul.f32 %v3425, %v3435
  %v3451 = vmul.f32 %v3426, %v3442
  %v3452 = vmul.f32 %v3427, %v3443
  %v3453 = vmul.f32 %v3428, %v3444
  %v3454 = vmul.f32 %v3429, %v3441
  %v3455 = vpack.c.bf16 %v3450, %v3450
  %v3456 = vpack.c.bf16 %v3451, %v3451
  %v3457 = vpack.c.bf16 %v3452, %v3452
  %v3458 = vpack.c.bf16 %v3453, %v3453
  %v3459 = vpack.c.bf16 %v3454, %v3454
  %v3465 = vunpack.c.l.b16 %v3455
  %v3466 = vunpack.c.l.b16 %v3456
  %v3467 = vunpack.c.l.b16 %v3457
  %v3468 = vunpack.c.l.b16 %v3458
  %v3469 = vunpack.c.l.b16 %v3459
  %v3470 = vpack.c.b16 %v3466, %v3465
  %v3471 = vpack.c.b16 %v3468, %v3467
  %v3472 = vpack.c.b16 %v3469, %v3469
  %3473 = vrot.lane.b32.xlu0 %v3470, 71
  %v3474 = vpop.permute.xlu0 %3473
  %3475 = vrot.lane.b32.xlu0 %v3471, 71
  %v3476 = vpop.permute.xlu0 %3475
  %3477 = vrot.lane.b32.xlu0 %v3472, 71
  %v3478 = vpop.permute.xlu0 %3477
  %v3479 = vrot.slane %v3474, 4
  %v3480 = vrot.slane %v3476, 4
  %v3481 = vrot.slane %v3478, 4
  %v3482 = vsel %vm378, %v3479, %v3480
  %v3483 = vsel %vm626, %v3474, %v3482
  %v3484 = vsel %vm378, %v3480, %v3481
  %v3485 = vsel %vm626, %v3476, %v3484
  %3488 = vst [vmem:[#allocation3 + $0x40] sm:$0xff] %v3483
  %3489 = vst [vmem:[#allocation3 + $0x48] sm:$0xff] %v3485
  %v3490 = vld [vmem:[#allocation2 + $0x18] sm:$0xff]
  %v3491 = vld [vmem:[#allocation2 + $0x20] sm:$0xff]
  %v3492 = vld [vmem:[#allocation2 + $0x28] sm:$0xf]
  %v3493 = vunpack.c.l.bf16 %v3490
  %v3494 = vunpack.c.h.bf16 %v3490
  %v3495 = vunpack.c.l.bf16 %v3491
  %v3496 = vunpack.c.h.bf16 %v3491
  %v3497 = vunpack.c.l.bf16 %v3492
  %v3498 = vmul.f32 %v3493, %v3435
  %v3499 = vmul.f32 %v3494, %v3442
  %v3500 = vmul.f32 %v3495, %v3443
  %v3501 = vmul.f32 %v3496, %v3444
  %v3502 = vmul.f32 %v3497, %v3441
  %v3503 = vpack.c.bf16 %v3498, %v3498
  %v3504 = vpack.c.bf16 %v3499, %v3499
  %v3505 = vpack.c.bf16 %v3500, %v3500
  %v3506 = vpack.c.bf16 %v3501, %v3501
  %v3507 = vpack.c.bf16 %v3502, %v3502
  %v3513 = vunpack.c.l.b16 %v3503
  %v3514 = vunpack.c.l.b16 %v3504
  %v3515 = vunpack.c.l.b16 %v3505
  %v3516 = vunpack.c.l.b16 %v3506
  %v3517 = vunpack.c.l.b16 %v3507
  %v3518 = vpack.c.b16 %v3514, %v3513
  %v3519 = vpack.c.b16 %v3516, %v3515
  %v3520 = vpack.c.b16 %v3517, %v3517
  %3521 = vrot.lane.b32.xlu0 %v3518, 71
  %v3522 = vpop.permute.xlu0 %3521
  %3523 = vrot.lane.b32.xlu0 %v3519, 71
  %v3524 = vpop.permute.xlu0 %3523
  %3525 = vrot.lane.b32.xlu0 %v3520, 71
  %v3526 = vpop.permute.xlu0 %3525
  %v3527 = vrot.slane %v3522, 4
  %v3528 = vrot.slane %v3524, 4
  %v3529 = vrot.slane %v3526, 4
  %v3530 = vsel %vm378, %v3527, %v3528
  %v3531 = vsel %vm626, %v3522, %v3530
  %v3532 = vsel %vm378, %v3528, %v3529
  %v3533 = vsel %vm626, %v3524, %v3532
  %3536 = vst [vmem:[#allocation3 + $0x50] sm:$0xff] %v3531
  %3537 = vst [vmem:[#allocation3 + $0x58] sm:$0xff] %v3533
  %v3538 = vld [vmem:[%s682] sm:$0xff]
  %v3539 = vld [vmem:[%s682 + $0x8] sm:$0xff]
  %v3540 = vld [vmem:[%s682 + $0x10] sm:$0xff]
  %v3541 = vld [vmem:[%s682 + $0x18] sm:$0xff]
  %v3542 = vld [vmem:[#allocation2 + $0x4] sm:$0xff]
  %v3543 = vld [vmem:[#allocation2 + $0xc] sm:$0xff]
  %v3544 = vld [vmem:[#allocation2 + $0x14] sm:$0xf]
  %v3545 = vunpack.c.l.bf16 %v3542
  %v3546 = vunpack.c.h.bf16 %v3542
  %v3547 = vunpack.c.l.bf16 %v3543
  %v3548 = vunpack.c.h.bf16 %v3543
  %v3549 = vunpack.c.l.bf16 %v3544
  %3554 = vrot.lane.b32.xlu0 %v3538, 63
  %v3555 = vpop.permute.xlu0 %3554
  %3556 = vrot.lane.b32.xlu0 %v3539, 63
  %v3557 = vpop.permute.xlu0 %3556
  %3558 = vrot.lane.b32.xlu0 %v3540, 63
  %v3559 = vpop.permute.xlu0 %3558
  %3560 = vrot.lane.b32.xlu0 %v3541, 63
  %v3561 = vpop.permute.xlu0 %3560
  %v3562 = vsel %vm707, %v3555, %v3557
  %v3563 = vsel %vm707, %v3557, %v3559
  %v3564 = vsel %vm707, %v3559, %v3561
  %v3570 = vmul.f32 %v3545, %v3555
  %v3571 = vmul.f32 %v3546, %v3562
  %v3572 = vmul.f32 %v3547, %v3563
  %v3573 = vmul.f32 %v3548, %v3564
  %v3574 = vmul.f32 %v3549, %v3561
  %v3575 = vpack.c.bf16 %v3570, %v3570
  %v3576 = vpack.c.bf16 %v3571, %v3571
  %v3577 = vpack.c.bf16 %v3572, %v3572
  %v3578 = vpack.c.bf16 %v3573, %v3573
  %v3579 = vpack.c.bf16 %v3574, %v3574
  %v3585 = vunpack.c.l.b16 %v3575
  %v3586 = vunpack.c.l.b16 %v3576
  %v3587 = vunpack.c.l.b16 %v3577
  %v3588 = vunpack.c.l.b16 %v3578
  %v3589 = vunpack.c.l.b16 %v3579
  %v3590 = vpack.c.b16 %v3586, %v3585
  %v3591 = vpack.c.b16 %v3588, %v3587
  %v3592 = vpack.c.b16 %v3589, %v3589
  %3593 = vrot.lane.b32.xlu0 %v3590, 65
  %v3594 = vpop.permute.xlu0 %3593
  %3595 = vrot.lane.b32.xlu0 %v3591, 65
  %v3596 = vpop.permute.xlu0 %3595
  %3597 = vrot.lane.b32.xlu0 %v3592, 65
  %v3598 = vpop.permute.xlu0 %3597
  %v3599 = vrot.slane %v3594, 4
  %v3600 = vrot.slane %v3596, 4
  %v3601 = vrot.slane %v3598, 4
  %v3602 = vsel %vm378, %v3599, %v3600
  %v3603 = vsel %vm749, %v3594, %v3602
  %v3604 = vsel %vm378, %v3600, %v3601
  %v3605 = vsel %vm749, %v3596, %v3604
  %3608 = vst [vmem:[#allocation3 + $0x60] sm:$0xff] %v3603
  %3609 = vst [vmem:[#allocation3 + $0x68] sm:$0xff] %v3605
  %v3610 = vld [vmem:[#allocation2 + $0x18] sm:$0xff]
  %v3611 = vld [vmem:[#allocation2 + $0x20] sm:$0xff]
  %v3612 = vld [vmem:[#allocation2 + $0x28] sm:$0xf]
  %v3613 = vunpack.c.l.bf16 %v3610
  %v3614 = vunpack.c.h.bf16 %v3610
  %v3615 = vunpack.c.l.bf16 %v3611
  %v3616 = vunpack.c.h.bf16 %v3611
  %v3617 = vunpack.c.l.bf16 %v3612
  %v3618 = vmul.f32 %v3613, %v3555
  %v3619 = vmul.f32 %v3614, %v3562
  %v3620 = vmul.f32 %v3615, %v3563
  %v3621 = vmul.f32 %v3616, %v3564
  %v3622 = vmul.f32 %v3617, %v3561
  %v3623 = vpack.c.bf16 %v3618, %v3618
  %v3624 = vpack.c.bf16 %v3619, %v3619
  %v3625 = vpack.c.bf16 %v3620, %v3620
  %v3626 = vpack.c.bf16 %v3621, %v3621
  %v3627 = vpack.c.bf16 %v3622, %v3622
  %v3633 = vunpack.c.l.b16 %v3623
  %v3634 = vunpack.c.l.b16 %v3624
  %v3635 = vunpack.c.l.b16 %v3625
  %v3636 = vunpack.c.l.b16 %v3626
  %v3637 = vunpack.c.l.b16 %v3627
  %v3638 = vpack.c.b16 %v3634, %v3633
  %v3639 = vpack.c.b16 %v3636, %v3635
  %v3640 = vpack.c.b16 %v3637, %v3637
  %3641 = vrot.lane.b32.xlu0 %v3638, 65
  %v3642 = vpop.permute.xlu0 %3641
  %3643 = vrot.lane.b32.xlu0 %v3639, 65
  %v3644 = vpop.permute.xlu0 %3643
  %3645 = vrot.lane.b32.xlu0 %v3640, 65
  %v3646 = vpop.permute.xlu0 %3645
  %v3647 = vrot.slane %v3642, 4
  %v3648 = vrot.slane %v3644, 4
  %v3649 = vrot.slane %v3646, 4
  %v3650 = vsel %vm378, %v3647, %v3648
  %v3651 = vsel %vm749, %v3642, %v3650
  %v3652 = vsel %vm378, %v3648, %v3649
  %v3653 = vsel %vm749, %v3644, %v3652
  %3656 = vst [vmem:[#allocation3 + $0x70] sm:$0xff] %v3651
  %3657 = vst [vmem:[#allocation3 + $0x78] sm:$0xff] %v3653
  %v3658 = vld [vmem:[#allocation2 + $0x4] sm:$0xff]
  %v3659 = vld [vmem:[#allocation2 + $0xc] sm:$0xff]
  %v3660 = vld [vmem:[#allocation2 + $0x14] sm:$0xf]
  %3664 = vrot.lane.b32.xlu0 %v3658, 64
  %v3665 = vpop.permute.xlu0 %3664
  %3666 = vrot.lane.b32.xlu0 %v3659, 64
  %v3667 = vpop.permute.xlu0 %3666
  %3668 = vrot.lane.b32.xlu0 %v3660, 64
  %v3669 = vpop.permute.xlu0 %3668
  %v3670 = vrot.slane %v3665, 4
  %v3671 = vrot.slane %v3667, 4
  %v3672 = vrot.slane %v3669, 4
  %v3673 = vsel %vm378, %v3670, %v3671
  %v3674 = vsel %vm821, %v3665, %v3673
  %v3675 = vsel %vm378, %v3671, %v3672
  %v3676 = vsel %vm821, %v3667, %v3675
  %3679 = vst [vmem:[#allocation3 + $0x80] sm:$0xff] %v3674
  %3680 = vst [vmem:[#allocation3 + $0x88] sm:$0xff] %v3676
  %v3681 = vld [vmem:[#allocation2 + $0x18] sm:$0xff]
  %v3682 = vld [vmem:[#allocation2 + $0x20] sm:$0xff]
  %v3683 = vld [vmem:[#allocation2 + $0x28] sm:$0xf]
  %3687 = vrot.lane.b32.xlu0 %v3681, 64
  %v3688 = vpop.permute.xlu0 %3687
  %3689 = vrot.lane.b32.xlu0 %v3682, 64
  %v3690 = vpop.permute.xlu0 %3689
  %3691 = vrot.lane.b32.xlu0 %v3683, 64
  %v3692 = vpop.permute.xlu0 %3691
  %v3693 = vrot.slane %v3688, 4
  %v3694 = vrot.slane %v3690, 4
  %v3695 = vrot.slane %v3692, 4
  %v3696 = vsel %vm378, %v3693, %v3694
  %v3697 = vsel %vm821, %v3688, %v3696
  %v3698 = vsel %vm378, %v3694, %v3695
  %v3699 = vsel %vm821, %v3690, %v3698
  %3702 = vst [vmem:[#allocation3 + $0x90] sm:$0xff] %v3697
  %3703 = vst [vmem:[#allocation3 + $0x98] sm:$0xff] %v3699
  %v3704 = vld [vmem:[%s852] sm:$0xff]
  %v3705 = vld [vmem:[%s852 + $0x8] sm:$0xff]
  %v3706 = vld [vmem:[%s852 + $0x10] sm:$0xff]
  %v3707 = vld [vmem:[%s852 + $0x18] sm:$0xff]
  %v3708 = vld [vmem:[#allocation2 + $0x4] sm:$0xff]
  %v3709 = vld [vmem:[#allocation2 + $0xc] sm:$0xff]
  %v3710 = vld [vmem:[#allocation2 + $0x14] sm:$0xf]
  %v3711 = vunpack.c.l.bf16 %v3708
  %v3712 = vunpack.c.h.bf16 %v3708
  %v3713 = vunpack.c.l.bf16 %v3709
  %v3714 = vunpack.c.h.bf16 %v3709
  %v3715 = vunpack.c.l.bf16 %v3710
  %3720 = vrot.lane.b32.xlu0 %v3704, 65
  %v3721 = vpop.permute.xlu0 %3720
  %3722 = vrot.lane.b32.xlu0 %v3705, 65
  %v3723 = vpop.permute.xlu0 %3722
  %3724 = vrot.lane.b32.xlu0 %v3706, 65
  %v3725 = vpop.permute.xlu0 %3724
  %3726 = vrot.lane.b32.xlu0 %v3707, 65
  %v3727 = vpop.permute.xlu0 %3726
  %v3728 = vsel %vm877, %v3721, %v3723
  %v3729 = vsel %vm877, %v3723, %v3725
  %v3730 = vsel %vm877, %v3725, %v3727
  %v3736 = vmul.f32 %v3711, %v3721
  %v3737 = vmul.f32 %v3712, %v3728
  %v3738 = vmul.f32 %v3713, %v3729
  %v3739 = vmul.f32 %v3714, %v3730
  %v3740 = vmul.f32 %v3715, %v3727
  %v3741 = vpack.c.bf16 %v3736, %v3736
  %v3742 = vpack.c.bf16 %v3737, %v3737
  %v3743 = vpack.c.bf16 %v3738, %v3738
  %v3744 = vpack.c.bf16 %v3739, %v3739
  %v3745 = vpack.c.bf16 %v3740, %v3740
  %v3751 = vunpack.c.l.b16 %v3741
  %v3752 = vunpack.c.l.b16 %v3742
  %v3753 = vunpack.c.l.b16 %v3743
  %v3754 = vunpack.c.l.b16 %v3744
  %v3755 = vunpack.c.l.b16 %v3745
  %v3756 = vpack.c.b16 %v3752, %v3751
  %v3757 = vpack.c.b16 %v3754, %v3753
  %v3758 = vpack.c.b16 %v3755, %v3755
  %3759 = vrot.lane.b32.xlu0 %v3756, 63
  %v3760 = vpop.permute.xlu0 %3759
  %3761 = vrot.lane.b32.xlu0 %v3757, 63
  %v3762 = vpop.permute.xlu0 %3761
  %3763 = vrot.lane.b32.xlu0 %v3758, 63
  %v3764 = vpop.permute.xlu0 %3763
  %v3765 = vrot.slane %v3760, 4
  %v3766 = vrot.slane %v3762, 4
  %v3767 = vrot.slane %v3764, 4
  %v3768 = vsel %vm378, %v3765, %v3766
  %v3769 = vsel %vm919, %v3760, %v3768
  %v3770 = vsel %vm378, %v3766, %v3767
  %v3771 = vsel %vm919, %v3762, %v3770
  %3774 = vst [vmem:[#allocation3 + $0xa0] sm:$0xff] %v3769
  %3775 = vst [vmem:[#allocation3 + $0xa8] sm:$0xff] %v3771
  %v3776 = vld [vmem:[#allocation2 + $0x18] sm:$0xff]
  %v3777 = vld [vmem:[#allocation2 + $0x20] sm:$0xff]
  %v3778 = vld [vmem:[#allocation2 + $0x28] sm:$0xf]
  %v3779 = vunpack.c.l.bf16 %v3776
  %v3780 = vunpack.c.h.bf16 %v3776
  %v3781 = vunpack.c.l.bf16 %v3777
  %v3782 = vunpack.c.h.bf16 %v3777
  %v3783 = vunpack.c.l.bf16 %v3778
  %v3784 = vmul.f32 %v3779, %v3721
  %v3785 = vmul.f32 %v3780, %v3728
  %v3786 = vmul.f32 %v3781, %v3729
  %v3787 = vmul.f32 %v3782, %v3730
  %v3788 = vmul.f32 %v3783, %v3727
  %v3789 = vpack.c.bf16 %v3784, %v3784
  %v3790 = vpack.c.bf16 %v3785, %v3785
  %v3791 = vpack.c.bf16 %v3786, %v3786
  %v3792 = vpack.c.bf16 %v3787, %v3787
  %v3793 = vpack.c.bf16 %v3788, %v3788
  %v3799 = vunpack.c.l.b16 %v3789
  %v3800 = vunpack.c.l.b16 %v3790
  %v3801 = vunpack.c.l.b16 %v3791
  %v3802 = vunpack.c.l.b16 %v3792
  %v3803 = vunpack.c.l.b16 %v3793
  %v3804 = vpack.c.b16 %v3800, %v3799
  %v3805 = vpack.c.b16 %v3802, %v3801
  %v3806 = vpack.c.b16 %v3803, %v3803
  %3807 = vrot.lane.b32.xlu0 %v3804, 63
  %v3808 = vpop.permute.xlu0 %3807
  %3809 = vrot.lane.b32.xlu0 %v3805, 63
  %v3810 = vpop.permute.xlu0 %3809
  %3811 = vrot.lane.b32.xlu0 %v3806, 63
  %v3812 = vpop.permute.xlu0 %3811
  %v3813 = vrot.slane %v3808, 4
  %v3814 = vrot.slane %v3810, 4
  %v3815 = vrot.slane %v3812, 4
  %v3816 = vsel %vm378, %v3813, %v3814
  %v3817 = vsel %vm919, %v3808, %v3816
  %v3818 = vsel %vm378, %v3814, %v3815
  %v3819 = vsel %vm919, %v3810, %v3818
  %3822 = vst [vmem:[#allocation3 + $0xb0] sm:$0xff] %v3817
  %3823 = vst [vmem:[#allocation3 + $0xb8] sm:$0xff] %v3819
  %v3824 = vld [vmem:[%s975] sm:$0xff]
  %v3825 = vld [vmem:[%s975 + $0x8] sm:$0xff]
  %v3826 = vld [vmem:[%s975 + $0x10] sm:$0xff]
  %v3827 = vld [vmem:[%s975 + $0x18] sm:$0xff]
  %v3828 = vld [vmem:[#allocation2 + $0x4] sm:$0xff]
  %v3829 = vld [vmem:[#allocation2 + $0xc] sm:$0xff]
  %v3830 = vld [vmem:[#allocation2 + $0x14] sm:$0xf]
  %v3831 = vunpack.c.l.bf16 %v3828
  %v3832 = vunpack.c.h.bf16 %v3828
  %v3833 = vunpack.c.l.bf16 %v3829
  %v3834 = vunpack.c.h.bf16 %v3829
  %v3835 = vunpack.c.l.bf16 %v3830
  %3840 = vrot.lane.b32.xlu0 %v3824, 71
  %v3841 = vpop.permute.xlu0 %3840
  %3842 = vrot.lane.b32.xlu0 %v3825, 71
  %v3843 = vpop.permute.xlu0 %3842
  %3844 = vrot.lane.b32.xlu0 %v3826, 71
  %v3845 = vpop.permute.xlu0 %3844
  %3846 = vrot.lane.b32.xlu0 %v3827, 71
  %v3847 = vpop.permute.xlu0 %3846
  %v3848 = vsel %vm1000, %v3841, %v3843
  %v3849 = vsel %vm1000, %v3843, %v3845
  %v3850 = vsel %vm1000, %v3845, %v3847
  %v3856 = vmul.f32 %v3831, %v3841
  %v3857 = vmul.f32 %v3832, %v3848
  %v3858 = vmul.f32 %v3833, %v3849
  %v3859 = vmul.f32 %v3834, %v3850
  %v3860 = vmul.f32 %v3835, %v3847
  %v3861 = vpack.c.bf16 %v3856, %v3856
  %v3862 = vpack.c.bf16 %v3857, %v3857
  %v3863 = vpack.c.bf16 %v3858, %v3858
  %v3864 = vpack.c.bf16 %v3859, %v3859
  %v3865 = vpack.c.bf16 %v3860, %v3860
  %v3871 = vunpack.c.l.b16 %v3861
  %v3872 = vunpack.c.l.b16 %v3862
  %v3873 = vunpack.c.l.b16 %v3863
  %v3874 = vunpack.c.l.b16 %v3864
  %v3875 = vunpack.c.l.b16 %v3865
  %v3876 = vpack.c.b16 %v3872, %v3871
  %v3877 = vpack.c.b16 %v3874, %v3873
  %v3878 = vpack.c.b16 %v3875, %v3875
  %3879 = vrot.lane.b32.xlu0 %v3876, 57
  %v3880 = vpop.permute.xlu0 %3879
  %3881 = vrot.lane.b32.xlu0 %v3877, 57
  %v3882 = vpop.permute.xlu0 %3881
  %3883 = vrot.lane.b32.xlu0 %v3878, 57
  %v3884 = vpop.permute.xlu0 %3883
  %v3885 = vrot.slane %v3880, 4
  %v3886 = vrot.slane %v3882, 4
  %v3887 = vrot.slane %v3884, 4
  %v3888 = vsel %vm378, %v3885, %v3886
  %v3889 = vsel %vm1042, %v3880, %v3888
  %v3890 = vsel %vm378, %v3886, %v3887
  %v3891 = vsel %vm1042, %v3882, %v3890
  %3894 = vst [vmem:[#allocation3 + $0xc0] sm:$0xff] %v3889
  %3895 = vst [vmem:[#allocation3 + $0xc8] sm:$0xff] %v3891
  %v3896 = vld [vmem:[#allocation2 + $0x18] sm:$0xff]
  %v3897 = vld [vmem:[#allocation2 + $0x20] sm:$0xff]
  %v3898 = vld [vmem:[#allocation2 + $0x28] sm:$0xf]
  %v3899 = vunpack.c.l.bf16 %v3896
  %v3900 = vunpack.c.h.bf16 %v3896
  %v3901 = vunpack.c.l.bf16 %v3897
  %v3902 = vunpack.c.h.bf16 %v3897
  %v3903 = vunpack.c.l.bf16 %v3898
  %v3904 = vmul.f32 %v3899, %v3841
  %v3905 = vmul.f32 %v3900, %v3848
  %v3906 = vmul.f32 %v3901, %v3849
  %v3907 = vmul.f32 %v3902, %v3850
  %v3908 = vmul.f32 %v3903, %v3847
  %v3909 = vpack.c.bf16 %v3904, %v3904
  %v3910 = vpack.c.bf16 %v3905, %v3905
  %v3911 = vpack.c.bf16 %v3906, %v3906
  %v3912 = vpack.c.bf16 %v3907, %v3907
  %v3913 = vpack.c.bf16 %v3908, %v3908
  %v3919 = vunpack.c.l.b16 %v3909
  %v3920 = vunpack.c.l.b16 %v3910
  %v3921 = vunpack.c.l.b16 %v3911
  %v3922 = vunpack.c.l.b16 %v3912
  %v3923 = vunpack.c.l.b16 %v3913
  %v3924 = vpack.c.b16 %v3920, %v3919
  %v3925 = vpack.c.b16 %v3922, %v3921
  %v3926 = vpack.c.b16 %v3923, %v3923
  %3927 = vrot.lane.b32.xlu0 %v3924, 57
  %v3928 = vpop.permute.xlu0 %3927
  %3929 = vrot.lane.b32.xlu0 %v3925, 57
  %v3930 = vpop.permute.xlu0 %3929
  %3931 = vrot.lane.b32.xlu0 %v3926, 57
  %v3932 = vpop.permute.xlu0 %3931
  %v3933 = vrot.slane %v3928, 4
  %v3934 = vrot.slane %v3930, 4
  %v3935 = vrot.slane %v3932, 4
  %v3936 = vsel %vm378, %v3933, %v3934
  %v3937 = vsel %vm1042, %v3928, %v3936
  %v3938 = vsel %vm378, %v3934, %v3935
  %v3939 = vsel %vm1042, %v3930, %v3938
  %3942 = vst [vmem:[#allocation3 + $0xd0] sm:$0xff] %v3937
  %3943 = vst [vmem:[#allocation3 + $0xd8] sm:$0xff] %v3939
  %v3944 = vld [vmem:[%s1098] sm:$0xff]
  %v3945 = vld [vmem:[%s1098 + $0x8] sm:$0xff]
  %v3946 = vld [vmem:[%s1098 + $0x10] sm:$0xff]
  %v3947 = vld [vmem:[%s1098 + $0x18] sm:$0xff]
  %v3948 = vld [vmem:[#allocation2 + $0x4] sm:$0xff]
  %v3949 = vld [vmem:[#allocation2 + $0xc] sm:$0xff]
  %v3950 = vld [vmem:[#allocation2 + $0x14] sm:$0xf]
  %v3951 = vunpack.c.l.bf16 %v3948
  %v3952 = vunpack.c.h.bf16 %v3948
  %v3953 = vunpack.c.l.bf16 %v3949
  %v3954 = vunpack.c.h.bf16 %v3949
  %v3955 = vunpack.c.l.bf16 %v3950
  %3960 = vrot.lane.b32.xlu0 %v3944, 72
  %v3961 = vpop.permute.xlu0 %3960
  %3962 = vrot.lane.b32.xlu0 %v3945, 72
  %v3963 = vpop.permute.xlu0 %3962
  %3964 = vrot.lane.b32.xlu0 %v3946, 72
  %v3965 = vpop.permute.xlu0 %3964
  %3966 = vrot.lane.b32.xlu0 %v3947, 72
  %v3967 = vpop.permute.xlu0 %3966
  %v3968 = vsel %vm1123, %v3961, %v3963
  %v3969 = vsel %vm1123, %v3963, %v3965
  %v3970 = vsel %vm1123, %v3965, %v3967
  %v3976 = vmul.f32 %v3951, %v3961
  %v3977 = vmul.f32 %v3952, %v3968
  %v3978 = vmul.f32 %v3953, %v3969
  %v3979 = vmul.f32 %v3954, %v3970
  %v3980 = vmul.f32 %v3955, %v3967
  %v3981 = vpack.c.bf16 %v3976, %v3976
  %v3982 = vpack.c.bf16 %v3977, %v3977
  %v3983 = vpack.c.bf16 %v3978, %v3978
  %v3984 = vpack.c.bf16 %v3979, %v3979
  %v3985 = vpack.c.bf16 %v3980, %v3980
  %v3991 = vunpack.c.l.b16 %v3981
  %v3992 = vunpack.c.l.b16 %v3982
  %v3993 = vunpack.c.l.b16 %v3983
  %v3994 = vunpack.c.l.b16 %v3984
  %v3995 = vunpack.c.l.b16 %v3985
  %v3996 = vpack.c.b16 %v3992, %v3991
  %v3997 = vpack.c.b16 %v3994, %v3993
  %v3998 = vpack.c.b16 %v3995, %v3995
  %3999 = vrot.lane.b32.xlu0 %v3996, 56
  %v4000 = vpop.permute.xlu0 %3999
  %4001 = vrot.lane.b32.xlu0 %v3997, 56
  %v4002 = vpop.permute.xlu0 %4001
  %4003 = vrot.lane.b32.xlu0 %v3998, 56
  %v4004 = vpop.permute.xlu0 %4003
  %v4005 = vrot.slane %v4000, 4
  %v4006 = vrot.slane %v4002, 4
  %v4007 = vrot.slane %v4004, 4
  %v4008 = vsel %vm378, %v4005, %v4006
  %v4009 = vsel %vm1165, %v4000, %v4008
  %v4010 = vsel %vm378, %v4006, %v4007
  %v4011 = vsel %vm1165, %v4002, %v4010
  %4014 = vst [vmem:[#allocation3 + $0xe0] sm:$0xff] %v4009
  %4015 = vst [vmem:[#allocation3 + $0xe8] sm:$0xff] %v4011
  %v4016 = vld [vmem:[#allocation2 + $0x18] sm:$0xff]
  %v4017 = vld [vmem:[#allocation2 + $0x20] sm:$0xff]
  %v4018 = vld [vmem:[#allocation2 + $0x28] sm:$0xf]
  %v4019 = vunpack.c.l.bf16 %v4016
  %v4020 = vunpack.c.h.bf16 %v4016
  %v4021 = vunpack.c.l.bf16 %v4017
  %v4022 = vunpack.c.h.bf16 %v4017
  %v4023 = vunpack.c.l.bf16 %v4018
  %v4024 = vmul.f32 %v4019, %v3961
  %v4025 = vmul.f32 %v4020, %v3968
  %v4026 = vmul.f32 %v4021, %v3969
  %v4027 = vmul.f32 %v4022, %v3970
  %v4028 = vmul.f32 %v4023, %v3967
  %v4029 = vpack.c.bf16 %v4024, %v4024
  %v4030 = vpack.c.bf16 %v4025, %v4025
  %v4031 = vpack.c.bf16 %v4026, %v4026
  %v4032 = vpack.c.bf16 %v4027, %v4027
  %v4033 = vpack.c.bf16 %v4028, %v4028
  %v4039 = vunpack.c.l.b16 %v4029
  %v4040 = vunpack.c.l.b16 %v4030
  %v4041 = vunpack.c.l.b16 %v4031
  %v4042 = vunpack.c.l.b16 %v4032
  %v4043 = vunpack.c.l.b16 %v4033
  %v4044 = vpack.c.b16 %v4040, %v4039
  %v4045 = vpack.c.b16 %v4042, %v4041
  %v4046 = vpack.c.b16 %v4043, %v4043
  %4047 = vrot.lane.b32.xlu0 %v4044, 56
  %v4048 = vpop.permute.xlu0 %4047
  %4049 = vrot.lane.b32.xlu0 %v4045, 56
  %v4050 = vpop.permute.xlu0 %4049
  %4051 = vrot.lane.b32.xlu0 %v4046, 56
  %v4052 = vpop.permute.xlu0 %4051
  %v4053 = vrot.slane %v4048, 4
  %v4054 = vrot.slane %v4050, 4
  %v4055 = vrot.slane %v4052, 4
  %v4056 = vsel %vm378, %v4053, %v4054
  %v4057 = vsel %vm1165, %v4048, %v4056
  %v4058 = vsel %vm378, %v4054, %v4055
  %v4059 = vsel %vm1165, %v4050, %v4058
  %4062 = vst [vmem:[#allocation3 + $0xf0] sm:$0xff] %v4057
  %4063 = vst [vmem:[#allocation3 + $0xf8] sm:$0xff] %v4059
  %v4064 = vld [vmem:[%s1221] sm:$0xff]
  %v4065 = vld [vmem:[%s1221 + $0x8] sm:$0xff]
  %v4066 = vld [vmem:[%s1221 + $0x10] sm:$0xff]
  %v4067 = vld [vmem:[%s1221 + $0x18] sm:$0xff]
  %v4068 = vld [vmem:[#allocation2 + $0x4] sm:$0xff]
  %v4069 = vld [vmem:[#allocation2 + $0xc] sm:$0xff]
  %v4070 = vld [vmem:[#allocation2 + $0x14] sm:$0xf]
  %v4071 = vunpack.c.l.bf16 %v4068
  %v4072 = vunpack.c.h.bf16 %v4068
  %v4073 = vunpack.c.l.bf16 %v4069
  %v4074 = vunpack.c.h.bf16 %v4069
  %v4075 = vunpack.c.l.bf16 %v4070
  %4080 = vrot.lane.b32.xlu0 %v4064, 73
  %v4081 = vpop.permute.xlu0 %4080
  %4082 = vrot.lane.b32.xlu0 %v4065, 73
  %v4083 = vpop.permute.xlu0 %4082
  %4084 = vrot.lane.b32.xlu0 %v4066, 73
  %v4085 = vpop.permute.xlu0 %4084
  %4086 = vrot.lane.b32.xlu0 %v4067, 73
  %v4087 = vpop.permute.xlu0 %4086
  %v4088 = vsel %vm1246, %v4081, %v4083
  %v4089 = vsel %vm1246, %v4083, %v4085
  %v4090 = vsel %vm1246, %v4085, %v4087
  %v4096 = vmul.f32 %v4071, %v4081
  %v4097 = vmul.f32 %v4072, %v4088
  %v4098 = vmul.f32 %v4073, %v4089
  %v4099 = vmul.f32 %v4074, %v4090
  %v4100 = vmul.f32 %v4075, %v4087
  %v4101 = vpack.c.bf16 %v4096, %v4096
  %v4102 = vpack.c.bf16 %v4097, %v4097
  %v4103 = vpack.c.bf16 %v4098, %v4098
  %v4104 = vpack.c.bf16 %v4099, %v4099
  %v4105 = vpack.c.bf16 %v4100, %v4100
  %v4111 = vunpack.c.l.b16 %v4101
  %v4112 = vunpack.c.l.b16 %v4102
  %v4113 = vunpack.c.l.b16 %v4103
  %v4114 = vunpack.c.l.b16 %v4104
  %v4115 = vunpack.c.l.b16 %v4105
  %v4116 = vpack.c.b16 %v4112, %v4111
  %v4117 = vpack.c.b16 %v4114, %v4113
  %v4118 = vpack.c.b16 %v4115, %v4115
  %4119 = vrot.lane.b32.xlu0 %v4116, 55
  %v4120 = vpop.permute.xlu0 %4119
  %4121 = vrot.lane.b32.xlu0 %v4117, 55
  %v4122 = vpop.permute.xlu0 %4121
  %4123 = vrot.lane.b32.xlu0 %v4118, 55
  %v4124 = vpop.permute.xlu0 %4123
  %v4125 = vrot.slane %v4120, 4
  %v4126 = vrot.slane %v4122, 4
  %v4127 = vrot.slane %v4124, 4
  %v4128 = vsel %vm378, %v4125, %v4126
  %v4129 = vsel %vm1288, %v4120, %v4128
  %v4130 = vsel %vm378, %v4126, %v4127
  %v4131 = vsel %vm1288, %v4122, %v4130
  %4134 = vst [vmem:[#allocation3 + $0x100] sm:$0xff] %v4129
  %4135 = vst [vmem:[#allocation3 + $0x108] sm:$0xff] %v4131
  %v4136 = vld [vmem:[#allocation2 + $0x18] sm:$0xff]
  %v4137 = vld [vmem:[#allocation2 + $0x20] sm:$0xff]
  %v4138 = vld [vmem:[#allocation2 + $0x28] sm:$0xf]
  %v4139 = vunpack.c.l.bf16 %v4136
  %v4140 = vunpack.c.h.bf16 %v4136
  %v4141 = vunpack.c.l.bf16 %v4137
  %v4142 = vunpack.c.h.bf16 %v4137
  %v4143 = vunpack.c.l.bf16 %v4138
  %v4144 = vmul.f32 %v4139, %v4081
  %v4145 = vmul.f32 %v4140, %v4088
  %v4146 = vmul.f32 %v4141, %v4089
  %v4147 = vmul.f32 %v4142, %v4090
  %v4148 = vmul.f32 %v4143, %v4087
  %v4149 = vpack.c.bf16 %v4144, %v4144
  %v4150 = vpack.c.bf16 %v4145, %v4145
  %v4151 = vpack.c.bf16 %v4146, %v4146
  %v4152 = vpack.c.bf16 %v4147, %v4147
  %v4153 = vpack.c.bf16 %v4148, %v4148
  %v4159 = vunpack.c.l.b16 %v4149
  %v4160 = vunpack.c.l.b16 %v4150
  %v4161 = vunpack.c.l.b16 %v4151
  %v4162 = vunpack.c.l.b16 %v4152
  %v4163 = vunpack.c.l.b16 %v4153
  %v4164 = vpack.c.b16 %v4160, %v4159
  %v4165 = vpack.c.b16 %v4162, %v4161
  %v4166 = vpack.c.b16 %v4163, %v4163
  %4167 = vrot.lane.b32.xlu0 %v4164, 55
  %v4168 = vpop.permute.xlu0 %4167
  %4169 = vrot.lane.b32.xlu0 %v4165, 55
  %v4170 = vpop.permute.xlu0 %4169
  %4171 = vrot.lane.b32.xlu0 %v4166, 55
  %v4172 = vpop.permute.xlu0 %4171
  %v4173 = vrot.slane %v4168, 4
  %v4174 = vrot.slane %v4170, 4
  %v4175 = vrot.slane %v4172, 4
  %v4176 = vsel %vm378, %v4173, %v4174
  %v4177 = vsel %vm1288, %v4168, %v4176
  %v4178 = vsel %vm378, %v4174, %v4175
  %v4179 = vsel %vm1288, %v4170, %v4178
  %4182 = vst [vmem:[#allocation3 + $0x110] sm:$0xff] %v4177
  %4183 = vst [vmem:[#allocation3 + $0x118] sm:$0xff] %v4179
  %s4184 = scalar_lea.vmem %s3, 8
  %v4185 = vld [vmem:[%s4184] sm:$0xf]
  %v4186 = vld [vmem:[#allocation3] sm:$0xff]
  %v4187 = vld [vmem:[#allocation3 + $0x8] sm:$0xff]
  %v4188 = vld [vmem:[#allocation3 + $0x10] sm:$0xff]
  %v4189 = vld [vmem:[#allocation3 + $0x18] sm:$0xff]
  %v4190 = vld [vmem:[#allocation3 + $0x20] sm:$0xff]
  %v4191 = vld [vmem:[#allocation3 + $0x28] sm:$0xff]
  %v4192 = vld [vmem:[#allocation3 + $0x30] sm:$0xff]
  %v4193 = vld [vmem:[#allocation3 + $0x38] sm:$0xff]
  %v4194 = vld [vmem:[#allocation3 + $0x40] sm:$0xff]
  %v4195 = vld [vmem:[#allocation3 + $0x48] sm:$0xff]
  %v4196 = vld [vmem:[#allocation3 + $0x50] sm:$0xff]
  %v4197 = vld [vmem:[#allocation3 + $0x58] sm:$0xff]
  %v4198 = vld [vmem:[#allocation3 + $0x60] sm:$0xff]
  %v4199 = vld [vmem:[#allocation3 + $0x68] sm:$0xff]
  %v4200 = vld [vmem:[#allocation3 + $0x70] sm:$0xff]
  %v4201 = vld [vmem:[#allocation3 + $0x78] sm:$0xff]
  %v4202 = vld [vmem:[#allocation3 + $0x80] sm:$0xff]
  %v4203 = vld [vmem:[#allocation3 + $0x88] sm:$0xff]
  %v4204 = vld [vmem:[#allocation3 + $0x90] sm:$0xff]
  %v4205 = vld [vmem:[#allocation3 + $0x98] sm:$0xff]
  %v4206 = vld [vmem:[#allocation3 + $0xa0] sm:$0xff]
  %v4207 = vld [vmem:[#allocation3 + $0xa8] sm:$0xff]
  %v4208 = vld [vmem:[#allocation3 + $0xb0] sm:$0xff]
  %v4209 = vld [vmem:[#allocation3 + $0xb8] sm:$0xff]
  %v4210 = vld [vmem:[#allocation3 + $0xc0] sm:$0xff]
  %v4211 = vld [vmem:[#allocation3 + $0xc8] sm:$0xff]
  %v4212 = vld [vmem:[#allocation3 + $0xd0] sm:$0xff]
  %v4213 = vld [vmem:[#allocation3 + $0xd8] sm:$0xff]
  %v4214 = vld [vmem:[#allocation3 + $0xe0] sm:$0xff]
  %v4215 = vld [vmem:[#allocation3 + $0xe8] sm:$0xff]
  %v4216 = vld [vmem:[#allocation3 + $0xf0] sm:$0xff]
  %v4217 = vld [vmem:[#allocation3 + $0xf8] sm:$0xff]
  %v4218 = vld [vmem:[#allocation3 + $0x100] sm:$0xff]
  %v4219 = vld [vmem:[#allocation3 + $0x108] sm:$0xff]
  %v4220 = vld [vmem:[#allocation3 + $0x110] sm:$0xff]
  %v4221 = vld [vmem:[#allocation3 + $0x118] sm:$0xff]
  %v4258 = vunpack.c.l.b16 %v4186
  %v4259 = vunpack.c.h.b16 %v4186
  %v4260 = vunpack.c.l.b16 %v4187
  %v4261 = vunpack.c.h.b16 %v4187
  %v4262 = vunpack.c.l.b16 %v4188
  %v4263 = vunpack.c.h.b16 %v4188
  %v4264 = vunpack.c.l.b16 %v4189
  %v4265 = vunpack.c.h.b16 %v4189
  %v4266 = vunpack.c.l.b16 %v4190
  %v4267 = vunpack.c.h.b16 %v4190
  %v4268 = vunpack.c.l.b16 %v4191
  %v4269 = vunpack.c.h.b16 %v4191
  %v4270 = vunpack.c.l.b16 %v4192
  %v4271 = vunpack.c.h.b16 %v4192
  %v4272 = vunpack.c.l.b16 %v4193
  %v4273 = vunpack.c.h.b16 %v4193
  %v4274 = vunpack.c.l.b16 %v4194
  %v4275 = vunpack.c.h.b16 %v4194
  %v4276 = vunpack.c.l.b16 %v4195
  %v4277 = vunpack.c.h.b16 %v4195
  %v4278 = vunpack.c.l.b16 %v4196
  %v4279 = vunpack.c.h.b16 %v4196
  %v4280 = vunpack.c.l.b16 %v4197
  %v4281 = vunpack.c.h.b16 %v4197
  %v4282 = vunpack.c.l.b16 %v4198
  %v4283 = vunpack.c.h.b16 %v4198
  %v4284 = vunpack.c.l.b16 %v4199
  %v4285 = vunpack.c.h.b16 %v4199
  %v4286 = vunpack.c.l.b16 %v4200
  %v4287 = vunpack.c.h.b16 %v4200
  %v4288 = vunpack.c.l.b16 %v4201
  %v4289 = vunpack.c.h.b16 %v4201
  %v4290 = vunpack.c.l.b16 %v4202
  %v4291 = vunpack.c.h.b16 %v4202
  %v4292 = vunpack.c.l.b16 %v4203
  %v4293 = vunpack.c.h.b16 %v4203
  %v4294 = vunpack.c.l.b16 %v4204
  %v4295 = vunpack.c.h.b16 %v4204
  %v4296 = vunpack.c.l.b16 %v4205
  %v4297 = vunpack.c.h.b16 %v4205
  %v4298 = vunpack.c.l.b16 %v4206
  %v4299 = vunpack.c.h.b16 %v4206
  %v4300 = vunpack.c.l.b16 %v4207
  %v4301 = vunpack.c.h.b16 %v4207
  %v4302 = vunpack.c.l.b16 %v4208
  %v4303 = vunpack.c.h.b16 %v4208
  %v4304 = vunpack.c.l.b16 %v4209
  %v4305 = vunpack.c.h.b16 %v4209
  %v4306 = vunpack.c.l.b16 %v4210
  %v4307 = vunpack.c.h.b16 %v4210
  %v4308 = vunpack.c.l.b16 %v4211
  %v4309 = vunpack.c.h.b16 %v4211
  %v4310 = vunpack.c.l.b16 %v4212
  %v4311 = vunpack.c.h.b16 %v4212
  %v4312 = vunpack.c.l.b16 %v4213
  %v4313 = vunpack.c.h.b16 %v4213
  %v4314 = vunpack.c.l.b16 %v4214
  %v4315 = vunpack.c.h.b16 %v4214
  %v4316 = vunpack.c.l.b16 %v4215
  %v4317 = vunpack.c.h.b16 %v4215
  %v4318 = vunpack.c.l.b16 %v4216
  %v4319 = vunpack.c.h.b16 %v4216
  %v4320 = vunpack.c.l.b16 %v4217
  %v4321 = vunpack.c.h.b16 %v4217
  %v4322 = vunpack.c.l.b16 %v4218
  %v4323 = vunpack.c.h.b16 %v4218
  %v4324 = vunpack.c.l.b16 %v4219
  %v4325 = vunpack.c.h.b16 %v4219
  %v4326 = vunpack.c.l.b16 %v4220
  %v4327 = vunpack.c.h.b16 %v4220
  %v4328 = vunpack.c.l.b16 %v4221
  %v4329 = vunpack.c.h.b16 %v4221
  %v4330 = vpack.c.b16 %v4266, %v4258
  %v4331 = vpack.c.b16 %v4267, %v4259
  %v4332 = vpack.c.b16 %v4268, %v4260
  %v4333 = vpack.c.b16 %v4269, %v4261
  %v4334 = vpack.c.b16 %v4270, %v4262
  %v4335 = vpack.c.b16 %v4271, %v4263
  %v4336 = vpack.c.b16 %v4272, %v4264
  %v4337 = vpack.c.b16 %v4273, %v4265
  %v4338 = vpack.c.b16 %v4282, %v4274
  %v4339 = vpack.c.b16 %v4283, %v4275
  %v4340 = vpack.c.b16 %v4284, %v4276
  %v4341 = vpack.c.b16 %v4285, %v4277
  %v4342 = vpack.c.b16 %v4286, %v4278
  %v4343 = vpack.c.b16 %v4287, %v4279
  %v4344 = vpack.c.b16 %v4288, %v4280
  %v4345 = vpack.c.b16 %v4289, %v4281
  %v4346 = vpack.c.b16 %v4298, %v4290
  %v4347 = vpack.c.b16 %v4299, %v4291
  %v4348 = vpack.c.b16 %v4300, %v4292
  %v4349 = vpack.c.b16 %v4301, %v4293
  %v4350 = vpack.c.b16 %v4302, %v4294
  %v4351 = vpack.c.b16 %v4303, %v4295
  %v4352 = vpack.c.b16 %v4304, %v4296
  %v4353 = vpack.c.b16 %v4305, %v4297
  %v4354 = vpack.c.b16 %v4314, %v4306
  %v4355 = vpack.c.b16 %v4315, %v4307
  %v4356 = vpack.c.b16 %v4316, %v4308
  %v4357 = vpack.c.b16 %v4317, %v4309
  %v4358 = vpack.c.b16 %v4318, %v4310
  %v4359 = vpack.c.b16 %v4319, %v4311
  %v4360 = vpack.c.b16 %v4320, %v4312
  %v4361 = vpack.c.b16 %v4321, %v4313
  %v4362 = vpack.c.b16 %v4322, %v4322
  %v4363 = vpack.c.b16 %v4323, %v4323
  %v4364 = vpack.c.b16 %v4324, %v4324
  %v4365 = vpack.c.b16 %v4325, %v4325
  %v4366 = vpack.c.b16 %v4326, %v4326
  %v4367 = vpack.c.b16 %v4327, %v4327
  %v4368 = vpack.c.b16 %v4328, %v4328
  %v4369 = vpack.c.b16 %v4329, %v4329
  %v4403 = vsel %vm1123, %v4185, 0
  %v4406 = vsel %vm1564, %v4362, 0
  %v4409 = vsel %vm1564, %v4363, 0
  %v4412 = vsel %vm1564, %v4364, 0
  %v4415 = vsel %vm1564, %v4365, 0
  %v4418 = vsel %vm1564, %v4366, 0
  %v4421 = vsel %vm1564, %v4367, 0
  %v4424 = vsel %vm1564, %v4368, 0
  %v4427 = vsel %vm1564, %v4369, 0
  %4429 = vmatprep.subr.bf16.mxu0 0
  %4430 = vmatpush1.bf16.msra.mxu0 0
  %4431 = vmatprep.subr.bf16.mxu0 0
  %4432 = vmatpush1.bf16.msra.mxu0 0
  %4433 = vmatprep.subr.bf16.mxu0 0
  %4434 = vmatpush1.bf16.msra.mxu0 0
  %4435 = vmatprep.subr.bf16.mxu0 %v4409
  %4436 = vmatpush1.bf16.msra.mxu0 %v4406
  %4437 = vmatprep.subr.bf16.mxu0 %v4355
  %4438 = vmatpush1.bf16.msra.mxu0 %v4354
  %4439 = vmatprep.subr.bf16.mxu0 %v4347
  %4440 = vmatpush1.bf16.msra.mxu0 %v4346
  %4441 = vmatprep.subr.bf16.mxu0 %v4339
  %4442 = vmatpush1.bf16.msra.mxu0 %v4338
  %4443 = vmatprep.subr.bf16.mxu0 %v4331
  %4444 = vmatpush1.bf16.msra.mxu0 %v4330
  %4445 = vmatprep.subr.bf16.mxu0 0
  %4446 = vmatpush2.bf16.msra.mxu0 0
  %4447 = vmatprep.subr.bf16.mxu0 0
  %4448 = vmatpush2.bf16.msra.mxu0 0
  %4449 = vmatprep.subr.bf16.mxu0 0
  %4450 = vmatpush2.bf16.msra.mxu0 0
  %4451 = vmatprep.subr.bf16.mxu0 0
  %4452 = vmatpush2.bf16.msra.mxu0 0
  %4453 = vmatprep.subr.bf16.mxu0 0
  %4454 = vmatpush2.bf16.msra.mxu0 0
  %4455 = vmatprep.subr.bf16.mxu0 0
  %4456 = vmatpush2.bf16.msra.mxu0 0
  %4457 = vmatprep.subr.bf16.mxu0 0
  %4458 = vmatpush2.bf16.msra.mxu0 0
  %4459 = vmatprep.subr.bf16.mxu0 0
  %4460 = vmatpush2.bf16.msra.mxu0 0
  %4461 = vmatprep.mubr.bf16.mxu0 0
  %4462 = vmatmul.mubr.bf16.gmra.mxu0 %v4403
  %v4463 = vpop.f32.mrf.mxu0
  %v4464 = vadd.f32 0.0, %v4463
  %v4465 = vpop.f32.mrf.mxu0
  %v4466 = vadd.f32 0.0, %v4465
  %v4467 = vpop.f32.mrf.mxu0
  %v4468 = vpop.f32.mrf.mxu0
  %4469 = vdwg.mxu0
  %4470 = vmatprep.subr.bf16.mxu0 0
  %4471 = vmatpush1.bf16.msra.mxu0 0
  %4472 = vmatprep.subr.bf16.mxu0 0
  %4473 = vmatpush1.bf16.msra.mxu0 0
  %4474 = vmatprep.subr.bf16.mxu0 0
  %4475 = vmatpush1.bf16.msra.mxu0 0
  %4476 = vmatprep.subr.bf16.mxu0 %v4415
  %4477 = vmatpush1.bf16.msra.mxu0 %v4412
  %4478 = vmatprep.subr.bf16.mxu0 %v4357
  %4479 = vmatpush1.bf16.msra.mxu0 %v4356
  %4480 = vmatprep.subr.bf16.mxu0 %v4349
  %4481 = vmatpush1.bf16.msra.mxu0 %v4348
  %4482 = vmatprep.subr.bf16.mxu0 %v4341
  %4483 = vmatpush1.bf16.msra.mxu0 %v4340
  %4484 = vmatprep.subr.bf16.mxu0 %v4333
  %4485 = vmatpush1.bf16.msra.mxu0 %v4332
  %4486 = vmatprep.subr.bf16.mxu0 0
  %4487 = vmatpush2.bf16.msra.mxu0 0
  %4488 = vmatprep.subr.bf16.mxu0 0
  %4489 = vmatpush2.bf16.msra.mxu0 0
  %4490 = vmatprep.subr.bf16.mxu0 0
  %4491 = vmatpush2.bf16.msra.mxu0 0
  %4492 = vmatprep.subr.bf16.mxu0 0
  %4493 = vmatpush2.bf16.msra.mxu0 0
  %4494 = vmatprep.subr.bf16.mxu0 0
  %4495 = vmatpush2.bf16.msra.mxu0 0
  %4496 = vmatprep.subr.bf16.mxu0 0
  %4497 = vmatpush2.bf16.msra.mxu0 0
  %4498 = vmatprep.subr.bf16.mxu0 0
  %4499 = vmatpush2.bf16.msra.mxu0 0
  %4500 = vmatprep.subr.bf16.mxu0 0
  %4501 = vmatpush2.bf16.msra.mxu0 0
  %4502 = vmatprep.mubr.bf16.mxu0 0
  %4503 = vmatmul.mubr.bf16.gmra.mxu0 %v4403
  %v4504 = vpop.f32.mrf.mxu0
  %v4505 = vadd.f32 0.0, %v4504
  %v4506 = vpop.f32.mrf.mxu0
  %v4507 = vadd.f32 0.0, %v4506
  %v4508 = vpop.f32.mrf.mxu0
  %v4509 = vpop.f32.mrf.mxu0
  %4510 = vdwg.mxu0
  %4511 = vmatprep.subr.bf16.mxu0 0
  %4512 = vmatpush1.bf16.msra.mxu0 0
  %4513 = vmatprep.subr.bf16.mxu0 0
  %4514 = vmatpush1.bf16.msra.mxu0 0
  %4515 = vmatprep.subr.bf16.mxu0 0
  %4516 = vmatpush1.bf16.msra.mxu0 0
  %4517 = vmatprep.subr.bf16.mxu0 %v4421
  %4518 = vmatpush1.bf16.msra.mxu0 %v4418
  %4519 = vmatprep.subr.bf16.mxu0 %v4359
  %4520 = vmatpush1.bf16.msra.mxu0 %v4358
  %4521 = vmatprep.subr.bf16.mxu0 %v4351
  %4522 = vmatpush1.bf16.msra.mxu0 %v4350
  %4523 = vmatprep.subr.bf16.mxu0 %v4343
  %4524 = vmatpush1.bf16.msra.mxu0 %v4342
  %4525 = vmatprep.subr.bf16.mxu0 %v4335
  %4526 = vmatpush1.bf16.msra.mxu0 %v4334
  %4527 = vmatprep.subr.bf16.mxu0 0
  %4528 = vmatpush2.bf16.msra.mxu0 0
  %4529 = vmatprep.subr.bf16.mxu0 0
  %4530 = vmatpush2.bf16.msra.mxu0 0
  %4531 = vmatprep.subr.bf16.mxu0 0
  %4532 = vmatpush2.bf16.msra.mxu0 0
  %4533 = vmatprep.subr.bf16.mxu0 0
  %4534 = vmatpush2.bf16.msra.mxu0 0
  %4535 = vmatprep.subr.bf16.mxu0 0
  %4536 = vmatpush2.bf16.msra.mxu0 0
  %4537 = vmatprep.subr.bf16.mxu0 0
  %4538 = vmatpush2.bf16.msra.mxu0 0
  %4539 = vmatprep.subr.bf16.mxu0 0
  %4540 = vmatpush2.bf16.msra.mxu0 0
  %4541 = vmatprep.subr.bf16.mxu0 0
  %4542 = vmatpush2.bf16.msra.mxu0 0
  %4543 = vmatprep.mubr.bf16.mxu0 0
  %4544 = vmatmul.mubr.bf16.gmra.mxu0 %v4403
  %v4545 = vpop.f32.mrf.mxu0
  %v4546 = vadd.f32 0.0, %v4545
  %v4547 = vpop.f32.mrf.mxu0
  %v4548 = vadd.f32 0.0, %v4547
  %v4549 = vpop.f32.mrf.mxu0
  %v4550 = vpop.f32.mrf.mxu0
  %4551 = vdwg.mxu0
  %4552 = vmatprep.subr.bf16.mxu0 0
  %4553 = vmatpush1.bf16.msra.mxu0 0
  %4554 = vmatprep.subr.bf16.mxu0 0
  %4555 = vmatpush1.bf16.msra.mxu0 0
  %4556 = vmatprep.subr.bf16.mxu0 0
  %4557 = vmatpush1.bf16.msra.mxu0 0
  %4558 = vmatprep.subr.bf16.mxu0 %v4427
  %4559 = vmatpush1.bf16.msra.mxu0 %v4424
  %4560 = vmatprep.subr.bf16.mxu0 %v4361
  %4561 = vmatpush1.bf16.msra.mxu0 %v4360
  %4562 = vmatprep.subr.bf16.mxu0 %v4353
  %4563 = vmatpush1.bf16.msra.mxu0 %v4352
  %4564 = vmatprep.subr.bf16.mxu0 %v4345
  %4565 = vmatpush1.bf16.msra.mxu0 %v4344
  %4566 = vmatprep.subr.bf16.mxu0 %v4337
  %4567 = vmatpush1.bf16.msra.mxu0 %v4336
  %4568 = vmatprep.subr.bf16.mxu0 0
  %4569 = vmatpush2.bf16.msra.mxu0 0
  %4570 = vmatprep.subr.bf16.mxu0 0
  %4571 = vmatpush2.bf16.msra.mxu0 0
  %4572 = vmatprep.subr.bf16.mxu0 0
  %4573 = vmatpush2.bf16.msra.mxu0 0
  %4574 = vmatprep.subr.bf16.mxu0 0
  %4575 = vmatpush2.bf16.msra.mxu0 0
  %4576 = vmatprep.subr.bf16.mxu0 0
  %4577 = vmatpush2.bf16.msra.mxu0 0
  %4578 = vmatprep.subr.bf16.mxu0 0
  %4579 = vmatpush2.bf16.msra.mxu0 0
  %4580 = vmatprep.subr.bf16.mxu0 0
  %4581 = vmatpush2.bf16.msra.mxu0 0
  %4582 = vmatprep.subr.bf16.mxu0 0
  %4583 = vmatpush2.bf16.msra.mxu0 0
  %4584 = vmatprep.mubr.bf16.mxu0 0
  %4585 = vmatmul.mubr.bf16.gmra.mxu0 %v4403
  %v4586 = vpop.f32.mrf.mxu0
  %v4587 = vadd.f32 0.0, %v4586
  %v4588 = vpop.f32.mrf.mxu0
  %v4589 = vadd.f32 0.0, %v4588
  %v4590 = vpop.f32.mrf.mxu0
  %v4591 = vpop.f32.mrf.mxu0
  %4592 = vdwg.mxu0
  %v4593 = vld [vmem:[#allocation4] sm:$0xff]
  %v4594 = vld [vmem:[#allocation4 + $0x8] sm:$0xff]
  %v4595 = vld [vmem:[#allocation4 + $0x10] sm:$0xff]
  %v4596 = vld [vmem:[#allocation4 + $0x18] sm:$0xff]
  %v4597 = vld [vmem:[#allocation4 + $0x20] sm:$0xff]
  %v4598 = vld [vmem:[#allocation4 + $0x28] sm:$0xff]
  %v4599 = vld [vmem:[#allocation4 + $0x30] sm:$0xff]
  %v4600 = vld [vmem:[#allocation4 + $0x38] sm:$0xff]
  %v4601 = vadd.f32 %v4593, %v4464
  %v4602 = vadd.f32 %v4594, %v4466
  %v4603 = vadd.f32 %v4595, %v4505
  %v4604 = vadd.f32 %v4596, %v4507
  %v4605 = vadd.f32 %v4597, %v4546
  %v4606 = vadd.f32 %v4598, %v4548
  %v4607 = vadd.f32 %v4599, %v4587
  %v4608 = vadd.f32 %v4600, %v4589
  %4609 = vst [vmem:[#allocation4] sm:$0xff] %v4601
  %4610 = vst [vmem:[#allocation4 + $0x8] sm:$0xff] %v4602
  %4611 = vst [vmem:[#allocation4 + $0x10] sm:$0xff] %v4603
  %4612 = vst [vmem:[#allocation4 + $0x18] sm:$0xff] %v4604
  %4613 = vst [vmem:[#allocation4 + $0x20] sm:$0xff] %v4605
  %4614 = vst [vmem:[#allocation4 + $0x28] sm:$0xff] %v4606
  %4615 = vst [vmem:[#allocation4 + $0x30] sm:$0xff] %v4607
  %4616 = vst [vmem:[#allocation4 + $0x38] sm:$0xff] %v4608
  %v4617 = vld [vmem:[#allocation4] sm:$0xff]
  %v4618 = vld [vmem:[#allocation4 + $0x8] sm:$0xff]
  %v4619 = vld [vmem:[#allocation4 + $0x10] sm:$0xff]
  %v4620 = vld [vmem:[#allocation4 + $0x18] sm:$0xff]
  %v4621 = vld [vmem:[#allocation4 + $0x20] sm:$0xff]
  %v4622 = vld [vmem:[#allocation4 + $0x28] sm:$0xff]
  %v4623 = vld [vmem:[#allocation4 + $0x30] sm:$0xff]
  %v4624 = vld [vmem:[#allocation4 + $0x38] sm:$0xff]
  %4626 = vset.pattern.permute.xlu0 0
  %4627 = vperm.xlu0 %4626, %v32
  %v4628 = vpop.permute.xlu0 %4627
  %v4630 = vadd.f32 %v4617, %v4628
  %v4631 = vadd.f32 %v4618, %v4628
  %v4632 = vadd.f32 %v4619, %v4628
  %v4633 = vadd.f32 %v4620, %v4628
  %v4634 = vadd.f32 %v4621, %v4628
  %v4635 = vadd.f32 %v4622, %v4628
  %v4636 = vadd.f32 %v4623, %v4628
  %v4637 = vadd.f32 %v4624, %v4628
  %v4638 = vmax.f32 %v4630, 0.0
  %v4639 = vmax.f32 %v4631, 0.0
  %v4640 = vmax.f32 %v4632, 0.0
  %v4641 = vmax.f32 %v4633, 0.0
  %v4642 = vmax.f32 %v4634, 0.0
  %v4643 = vmax.f32 %v4635, 0.0
  %v4644 = vmax.f32 %v4636, 0.0
  %v4645 = vmax.f32 %v4637, 0.0
  %v4646 = vpack.c.bf16 %v4638, %v4638
  %v4647 = vpack.c.bf16 %v4639, %v4639
  %v4648 = vpack.c.bf16 %v4640, %v4640
  %v4649 = vpack.c.bf16 %v4641, %v4641
  %v4650 = vpack.c.bf16 %v4642, %v4642
  %v4651 = vpack.c.bf16 %v4643, %v4643
  %v4652 = vpack.c.bf16 %v4644, %v4644
  %v4653 = vpack.c.bf16 %v4645, %v4645
  %4655 = vset.pattern.permute.xlu0 0
  %4656 = vperm.xlu0 %4655, %v37
  %v4657 = vpop.permute.xlu0 %4656
  %4660 = vset.pattern.permute.xlu0 0
  %4661 = vperm.xlu0 %4660, %v38
  %v4662 = vpop.permute.xlu0 %4661
  %4665 = vset.pattern.permute.xlu0 0
  %4666 = vperm.xlu0 %4665, %v39
  %v4667 = vpop.permute.xlu0 %4666
  %4670 = vset.pattern.permute.xlu0 0
  %4671 = vperm.xlu0 %4670, %v40
  %v4672 = vpop.permute.xlu0 %4671
  %v4678 = vunpack.c.l.b16 %v33
  %v4679 = vunpack.c.l.b16 %v34
  %v4680 = vunpack.c.l.b16 %v35
  %v4681 = vunpack.c.l.b16 %v36
  %v4682 = vpack.c.b16 %v4679, %v4678
  %v4683 = vpack.c.b16 %v4681, %v4680
  %v4685 = vsel %vm2525, %v4682, 0
  %v4688 = vsel %vm2525, %v4683, 0
  %v4691 = vsel %vm1564, %v4646, 0
  %v4694 = vsel %vm1564, %v4647, 0
  %v4697 = vsel %vm1564, %v4648, 0
  %v4700 = vsel %vm1564, %v4649, 0
  %4702 = vmatprep.subr.bf16.mxu0 0
  %4703 = vmatpush1.bf16.msra.mxu0 0
  %4704 = vmatprep.subr.bf16.mxu0 0
  %4705 = vmatpush1.bf16.msra.mxu0 0
  %4706 = vmatprep.subr.bf16.mxu0 0
  %4707 = vmatpush1.bf16.msra.mxu0 0
  %4708 = vmatprep.subr.bf16.mxu0 0
  %4709 = vmatpush1.bf16.msra.mxu0 0
  %4710 = vmatprep.subr.bf16.mxu0 0
  %4711 = vmatpush1.bf16.msra.mxu0 0
  %4712 = vmatprep.subr.bf16.mxu0 0
  %4713 = vmatpush1.bf16.msra.mxu0 0
  %4714 = vmatprep.subr.bf16.mxu0 0
  %4715 = vmatpush1.bf16.msra.mxu0 0
  %4716 = vmatprep.subr.bf16.mxu0 %v4694
  %4717 = vmatpush1.bf16.msra.mxu0 %v4691
  %4718 = vmatprep.subr.bf16.mxu0 0
  %4719 = vmatpush2.bf16.msra.mxu0 0
  %4720 = vmatprep.subr.bf16.mxu0 0
  %4721 = vmatpush2.bf16.msra.mxu0 0
  %4722 = vmatprep.subr.bf16.mxu0 0
  %4723 = vmatpush2.bf16.msra.mxu0 0
  %4724 = vmatprep.subr.bf16.mxu0 0
  %4725 = vmatpush2.bf16.msra.mxu0 0
  %4726 = vmatprep.subr.bf16.mxu0 0
  %4727 = vmatpush2.bf16.msra.mxu0 0
  %4728 = vmatprep.subr.bf16.mxu0 0
  %4729 = vmatpush2.bf16.msra.mxu0 0
  %4730 = vmatprep.subr.bf16.mxu0 0
  %4731 = vmatpush2.bf16.msra.mxu0 0
  %4732 = vmatprep.subr.bf16.mxu0 0
  %4733 = vmatpush2.bf16.msra.mxu0 0
  %4734 = vmatprep.mubr.bf16.mxu0 0
  %4735 = vmatmul.mubr.bf16.gmra.mxu0 %v4685
  %v4736 = vpop.f32.mrf.mxu0
  %v4737 = vadd.f32 %v4657, %v4736
  %v4738 = vpop.f32.mrf.mxu0
  %v4739 = vadd.f32 %v4657, %v4738
  %v4740 = vpop.f32.mrf.mxu0
  %v4741 = vadd.f32 %v4662, %v4740
  %v4742 = vpop.f32.mrf.mxu0
  %v4743 = vadd.f32 %v4662, %v4742
  %4744 = vmatprep.mubr.bf16.mxu0 0
  %4745 = vmatmul.mubr.bf16.gmra.mxu0 %v4688
  %v4746 = vpop.f32.mrf.mxu0
  %v4747 = vadd.f32 %v4667, %v4746
  %v4748 = vpop.f32.mrf.mxu0
  %v4749 = vadd.f32 %v4667, %v4748
  %v4750 = vpop.f32.mrf.mxu0
  %v4751 = vadd.f32 %v4672, %v4750
  %v4752 = vpop.f32.mrf.mxu0
  %v4753 = vadd.f32 %v4672, %v4752
  %4754 = vdwg.mxu0
  %4755 = vmatprep.subr.bf16.mxu0 0
  %4756 = vmatpush1.bf16.msra.mxu0 0
  %4757 = vmatprep.subr.bf16.mxu0 0
  %4758 = vmatpush1.bf16.msra.mxu0 0
  %4759 = vmatprep.subr.bf16.mxu0 0
  %4760 = vmatpush1.bf16.msra.mxu0 0
  %4761 = vmatprep.subr.bf16.mxu0 0
  %4762 = vmatpush1.bf16.msra.mxu0 0
  %4763 = vmatprep.subr.bf16.mxu0 0
  %4764 = vmatpush1.bf16.msra.mxu0 0
  %4765 = vmatprep.subr.bf16.mxu0 0
  %4766 = vmatpush1.bf16.msra.mxu0 0
  %4767 = vmatprep.subr.bf16.mxu0 0
  %4768 = vmatpush1.bf16.msra.mxu0 0
  %4769 = vmatprep.subr.bf16.mxu0 %v4700
  %4770 = vmatpush1.bf16.msra.mxu0 %v4697
  %4771 = vmatprep.subr.bf16.mxu0 0
  %4772 = vmatpush2.bf16.msra.mxu0 0
  %4773 = vmatprep.subr.bf16.mxu0 0
  %4774 = vmatpush2.bf16.msra.mxu0 0
  %4775 = vmatprep.subr.bf16.mxu0 0
  %4776 = vmatpush2.bf16.msra.mxu0 0
  %4777 = vmatprep.subr.bf16.mxu0 0
  %4778 = vmatpush2.bf16.msra.mxu0 0
  %4779 = vmatprep.subr.bf16.mxu0 0
  %4780 = vmatpush2.bf16.msra.mxu0 0
  %4781 = vmatprep.subr.bf16.mxu0 0
  %4782 = vmatpush2.bf16.msra.mxu0 0
  %4783 = vmatprep.subr.bf16.mxu0 0
  %4784 = vmatpush2.bf16.msra.mxu0 0
  %4785 = vmatprep.subr.bf16.mxu0 0
  %4786 = vmatpush2.bf16.msra.mxu0 0
  %4787 = vmatprep.mubr.bf16.mxu0 0
  %4788 = vmatmul.mubr.bf16.gmra.mxu0 %v4685
  %v4789 = vpop.f32.mrf.mxu0
  %v4790 = vadd.f32 %v4657, %v4789
  %v4791 = vpop.f32.mrf.mxu0
  %v4792 = vadd.f32 %v4657, %v4791
  %v4793 = vpop.f32.mrf.mxu0
  %v4794 = vadd.f32 %v4662, %v4793
  %v4795 = vpop.f32.mrf.mxu0
  %v4796 = vadd.f32 %v4662, %v4795
  %4797 = vmatprep.mubr.bf16.mxu0 0
  %4798 = vmatmul.mubr.bf16.gmra.mxu0 %v4688
  %v4799 = vpop.f32.mrf.mxu0
  %v4800 = vadd.f32 %v4667, %v4799
  %v4801 = vpop.f32.mrf.mxu0
  %v4802 = vadd.f32 %v4667, %v4801
  %v4803 = vpop.f32.mrf.mxu0
  %v4804 = vadd.f32 %v4672, %v4803
  %v4805 = vpop.f32.mrf.mxu0
  %v4806 = vadd.f32 %v4672, %v4805
  %4807 = vdwg.mxu0
  %v4808 = vld [vmem:[%s0] sm:$0xff]
  %v4809 = vld [vmem:[%s0 + $0x8] sm:$0xff]
  %v4810 = vld [vmem:[%s0 + $0x10] sm:$0xff]
  %v4811 = vld [vmem:[%s0 + $0x18] sm:$0xff]
  %v4812 = vld [vmem:[%s0 + $0x20] sm:$0xff]
  %v4813 = vld [vmem:[%s0 + $0x28] sm:$0xff]
  %v4814 = vld [vmem:[%s0 + $0x30] sm:$0xff]
  %v4815 = vld [vmem:[%s0 + $0x38] sm:$0xff]
  %v4816 = vld [vmem:[%s0 + $0x40] sm:$0xff]
  %v4817 = vld [vmem:[%s0 + $0x48] sm:$0xff]
  %v4818 = vld [vmem:[%s0 + $0x50] sm:$0xff]
  %v4819 = vld [vmem:[%s0 + $0x58] sm:$0xff]
  %v4820 = vld [vmem:[%s0 + $0x60] sm:$0xff]
  %v4821 = vld [vmem:[%s0 + $0x68] sm:$0xff]
  %v4822 = vld [vmem:[%s0 + $0x70] sm:$0xff]
  %v4823 = vld [vmem:[%s0 + $0x78] sm:$0xff]
  %v4824 = vadd.f32 %v4737, %v4808
  %v4825 = vadd.f32 %v4739, %v4809
  %v4826 = vadd.f32 %v4790, %v4810
  %v4827 = vadd.f32 %v4792, %v4811
  %v4828 = vadd.f32 %v4741, %v4812
  %v4829 = vadd.f32 %v4743, %v4813
  %v4830 = vadd.f32 %v4794, %v4814
  %v4831 = vadd.f32 %v4796, %v4815
  %v4832 = vadd.f32 %v4747, %v4816
  %v4833 = vadd.f32 %v4749, %v4817
  %v4834 = vadd.f32 %v4800, %v4818
  %v4835 = vadd.f32 %v4802, %v4819
  %v4836 = vadd.f32 %v4751, %v4820
  %v4837 = vadd.f32 %v4753, %v4821
  %v4838 = vadd.f32 %v4804, %v4822
  %v4839 = vadd.f32 %v4806, %v4823
  %v4840 = vmax.f32 %v4824, 0.0
  %v4841 = vmax.f32 %v4825, 0.0
  %v4842 = vmax.f32 %v4826, 0.0
  %v4843 = vmax.f32 %v4827, 0.0
  %v4844 = vmax.f32 %v4828, 0.0
  %v4845 = vmax.f32 %v4829, 0.0
  %v4846 = vmax.f32 %v4830, 0.0
  %v4847 = vmax.f32 %v4831, 0.0
  %v4848 = vmax.f32 %v4832, 0.0
  %v4849 = vmax.f32 %v4833, 0.0
  %v4850 = vmax.f32 %v4834, 0.0
  %v4851 = vmax.f32 %v4835, 0.0
  %v4852 = vmax.f32 %v4836, 0.0
  %v4853 = vmax.f32 %v4837, 0.0
  %v4854 = vmax.f32 %v4838, 0.0
  %v4855 = vmax.f32 %v4839, 0.0
  %4856 = vst [vmem:[%s8] sm:$0xff] %v4840
  %4857 = vst [vmem:[%s8 + $0x8] sm:$0xff] %v4841
  %4858 = vst [vmem:[%s8 + $0x10] sm:$0xff] %v4842
  %4859 = vst [vmem:[%s8 + $0x18] sm:$0xff] %v4843
  %4860 = vst [vmem:[%s8 + $0x20] sm:$0xff] %v4844
  %4861 = vst [vmem:[%s8 + $0x28] sm:$0xff] %v4845
  %4862 = vst [vmem:[%s8 + $0x30] sm:$0xff] %v4846
  %4863 = vst [vmem:[%s8 + $0x38] sm:$0xff] %v4847
  %4864 = vst [vmem:[%s8 + $0x40] sm:$0xff] %v4848
  %4865 = vst [vmem:[%s8 + $0x48] sm:$0xff] %v4849
  %4866 = vst [vmem:[%s8 + $0x50] sm:$0xff] %v4850
  %4867 = vst [vmem:[%s8 + $0x58] sm:$0xff] %v4851
  %4868 = vst [vmem:[%s8 + $0x60] sm:$0xff] %v4852
  %4869 = vst [vmem:[%s8 + $0x68] sm:$0xff] %v4853
  %4870 = vst [vmem:[%s8 + $0x70] sm:$0xff] %v4854
  %4871 = vst [vmem:[%s8 + $0x78] sm:$0xff] %v4855
  %v4873 = vsel %vm1564, %v4650, 0
  %v4876 = vsel %vm1564, %v4651, 0
  %v4879 = vsel %vm1564, %v4652, 0
  %v4882 = vsel %vm1564, %v4653, 0
  %4884 = vmatprep.subr.bf16.mxu0 0
  %4885 = vmatpush1.bf16.msra.mxu0 0
  %4886 = vmatprep.subr.bf16.mxu0 0
  %4887 = vmatpush1.bf16.msra.mxu0 0
  %4888 = vmatprep.subr.bf16.mxu0 0
  %4889 = vmatpush1.bf16.msra.mxu0 0
  %4890 = vmatprep.subr.bf16.mxu0 0
  %4891 = vmatpush1.bf16.msra.mxu0 0
  %4892 = vmatprep.subr.bf16.mxu0 0
  %4893 = vmatpush1.bf16.msra.mxu0 0
  %4894 = vmatprep.subr.bf16.mxu0 0
  %4895 = vmatpush1.bf16.msra.mxu0 0
  %4896 = vmatprep.subr.bf16.mxu0 0
  %4897 = vmatpush1.bf16.msra.mxu0 0
  %4898 = vmatprep.subr.bf16.mxu0 %v4876
  %4899 = vmatpush1.bf16.msra.mxu0 %v4873
  %4900 = vmatprep.subr.bf16.mxu0 0
  %4901 = vmatpush2.bf16.msra.mxu0 0
  %4902 = vmatprep.subr.bf16.mxu0 0
  %4903 = vmatpush2.bf16.msra.mxu0 0
  %4904 = vmatprep.subr.bf16.mxu0 0
  %4905 = vmatpush2.bf16.msra.mxu0 0
  %4906 = vmatprep.subr.bf16.mxu0 0
  %4907 = vmatpush2.bf16.msra.mxu0 0
  %4908 = vmatprep.subr.bf16.mxu0 0
  %4909 = vmatpush2.bf16.msra.mxu0 0
  %4910 = vmatprep.subr.bf16.mxu0 0
  %4911 = vmatpush2.bf16.msra.mxu0 0
  %4912 = vmatprep.subr.bf16.mxu0 0
  %4913 = vmatpush2.bf16.msra.mxu0 0
  %4914 = vmatprep.subr.bf16.mxu0 0
  %4915 = vmatpush2.bf16.msra.mxu0 0
  %4916 = vmatprep.mubr.bf16.mxu0 0
  %4917 = vmatmul.mubr.bf16.gmra.mxu0 %v4685
  %v4918 = vpop.f32.mrf.mxu0
  %v4919 = vadd.f32 %v4657, %v4918
  %v4920 = vpop.f32.mrf.mxu0
  %v4921 = vadd.f32 %v4657, %v4920
  %v4922 = vpop.f32.mrf.mxu0
  %v4923 = vadd.f32 %v4662, %v4922
  %v4924 = vpop.f32.mrf.mxu0
  %v4925 = vadd.f32 %v4662, %v4924
  %4926 = vmatprep.mubr.bf16.mxu0 0
  %4927 = vmatmul.mubr.bf16.gmra.mxu0 %v4688
  %v4928 = vpop.f32.mrf.mxu0
  %v4929 = vadd.f32 %v4667, %v4928
  %v4930 = vpop.f32.mrf.mxu0
  %v4931 = vadd.f32 %v4667, %v4930
  %v4932 = vpop.f32.mrf.mxu0
  %v4933 = vadd.f32 %v4672, %v4932
  %v4934 = vpop.f32.mrf.mxu0
  %v4935 = vadd.f32 %v4672, %v4934
  %4936 = vdwg.mxu0
  %4937 = vmatprep.subr.bf16.mxu0 0
  %4938 = vmatpush1.bf16.msra.mxu0 0
  %4939 = vmatprep.subr.bf16.mxu0 0
  %4940 = vmatpush1.bf16.msra.mxu0 0
  %4941 = vmatprep.subr.bf16.mxu0 0
  %4942 = vmatpush1.bf16.msra.mxu0 0
  %4943 = vmatprep.subr.bf16.mxu0 0
  %4944 = vmatpush1.bf16.msra.mxu0 0
  %4945 = vmatprep.subr.bf16.mxu0 0
  %4946 = vmatpush1.bf16.msra.mxu0 0
  %4947 = vmatprep.subr.bf16.mxu0 0
  %4948 = vmatpush1.bf16.msra.mxu0 0
  %4949 = vmatprep.subr.bf16.mxu0 0
  %4950 = vmatpush1.bf16.msra.mxu0 0
  %4951 = vmatprep.subr.bf16.mxu0 %v4882
  %4952 = vmatpush1.bf16.msra.mxu0 %v4879
  %4953 = vmatprep.subr.bf16.mxu0 0
  %4954 = vmatpush2.bf16.msra.mxu0 0
  %4955 = vmatprep.subr.bf16.mxu0 0
  %4956 = vmatpush2.bf16.msra.mxu0 0
  %4957 = vmatprep.subr.bf16.mxu0 0
  %4958 = vmatpush2.bf16.msra.mxu0 0
  %4959 = vmatprep.subr.bf16.mxu0 0
  %4960 = vmatpush2.bf16.msra.mxu0 0
  %4961 = vmatprep.subr.bf16.mxu0 0
  %4962 = vmatpush2.bf16.msra.mxu0 0
  %4963 = vmatprep.subr.bf16.mxu0 0
  %4964 = vmatpush2.bf16.msra.mxu0 0
  %4965 = vmatprep.subr.bf16.mxu0 0
  %4966 = vmatpush2.bf16.msra.mxu0 0
  %4967 = vmatprep.subr.bf16.mxu0 0
  %4968 = vmatpush2.bf16.msra.mxu0 0
  %4969 = vmatprep.mubr.bf16.mxu0 0
  %4970 = vmatmul.mubr.bf16.gmra.mxu0 %v4685
  %v4971 = vpop.f32.mrf.mxu0
  %v4972 = vadd.f32 %v4657, %v4971
  %v4973 = vpop.f32.mrf.mxu0
  %v4974 = vadd.f32 %v4657, %v4973
  %v4975 = vpop.f32.mrf.mxu0
  %v4976 = vadd.f32 %v4662, %v4975
  %v4977 = vpop.f32.mrf.mxu0
  %v4978 = vadd.f32 %v4662, %v4977
  %4979 = vmatprep.mubr.bf16.mxu0 0
  %4980 = vmatmul.mubr.bf16.gmra.mxu0 %v4688
  %v4981 = vpop.f32.mrf.mxu0
  %v4982 = vadd.f32 %v4667, %v4981
  %v4983 = vpop.f32.mrf.mxu0
  %v4984 = vadd.f32 %v4667, %v4983
  %v4985 = vpop.f32.mrf.mxu0
  %v4986 = vadd.f32 %v4672, %v4985
  %v4987 = vpop.f32.mrf.mxu0
  %v4988 = vadd.f32 %v4672, %v4987
  %4989 = vdwg.mxu0
  %v4990 = vld [vmem:[%s184] sm:$0xff]
  %v4991 = vld [vmem:[%s184 + $0x8] sm:$0xff]
  %v4992 = vld [vmem:[%s184 + $0x10] sm:$0xff]
  %v4993 = vld [vmem:[%s184 + $0x18] sm:$0xff]
  %v4994 = vld [vmem:[%s184 + $0x20] sm:$0xff]
  %v4995 = vld [vmem:[%s184 + $0x28] sm:$0xff]
  %v4996 = vld [vmem:[%s184 + $0x30] sm:$0xff]
  %v4997 = vld [vmem:[%s184 + $0x38] sm:$0xff]
  %v4998 = vld [vmem:[%s184 + $0x40] sm:$0xff]
  %v4999 = vld [vmem:[%s184 + $0x48] sm:$0xff]
  %v5000 = vld [vmem:[%s184 + $0x50] sm:$0xff]
  %v5001 = vld [vmem:[%s184 + $0x58] sm:$0xff]
  %v5002 = vld [vmem:[%s184 + $0x60] sm:$0xff]
  %v5003 = vld [vmem:[%s184 + $0x68] sm:$0xff]
  %v5004 = vld [vmem:[%s184 + $0x70] sm:$0xff]
  %v5005 = vld [vmem:[%s184 + $0x78] sm:$0xff]
  %v5006 = vadd.f32 %v4919, %v4990
  %v5007 = vadd.f32 %v4921, %v4991
  %v5008 = vadd.f32 %v4972, %v4992
  %v5009 = vadd.f32 %v4974, %v4993
  %v5010 = vadd.f32 %v4923, %v4994
  %v5011 = vadd.f32 %v4925, %v4995
  %v5012 = vadd.f32 %v4976, %v4996
  %v5013 = vadd.f32 %v4978, %v4997
  %v5014 = vadd.f32 %v4929, %v4998
  %v5015 = vadd.f32 %v4931, %v4999
  %v5016 = vadd.f32 %v4982, %v5000
  %v5017 = vadd.f32 %v4984, %v5001
  %v5018 = vadd.f32 %v4933, %v5002
  %v5019 = vadd.f32 %v4935, %v5003
  %v5020 = vadd.f32 %v4986, %v5004
  %v5021 = vadd.f32 %v4988, %v5005
  %v5022 = vmax.f32 %v5006, 0.0
  %v5023 = vmax.f32 %v5007, 0.0
  %v5024 = vmax.f32 %v5008, 0.0
  %v5025 = vmax.f32 %v5009, 0.0
  %v5026 = vmax.f32 %v5010, 0.0
  %v5027 = vmax.f32 %v5011, 0.0
  %v5028 = vmax.f32 %v5012, 0.0
  %v5029 = vmax.f32 %v5013, 0.0
  %v5030 = vmax.f32 %v5014, 0.0
  %v5031 = vmax.f32 %v5015, 0.0
  %v5032 = vmax.f32 %v5016, 0.0
  %v5033 = vmax.f32 %v5017, 0.0
  %v5034 = vmax.f32 %v5018, 0.0
  %v5035 = vmax.f32 %v5019, 0.0
  %v5036 = vmax.f32 %v5020, 0.0
  %v5037 = vmax.f32 %v5021, 0.0
  %s5038 = scalar_lea.vmem %s8, 128
  %5039 = vst [vmem:[%s5038] sm:$0xff] %v5022
  %5040 = vst [vmem:[%s5038 + $0x8] sm:$0xff] %v5023
  %5041 = vst [vmem:[%s5038 + $0x10] sm:$0xff] %v5024
  %5042 = vst [vmem:[%s5038 + $0x18] sm:$0xff] %v5025
  %5043 = vst [vmem:[%s5038 + $0x20] sm:$0xff] %v5026
  %5044 = vst [vmem:[%s5038 + $0x28] sm:$0xff] %v5027
  %5045 = vst [vmem:[%s5038 + $0x30] sm:$0xff] %v5028
  %5046 = vst [vmem:[%s5038 + $0x38] sm:$0xff] %v5029
  %5047 = vst [vmem:[%s5038 + $0x40] sm:$0xff] %v5030
  %5048 = vst [vmem:[%s5038 + $0x48] sm:$0xff] %v5031
  %5049 = vst [vmem:[%s5038 + $0x50] sm:$0xff] %v5032
  %5050 = vst [vmem:[%s5038 + $0x58] sm:$0xff] %v5033
  %5051 = vst [vmem:[%s5038 + $0x60] sm:$0xff] %v5034
  %5052 = vst [vmem:[%s5038 + $0x68] sm:$0xff] %v5035
  %5053 = vst [vmem:[%s5038 + $0x70] sm:$0xff] %v5036
  %5054 = vst [vmem:[%s5038 + $0x78] sm:$0xff] %v5037
  // Predicated region
  $region34: #{resnet_block_forward.1} parent=0 // pred_check
    _
  $region35: #{resnet_block_forward.1} parent=0 // pred_check_branch
    %5056 = sbr.rel (0) target = $region37
  $region36: #{resnet_block_forward.1} parent=0 // pred_region
    _
  $region37: #{resnet_block_forward.1} parent=0 // pred_fallthru
    _
  // Predicated region
  $region38: #{resnet_block_forward.1} parent=0 // pred_check
    _
  $region39: #{resnet_block_forward.1} parent=0 // pred_check_branch
    %5058 = sbr.rel (0) target = $region41
  $region40: #{resnet_block_forward.1} parent=0 // pred_region
    _
  $region41: #{resnet_block_forward.1} parent=0 // pred_fallthru
    _

</llo_original>
